<compile_context>
chip_gen: v7x
topology: tpu7x:2x2x1
jax: 0.10.0
libtpu: 0.0.40
codegen_flags: <defaults>
</compile_context>

<pallas_src>
import math

import jax
import jax.numpy as jnp
import numpy as np
from jax.experimental import pallas as pl
from jax.experimental.pallas import tpu as pltpu


def _round_up(n, m):
    return ((n + m - 1) // m) * m


# ----------------------------------------------------------------------------
# Fused decoder kernel: [lstm1 stack] -> [lstm2 stack] -> linear, all in VMEM.
# ----------------------------------------------------------------------------
def _make_decoder_kernel(num_lstm_layers, T, B_pad, H_pad):
    def kernel(*refs):
        # in_refs : x, (w_ih, w_hh, b) * L, w_out, b_out
        # out_refs: out
        # scratch : gx_sc (T*B_pad, 4*H_pad), hseq_sc (T*B_pad, H_pad)
        n_in = 3 + 3 * num_lstm_layers
        x_ref = refs[0]
        lstm_refs = refs[1:1 + 3 * num_lstm_layers]
        w_out_ref = refs[n_in - 2]
        b_out_ref = refs[n_in - 1]
        out_ref = refs[n_in]
        gx_sc = refs[n_in + 1]
        hseq_sc = refs[n_in + 2]

        def run_layer(layer_idx):
            w_ih_ref = lstm_refs[3 * layer_idx + 0]
            w_hh_ref = lstm_refs[3 * layer_idx + 1]
            b_ref = lstm_refs[3 * layer_idx + 2]

            # Hoisted input-side matmul over the WHOLE sequence: one big
            # MXU-friendly matmul + bias add instead of T tiny ones.
            inp2d = x_ref[...] if layer_idx == 0 else hseq_sc[...]
            gx_sc[...] = (
                jnp.dot(inp2d, w_ih_ref[...], preferred_element_type=jnp.float32)
                + b_ref[...]
            )

            w_hh = w_hh_ref[...]

            def step(t, carry):
                h, c = carry
                row = t * B_pad
                gates = gx_sc[pl.ds(row, B_pad), :] + jnp.dot(
                    h, w_hh, preferred_element_type=jnp.float32
                )
                # Gate slices land on 128-lane boundaries (H_pad multiple of 128).
                i_g = jax.nn.sigmoid(gates[:, 0 * H_pad:1 * H_pad])
                f_g = jax.nn.sigmoid(gates[:, 1 * H_pad:2 * H_pad])
                g_g = jnp.tanh(gates[:, 2 * H_pad:3 * H_pad])
                o_g = jax.nn.sigmoid(gates[:, 3 * H_pad:4 * H_pad])
                c_new = f_g * c + i_g * g_g
                h_new = o_g * jnp.tanh(c_new)
                hseq_sc[pl.ds(row, B_pad), :] = h_new
                return (h_new, c_new)

            zeros = jnp.zeros((B_pad, H_pad), jnp.float32)
            jax.lax.fori_loop(0, T, step, (zeros, zeros), unroll=True)

        for layer_idx in range(num_lstm_layers):
            run_layer(layer_idx)

        # Fused projection: single lane-dense (T*B_pad, F_pad) matmul + store.
        out = (
            jnp.dot(hseq_sc[...], w_out_ref[...], preferred_element_type=jnp.float32)
            + b_out_ref[...]
        )
        out_ref[...] = out.astype(out_ref.dtype)

    return kernel


# ----------------------------------------------------------------------------
# Parameter preparation (done ONCE, outside the forward pass / jit)
# ----------------------------------------------------------------------------
def prepare_decoder_params(params, *, seq_len, embedding_dim, n_features):
    """Transpose, gate-pad and bias-combine the PyTorch-layout parameters."""
    H = 2 * embedding_dim
    H_pad = _round_up(H, 128)
    F_pad = _round_up(n_features, 128)

    def pad_gate_w_t(w, in_dim_pad):
        # w: (4H, in_dim) PyTorch layout -> (in_dim_pad, 4*H_pad) transposed,
        # each gate placed at a 128-aligned lane offset; padding is zero.
        in_dim = w.shape[1]
        out = jnp.zeros((in_dim_pad, 4 * H_pad), jnp.float32)
        for k in range(4):
            out = out.at[:in_dim, k * H_pad:k * H_pad + H].set(
                jnp.asarray(w[k * H:(k + 1) * H, :], jnp.float32).T
            )
        return out

    def pad_gate_b(b_ih, b_hh):
        b = jnp.asarray(b_ih + b_hh, jnp.float32)
        out = jnp.zeros((1, 4 * H_pad), jnp.float32)
        for k in range(4):
            out = out.at[0, k * H_pad:k * H_pad + H].set(b[k * H:(k + 1) * H])
        return out

    layers = list(params["lstm1"]) + list(params["lstm2"])
    prepared_lstm = []
    for idx, (w_ih, w_hh, b_ih, b_hh) in enumerate(layers):
        in_dim_pad = w_ih.shape[1] if idx == 0 else H_pad
        prepared_lstm.append(
            (pad_gate_w_t(w_ih, in_dim_pad), pad_gate_w_t(w_hh, H_pad),
             pad_gate_b(b_ih, b_hh))
        )

    w_out = jnp.zeros((H_pad, F_pad), jnp.float32).at[:H, :n_features].set(
        jnp.asarray(params["w_out"], jnp.float32).T
    )
    b_out = jnp.zeros((1, F_pad), jnp.float32).at[0, :n_features].set(
        jnp.asarray(params["b_out"], jnp.float32)
    )

    return {
        "lstm": prepared_lstm, "w_out": w_out, "b_out": b_out,
        "seq_len": seq_len, "embedding_dim": embedding_dim,
        "n_features": n_features, "H_pad": H_pad, "F_pad": F_pad,
    }


# ----------------------------------------------------------------------------
# Forward pass (Pallas)
# ----------------------------------------------------------------------------
def decoder_forward(x, prepared):
    """x: (batch, embedding_dim) f32. Returns (batch, seq_len, n_features)."""
    T = prepared["seq_len"]
    E = prepared["embedding_dim"]
    F = prepared["n_features"]
    H_pad = prepared["H_pad"]
    F_pad = prepared["F_pad"]
    B = x.shape[0]
    B_pad = _round_up(max(B, 1), 8)
    num_lstm = len(prepared["lstm"])

    # Exact PyTorch glue: x.repeat(seq_len, n_features).reshape(B, T, E)
    xr = jnp.tile(x, (T, F)).reshape(B, T, E)
    # time-major + batch padded to a full sublane group
    x_tm = jnp.transpose(xr, (1, 0, 2))
    x_tm = jnp.pad(x_tm, ((0, 0), (0, B_pad - B), (0, 0)))
    x_flat = x_tm.reshape(T * B_pad, E).astype(jnp.float32)

    args = [x_flat]
    for (w_ih, w_hh, b) in prepared["lstm"]:
        args += [w_ih, w_hh, b]
    args += [prepared["w_out"], prepared["b_out"]]

    out = pl.pallas_call(
        _make_decoder_kernel(num_lstm, T, B_pad, H_pad),
        out_shape=jax.ShapeDtypeStruct((T * B_pad, F_pad), jnp.float32),
        scratch_shapes=[
            pltpu.VMEM((T * B_pad, 4 * H_pad), jnp.float32),  # hoisted input gates
            pltpu.VMEM((T * B_pad, H_pad), jnp.float32),      # per-layer h sequence
        ],
    )(*args)

    out = out.reshape(T, B_pad, F_pad)[:, :B, :F]   # drop batch/lane padding
    return jnp.transpose(out, (1, 0, 2))            # (B, T, n_features)


# ----------------------------------------------------------------------------
# Deterministic parameter init (mirrors nn.LSTM / nn.Linear default shapes)
# ----------------------------------------------------------------------------
def init_lstm_params(key, input_size, hidden_size, num_layers):
    k = 1.0 / math.sqrt(hidden_size)
    layers = []
    for layer in range(num_layers):
        in_l = input_size if layer == 0 else hidden_size
        key, k1, k2, k3, k4 = jax.random.split(key, 5)
        w_ih = jax.random.uniform(k1, (4 * hidden_size, in_l), jnp.float32, -k, k)
        w_hh = jax.random.uniform(k2, (4 * hidden_size, hidden_size), jnp.float32, -k, k)
        b_ih = jax.random.uniform(k3, (4 * hidden_size,), jnp.float32, -k, k)
        b_hh = jax.random.uniform(k4, (4 * hidden_size,), jnp.float32, -k, k)
        layers.append((w_ih, w_hh, b_ih, b_hh))
    return key, layers


def init_decoder_params(key, seq_len, embedding_dim, n_features, num_layers):
    hidden_dim = embedding_dim * 2
    key, lstm1 = init_lstm_params(key, embedding_dim, hidden_dim, num_layers)
    key, lstm2 = init_lstm_params(key, hidden_dim, hidden_dim, num_layers)
    k = 1.0 / math.sqrt(hidden_dim)
    key, k1, k2 = jax.random.split(key, 3)
    w_out = jax.random.uniform(k1, (n_features, hidden_dim), jnp.float32, -k, k)
    b_out = jax.random.uniform(k2, (n_features,), jnp.float32, -k, k)
    return {"lstm1": lstm1, "lstm2": lstm2, "w_out": w_out, "b_out": b_out}


# ----------------------------------------------------------------------------
# Pure-JAX reference (for numerical sanity check)
# ----------------------------------------------------------------------------
def _lstm_layer_ref(x_bt, w_ih, w_hh, b_ih, b_hh):
    B = x_bt.shape[0]
    H = w_hh.shape[1]

    def step(carry, x_t):
        h, c = carry
        gates = x_t @ w_ih.T + b_ih + h @ w_hh.T + b_hh
        i, f, g, o = jnp.split(gates, 4, axis=-1)
        i, f, o = jax.nn.sigmoid(i), jax.nn.sigmoid(f), jax.nn.sigmoid(o)
        g = jnp.tanh(g)
        c = f * c + i * g
        h = o * jnp.tanh(c)
        return (h, c), h

    init = (jnp.zeros((B, H), jnp.float32), jnp.zeros((B, H), jnp.float32))
    _, ys = jax.lax.scan(step, init, jnp.transpose(x_bt, (1, 0, 2)))
    return jnp.transpose(ys, (1, 0, 2))


def decoder_forward_ref(x, params, *, seq_len, embedding_dim, n_features, num_layers):
    batch = x.shape[0]
    h = jnp.tile(x, (seq_len, n_features)).reshape(batch, seq_len, embedding_dim)
    for layer in params["lstm1"]:
        h = _lstm_layer_ref(h, *layer)
    for layer in params["lstm2"]:
        h = _lstm_layer_ref(h, *layer)
    return h @ params["w_out"].T + params["b_out"]


# ----------------------------------------------------------------------------
if __name__ == "__main__":
    seq_len = 8
    embedding_dim = 32
    n_features = 1        # must be 1 for the repeat/reshape to be consistent
    num_layers = 1
    batch = 2

    key = jax.random.PRNGKey(0)
    key, xk = jax.random.split(key)
    x = jax.random.normal(xk, (batch, embedding_dim), jnp.float32)

    params = init_decoder_params(key, seq_len, embedding_dim, n_features, num_layers)
    prepared = prepare_decoder_params(
        params, seq_len=seq_len, embedding_dim=embedding_dim, n_features=n_features)

    fwd = jax.jit(lambda xx: decoder_forward(xx, prepared))
    out = jax.block_until_ready(fwd(x))

    ref = decoder_forward_ref(
        x, params,
        seq_len=seq_len, embedding_dim=embedding_dim,
        n_features=n_features, num_layers=num_layers,
    )

    assert out.shape == (batch, seq_len, n_features), out.shape
    np.testing.assert_allclose(np.asarray(out), np.asarray(ref), rtol=1e-2, atol=1e-2)
    print("KERNEL_OK")
</pallas_src>

<mosaic_0001>
module attributes {stable_mosaic.version = 11 : i64} {
  func.func @kernel(%arg0: memref<64x32xf32, #tpu.memory_space<vmem>>, %arg1: memref<32x512xf32, #tpu.memory_space<vmem>>, %arg2: memref<128x512xf32, #tpu.memory_space<vmem>>, %arg3: memref<1x512xf32, #tpu.memory_space<vmem>>, %arg4: memref<128x512xf32, #tpu.memory_space<vmem>>, %arg5: memref<128x512xf32, #tpu.memory_space<vmem>>, %arg6: memref<1x512xf32, #tpu.memory_space<vmem>>, %arg7: memref<128x128xf32, #tpu.memory_space<vmem>>, %arg8: memref<1x128xf32, #tpu.memory_space<vmem>>, %arg9: memref<64x128xf32, #tpu.memory_space<vmem>>, %arg10: memref<64x512xf32, #tpu.memory_space<vmem>>, %arg11: memref<64x128xf32, #tpu.memory_space<vmem>>) attributes {dimension_semantics = [], scalar_prefetch = 0 : i64, scratch_operands = 2 : i64, tpu.core_type = #tpu.core_type<tc>} {
    %c0 = arith.constant 0 : index
    %c0_0 = arith.constant 0 : index
    %0 = vector.load %arg0[%c0, %c0_0] : memref<64x32xf32, #tpu.memory_space<vmem>>, vector<64x32xf32>
    %c0_1 = arith.constant 0 : index
    %c0_2 = arith.constant 0 : index
    %1 = vector.load %arg1[%c0_1, %c0_2] : memref<32x512xf32, #tpu.memory_space<vmem>>, vector<32x512xf32>
    %cst = arith.constant dense<0.000000e+00> : vector<64x512xf32>
    %2 = tpu.matmul %0, %1, %cst {dimension_numbers = #tpu.dot_dimension_numbers<[1], [0], [0], [1], [0, 0, 1, 1], [], []>} : vector<64x32xf32>, vector<32x512xf32>, vector<64x512xf32> -> vector<64x512xf32>
    %c0_3 = arith.constant 0 : index
    %c0_4 = arith.constant 0 : index
    %3 = vector.load %arg3[%c0_3, %c0_4] : memref<1x512xf32, #tpu.memory_space<vmem>>, vector<1x512xf32>
    %4 = vector.broadcast %3 : vector<1x512xf32> to vector<64x512xf32>
    %5 = arith.addf %2, %4 : vector<64x512xf32>
    %c0_5 = arith.constant 0 : index
    %c0_6 = arith.constant 0 : index
    %6 = vector.load %arg10[%c0_5, %c0_6] : memref<64x512xf32, #tpu.memory_space<vmem>>, vector<64x512xf32>
    tpu.vector_store %arg10[%c0_5, %c0_6], %5 {strides = array<i32>} : memref<64x512xf32, #tpu.memory_space<vmem>>, vector<64x512xf32>,
    %c0_7 = arith.constant 0 : index
    %c0_8 = arith.constant 0 : index
    %7 = vector.load %arg2[%c0_7, %c0_8] : memref<128x512xf32, #tpu.memory_space<vmem>>, vector<128x512xf32>
    %cst_9 = arith.constant 0.000000e+00 : f32
    %8 = vector.broadcast %cst_9 : f32 to vector<8x128xf32>
    %c0_i32 = arith.constant 0 : i32
    %c8_i32 = arith.constant 8 : i32
    %9 = arith.muli %c0_i32, %c8_i32 : i32
    %10 = arith.index_cast %9 : i32 to index
    %c0_10 = arith.constant 0 : index
    %11 = vector.load %arg10[%10, %c0_10] : memref<64x512xf32, #tpu.memory_space<vmem>>, vector<8x512xf32>
    %cst_11 = arith.constant dense<0.000000e+00> : vector<8x512xf32>
    %12 = tpu.matmul %8, %7, %cst_11 {dimension_numbers = #tpu.dot_dimension_numbers<[1], [0], [0], [1], [0, 0, 1, 1], [], []>} : vector<8x128xf32>, vector<128x512xf32>, vector<8x512xf32> -> vector<8x512xf32>
    %13 = arith.addf %11, %12 : vector<8x512xf32>
    %14 = vector.extract_strided_slice %13 {offsets = [0, 0], sizes = [8, 128], strides = [1, 1]} : vector<8x512xf32> to vector<8x128xf32>
    %15 = arith.negf %14 : vector<8x128xf32>
    %16 = math.exp %15 : vector<8x128xf32>
    %cst_12 = arith.constant 1.000000e+00 : f32
    %17 = vector.broadcast %cst_12 : f32 to vector<8x128xf32>
    %18 = arith.addf %17, %16 : vector<8x128xf32>
    %19 = arith.divf %17, %18 : vector<8x128xf32>
    %20 = vector.extract_strided_slice %13 {offsets = [0, 128], sizes = [8, 128], strides = [1, 1]} : vector<8x512xf32> to vector<8x128xf32>
    %21 = arith.negf %20 : vector<8x128xf32>
    %22 = math.exp %21 : vector<8x128xf32>
    %cst_13 = arith.constant 1.000000e+00 : f32
    %23 = vector.broadcast %cst_13 : f32 to vector<8x128xf32>
    %24 = arith.addf %23, %22 : vector<8x128xf32>
    %25 = arith.divf %23, %24 : vector<8x128xf32>
    %26 = vector.extract_strided_slice %13 {offsets = [0, 256], sizes = [8, 128], strides = [1, 1]} : vector<8x512xf32> to vector<8x128xf32>
    %27 = math.tanh %26 : vector<8x128xf32>
    %28 = vector.extract_strided_slice %13 {offsets = [0, 384], sizes = [8, 128], strides = [1, 1]} : vector<8x512xf32> to vector<8x128xf32>
    %29 = arith.negf %28 : vector<8x128xf32>
    %30 = math.exp %29 : vector<8x128xf32>
    %cst_14 = arith.constant 1.000000e+00 : f32
    %31 = vector.broadcast %cst_14 : f32 to vector<8x128xf32>
    %32 = arith.addf %31, %30 : vector<8x128xf32>
    %33 = arith.divf %31, %32 : vector<8x128xf32>
    %34 = arith.mulf %25, %8 : vector<8x128xf32>
    %35 = arith.mulf %19, %27 : vector<8x128xf32>
    %36 = arith.addf %34, %35 : vector<8x128xf32>
    %37 = math.tanh %36 : vector<8x128xf32>
    %38 = arith.mulf %33, %37 : vector<8x128xf32>
    %39 = arith.index_cast %9 : i32 to index
    %c0_15 = arith.constant 0 : index
    %40 = vector.load %arg11[%39, %c0_15] : memref<64x128xf32, #tpu.memory_space<vmem>>, vector<8x128xf32>
    tpu.vector_store %arg11[%39, %c0_15], %38 {strides = array<i32>} : memref<64x128xf32, #tpu.memory_space<vmem>>, vector<8x128xf32>,
    %c1_i32 = arith.constant 1 : i32
    %c8_i32_16 = arith.constant 8 : i32
    %41 = arith.muli %c1_i32, %c8_i32_16 : i32
    %42 = arith.index_cast %41 : i32 to index
    %c0_17 = arith.constant 0 : index
    %43 = vector.load %arg10[%42, %c0_17] : memref<64x512xf32, #tpu.memory_space<vmem>>, vector<8x512xf32>
    %cst_18 = arith.constant dense<0.000000e+00> : vector<8x512xf32>
    %44 = tpu.matmul %38, %7, %cst_18 {dimension_numbers = #tpu.dot_dimension_numbers<[1], [0], [0], [1], [0, 0, 1, 1], [], []>} : vector<8x128xf32>, vector<128x512xf32>, vector<8x512xf32> -> vector<8x512xf32>
    %45 = arith.addf %43, %44 : vector<8x512xf32>
    %46 = vector.extract_strided_slice %45 {offsets = [0, 0], sizes = [8, 128], strides = [1, 1]} : vector<8x512xf32> to vector<8x128xf32>
    %47 = arith.negf %46 : vector<8x128xf32>
    %48 = math.exp %47 : vector<8x128xf32>
    %cst_19 = arith.constant 1.000000e+00 : f32
    %49 = vector.broadcast %cst_19 : f32 to vector<8x128xf32>
    %50 = arith.addf %49, %48 : vector<8x128xf32>
    %51 = arith.divf %49, %50 : vector<8x128xf32>
    %52 = vector.extract_strided_slice %45 {offsets = [0, 128], sizes = [8, 128], strides = [1, 1]} : vector<8x512xf32> to vector<8x128xf32>
    %53 = arith.negf %52 : vector<8x128xf32>
    %54 = math.exp %53 : vector<8x128xf32>
    %cst_20 = arith.constant 1.000000e+00 : f32
    %55 = vector.broadcast %cst_20 : f32 to vector<8x128xf32>
    %56 = arith.addf %55, %54 : vector<8x128xf32>
    %57 = arith.divf %55, %56 : vector<8x128xf32>
    %58 = vector.extract_strided_slice %45 {offsets = [0, 256], sizes = [8, 128], strides = [1, 1]} : vector<8x512xf32> to vector<8x128xf32>
    %59 = math.tanh %58 : vector<8x128xf32>
    %60 = vector.extract_strided_slice %45 {offsets = [0, 384], sizes = [8, 128], strides = [1, 1]} : vector<8x512xf32> to vector<8x128xf32>
    %61 = arith.negf %60 : vector<8x128xf32>
    %62 = math.exp %61 : vector<8x128xf32>
    %cst_21 = arith.constant 1.000000e+00 : f32
    %63 = vector.broadcast %cst_21 : f32 to vector<8x128xf32>
    %64 = arith.addf %63, %62 : vector<8x128xf32>
    %65 = arith.divf %63, %64 : vector<8x128xf32>
    %66 = arith.mulf %57, %36 : vector<8x128xf32>
    %67 = arith.mulf %51, %59 : vector<8x128xf32>
    %68 = arith.addf %66, %67 : vector<8x128xf32>
    %69 = math.tanh %68 : vector<8x128xf32>
    %70 = arith.mulf %65, %69 : vector<8x128xf32>
    %71 = arith.index_cast %41 : i32 to index
    %c0_22 = arith.constant 0 : index
    %72 = vector.load %arg11[%71, %c0_22] : memref<64x128xf32, #tpu.memory_space<vmem>>, vector<8x128xf32>
    tpu.vector_store %arg11[%71, %c0_22], %70 {strides = array<i32>} : memref<64x128xf32, #tpu.memory_space<vmem>>, vector<8x128xf32>,
    %c2_i32 = arith.constant 2 : i32
    %c8_i32_23 = arith.constant 8 : i32
    %73 = arith.muli %c2_i32, %c8_i32_23 : i32
    %74 = arith.index_cast %73 : i32 to index
    %c0_24 = arith.constant 0 : index
    %75 = vector.load %arg10[%74, %c0_24] : memref<64x512xf32, #tpu.memory_space<vmem>>, vector<8x512xf32>
    %cst_25 = arith.constant dense<0.000000e+00> : vector<8x512xf32>
    %76 = tpu.matmul %70, %7, %cst_25 {dimension_numbers = #tpu.dot_dimension_numbers<[1], [0], [0], [1], [0, 0, 1, 1], [], []>} : vector<8x128xf32>, vector<128x512xf32>, vector<8x512xf32> -> vector<8x512xf32>
    %77 = arith.addf %75, %76 : vector<8x512xf32>
    %78 = vector.extract_strided_slice %77 {offsets = [0, 0], sizes = [8, 128], strides = [1, 1]} : vector<8x512xf32> to vector<8x128xf32>
    %79 = arith.negf %78 : vector<8x128xf32>
    %80 = math.exp %79 : vector<8x128xf32>
    %cst_26 = arith.constant 1.000000e+00 : f32
    %81 = vector.broadcast %cst_26 : f32 to vector<8x128xf32>
    %82 = arith.addf %81, %80 : vector<8x128xf32>
    %83 = arith.divf %81, %82 : vector<8x128xf32>
    %84 = vector.extract_strided_slice %77 {offsets = [0, 128], sizes = [8, 128], strides = [1, 1]} : vector<8x512xf32> to vector<8x128xf32>
    %85 = arith.negf %84 : vector<8x128xf32>
    %86 = math.exp %85 : vector<8x128xf32>
    %cst_27 = arith.constant 1.000000e+00 : f32
    %87 = vector.broadcast %cst_27 : f32 to vector<8x128xf32>
    %88 = arith.addf %87, %86 : vector<8x128xf32>
    %89 = arith.divf %87, %88 : vector<8x128xf32>
    %90 = vector.extract_strided_slice %77 {offsets = [0, 256], sizes = [8, 128], strides = [1, 1]} : vector<8x512xf32> to vector<8x128xf32>
    %91 = math.tanh %90 : vector<8x128xf32>
    %92 = vector.extract_strided_slice %77 {offsets = [0, 384], sizes = [8, 128], strides = [1, 1]} : vector<8x512xf32> to vector<8x128xf32>
    %93 = arith.negf %92 : vector<8x128xf32>
    %94 = math.exp %93 : vector<8x128xf32>
    %cst_28 = arith.constant 1.000000e+00 : f32
    %95 = vector.broadcast %cst_28 : f32 to vector<8x128xf32>
    %96 = arith.addf %95, %94 : vector<8x128xf32>
    %97 = arith.divf %95, %96 : vector<8x128xf32>
    %98 = arith.mulf %89, %68 : vector<8x128xf32>
    %99 = arith.mulf %83, %91 : vector<8x128xf32>
    %100 = arith.addf %98, %99 : vector<8x128xf32>
    %101 = math.tanh %100 : vector<8x128xf32>
    %102 = arith.mulf %97, %101 : vector<8x128xf32>
    %103 = arith.index_cast %73 : i32 to index
    %c0_29 = arith.constant 0 : index
    %104 = vector.load %arg11[%103, %c0_29] : memref<64x128xf32, #tpu.memory_space<vmem>>, vector<8x128xf32>
    tpu.vector_store %arg11[%103, %c0_29], %102 {strides = array<i32>} : memref<64x128xf32, #tpu.memory_space<vmem>>, vector<8x128xf32>,
    %c3_i32 = arith.constant 3 : i32
    %c8_i32_30 = arith.constant 8 : i32
    %105 = arith.muli %c3_i32, %c8_i32_30 : i32
    %106 = arith.index_cast %105 : i32 to index
    %c0_31 = arith.constant 0 : index
    %107 = vector.load %arg10[%106, %c0_31] : memref<64x512xf32, #tpu.memory_space<vmem>>, vector<8x512xf32>
    %cst_32 = arith.constant dense<0.000000e+00> : vector<8x512xf32>
    %108 = tpu.matmul %102, %7, %cst_32 {dimension_numbers = #tpu.dot_dimension_numbers<[1], [0], [0], [1], [0, 0, 1, 1], [], []>} : vector<8x128xf32>, vector<128x512xf32>, vector<8x512xf32> -> vector<8x512xf32>
    %109 = arith.addf %107, %108 : vector<8x512xf32>
    %110 = vector.extract_strided_slice %109 {offsets = [0, 0], sizes = [8, 128], strides = [1, 1]} : vector<8x512xf32> to vector<8x128xf32>
    %111 = arith.negf %110 : vector<8x128xf32>
    %112 = math.exp %111 : vector<8x128xf32>
    %cst_33 = arith.constant 1.000000e+00 : f32
    %113 = vector.broadcast %cst_33 : f32 to vector<8x128xf32>
    %114 = arith.addf %113, %112 : vector<8x128xf32>
    %115 = arith.divf %113, %114 : vector<8x128xf32>
    %116 = vector.extract_strided_slice %109 {offsets = [0, 128], sizes = [8, 128], strides = [1, 1]} : vector<8x512xf32> to vector<8x128xf32>
    %117 = arith.negf %116 : vector<8x128xf32>
    %118 = math.exp %117 : vector<8x128xf32>
    %cst_34 = arith.constant 1.000000e+00 : f32
    %119 = vector.broadcast %cst_34 : f32 to vector<8x128xf32>
    %120 = arith.addf %119, %118 : vector<8x128xf32>
    %121 = arith.divf %119, %120 : vector<8x128xf32>
    %122 = vector.extract_strided_slice %109 {offsets = [0, 256], sizes = [8, 128], strides = [1, 1]} : vector<8x512xf32> to vector<8x128xf32>
    %123 = math.tanh %122 : vector<8x128xf32>
    %124 = vector.extract_strided_slice %109 {offsets = [0, 384], sizes = [8, 128], strides = [1, 1]} : vector<8x512xf32> to vector<8x128xf32>
    %125 = arith.negf %124 : vector<8x128xf32>
    %126 = math.exp %125 : vector<8x128xf32>
    %cst_35 = arith.constant 1.000000e+00 : f32
    %127 = vector.broadcast %cst_35 : f32 to vector<8x128xf32>
    %128 = arith.addf %127, %126 : vector<8x128xf32>
    %129 = arith.divf %127, %128 : vector<8x128xf32>
    %130 = arith.mulf %121, %100 : vector<8x128xf32>
    %131 = arith.mulf %115, %123 : vector<8x128xf32>
    %132 = arith.addf %130, %131 : vector<8x128xf32>
    %133 = math.tanh %132 : vector<8x128xf32>
    %134 = arith.mulf %129, %133 : vector<8x128xf32>
    %135 = arith.index_cast %105 : i32 to index
    %c0_36 = arith.constant 0 : index
    %136 = vector.load %arg11[%135, %c0_36] : memref<64x128xf32, #tpu.memory_space<vmem>>, vector<8x128xf32>
    tpu.vector_store %arg11[%135, %c0_36], %134 {strides = array<i32>} : memref<64x128xf32, #tpu.memory_space<vmem>>, vector<8x128xf32>,
    %c4_i32 = arith.constant 4 : i32
    %c8_i32_37 = arith.constant 8 : i32
    %137 = arith.muli %c4_i32, %c8_i32_37 : i32
    %138 = arith.index_cast %137 : i32 to index
    %c0_38 = arith.constant 0 : index
    %139 = vector.load %arg10[%138, %c0_38] : memref<64x512xf32, #tpu.memory_space<vmem>>, vector<8x512xf32>
    %cst_39 = arith.constant dense<0.000000e+00> : vector<8x512xf32>
    %140 = tpu.matmul %134, %7, %cst_39 {dimension_numbers = #tpu.dot_dimension_numbers<[1], [0], [0], [1], [0, 0, 1, 1], [], []>} : vector<8x128xf32>, vector<128x512xf32>, vector<8x512xf32> -> vector<8x512xf32>
    %141 = arith.addf %139, %140 : vector<8x512xf32>
    %142 = vector.extract_strided_slice %141 {offsets = [0, 0], sizes = [8, 128], strides = [1, 1]} : vector<8x512xf32> to vector<8x128xf32>
    %143 = arith.negf %142 : vector<8x128xf32>
    %144 = math.exp %143 : vector<8x128xf32>
    %cst_40 = arith.constant 1.000000e+00 : f32
    %145 = vector.broadcast %cst_40 : f32 to vector<8x128xf32>
    %146 = arith.addf %145, %144 : vector<8x128xf32>
    %147 = arith.divf %145, %146 : vector<8x128xf32>
    %148 = vector.extract_strided_slice %141 {offsets = [0, 128], sizes = [8, 128], strides = [1, 1]} : vector<8x512xf32> to vector<8x128xf32>
    %149 = arith.negf %148 : vector<8x128xf32>
    %150 = math.exp %149 : vector<8x128xf32>
    %cst_41 = arith.constant 1.000000e+00 : f32
    %151 = vector.broadcast %cst_41 : f32 to vector<8x128xf32>
    %152 = arith.addf %151, %150 : vector<8x128xf32>
    %153 = arith.divf %151, %152 : vector<8x128xf32>
    %154 = vector.extract_strided_slice %141 {offsets = [0, 256], sizes = [8, 128], strides = [1, 1]} : vector<8x512xf32> to vector<8x128xf32>
    %155 = math.tanh %154 : vector<8x128xf32>
    %156 = vector.extract_strided_slice %141 {offsets = [0, 384], sizes = [8, 128], strides = [1, 1]} : vector<8x512xf32> to vector<8x128xf32>
    %157 = arith.negf %156 : vector<8x128xf32>
    %158 = math.exp %157 : vector<8x128xf32>
    %cst_42 = arith.constant 1.000000e+00 : f32
    %159 = vector.broadcast %cst_42 : f32 to vector<8x128xf32>
    %160 = arith.addf %159, %158 : vector<8x128xf32>
    %161 = arith.divf %159, %160 : vector<8x128xf32>
    %162 = arith.mulf %153, %132 : vector<8x128xf32>
    %163 = arith.mulf %147, %155 : vector<8x128xf32>
    %164 = arith.addf %162, %163 : vector<8x128xf32>
    %165 = math.tanh %164 : vector<8x128xf32>
    %166 = arith.mulf %161, %165 : vector<8x128xf32>
    %167 = arith.index_cast %137 : i32 to index
    %c0_43 = arith.constant 0 : index
    %168 = vector.load %arg11[%167, %c0_43] : memref<64x128xf32, #tpu.memory_space<vmem>>, vector<8x128xf32>
    tpu.vector_store %arg11[%167, %c0_43], %166 {strides = array<i32>} : memref<64x128xf32, #tpu.memory_space<vmem>>, vector<8x128xf32>,
    %c5_i32 = arith.constant 5 : i32
    %c8_i32_44 = arith.constant 8 : i32
    %169 = arith.muli %c5_i32, %c8_i32_44 : i32
    %170 = arith.index_cast %169 : i32 to index
    %c0_45 = arith.constant 0 : index
    %171 = vector.load %arg10[%170, %c0_45] : memref<64x512xf32, #tpu.memory_space<vmem>>, vector<8x512xf32>
    %cst_46 = arith.constant dense<0.000000e+00> : vector<8x512xf32>
    %172 = tpu.matmul %166, %7, %cst_46 {dimension_numbers = #tpu.dot_dimension_numbers<[1], [0], [0], [1], [0, 0, 1, 1], [], []>} : vector<8x128xf32>, vector<128x512xf32>, vector<8x512xf32> -> vector<8x512xf32>
    %173 = arith.addf %171, %172 : vector<8x512xf32>
    %174 = vector.extract_strided_slice %173 {offsets = [0, 0], sizes = [8, 128], strides = [1, 1]} : vector<8x512xf32> to vector<8x128xf32>
    %175 = arith.negf %174 : vector<8x128xf32>
    %176 = math.exp %175 : vector<8x128xf32>
    %cst_47 = arith.constant 1.000000e+00 : f32
    %177 = vector.broadcast %cst_47 : f32 to vector<8x128xf32>
    %178 = arith.addf %177, %176 : vector<8x128xf32>
    %179 = arith.divf %177, %178 : vector<8x128xf32>
    %180 = vector.extract_strided_slice %173 {offsets = [0, 128], sizes = [8, 128], strides = [1, 1]} : vector<8x512xf32> to vector<8x128xf32>
    %181 = arith.negf %180 : vector<8x128xf32>
    %182 = math.exp %181 : vector<8x128xf32>
    %cst_48 = arith.constant 1.000000e+00 : f32
    %183 = vector.broadcast %cst_48 : f32 to vector<8x128xf32>
    %184 = arith.addf %183, %182 : vector<8x128xf32>
    %185 = arith.divf %183, %184 : vector<8x128xf32>
    %186 = vector.extract_strided_slice %173 {offsets = [0, 256], sizes = [8, 128], strides = [1, 1]} : vector<8x512xf32> to vector<8x128xf32>
    %187 = math.tanh %186 : vector<8x128xf32>
    %188 = vector.extract_strided_slice %173 {offsets = [0, 384], sizes = [8, 128], strides = [1, 1]} : vector<8x512xf32> to vector<8x128xf32>
    %189 = arith.negf %188 : vector<8x128xf32>
    %190 = math.exp %189 : vector<8x128xf32>
    %cst_49 = arith.constant 1.000000e+00 : f32
    %191 = vector.broadcast %cst_49 : f32 to vector<8x128xf32>
    %192 = arith.addf %191, %190 : vector<8x128xf32>
    %193 = arith.divf %191, %192 : vector<8x128xf32>
    %194 = arith.mulf %185, %164 : vector<8x128xf32>
    %195 = arith.mulf %179, %187 : vector<8x128xf32>
    %196 = arith.addf %194, %195 : vector<8x128xf32>
    %197 = math.tanh %196 : vector<8x128xf32>
    %198 = arith.mulf %193, %197 : vector<8x128xf32>
    %199 = arith.index_cast %169 : i32 to index
    %c0_50 = arith.constant 0 : index
    %200 = vector.load %arg11[%199, %c0_50] : memref<64x128xf32, #tpu.memory_space<vmem>>, vector<8x128xf32>
    tpu.vector_store %arg11[%199, %c0_50], %198 {strides = array<i32>} : memref<64x128xf32, #tpu.memory_space<vmem>>, vector<8x128xf32>,
    %c6_i32 = arith.constant 6 : i32
    %c8_i32_51 = arith.constant 8 : i32
    %201 = arith.muli %c6_i32, %c8_i32_51 : i32
    %202 = arith.index_cast %201 : i32 to index
    %c0_52 = arith.constant 0 : index
    %203 = vector.load %arg10[%202, %c0_52] : memref<64x512xf32, #tpu.memory_space<vmem>>, vector<8x512xf32>
    %cst_53 = arith.constant dense<0.000000e+00> : vector<8x512xf32>
    %204 = tpu.matmul %198, %7, %cst_53 {dimension_numbers = #tpu.dot_dimension_numbers<[1], [0], [0], [1], [0, 0, 1, 1], [], []>} : vector<8x128xf32>, vector<128x512xf32>, vector<8x512xf32> -> vector<8x512xf32>
    %205 = arith.addf %203, %204 : vector<8x512xf32>
    %206 = vector.extract_strided_slice %205 {offsets = [0, 0], sizes = [8, 128], strides = [1, 1]} : vector<8x512xf32> to vector<8x128xf32>
    %207 = arith.negf %206 : vector<8x128xf32>
    %208 = math.exp %207 : vector<8x128xf32>
    %cst_54 = arith.constant 1.000000e+00 : f32
    %209 = vector.broadcast %cst_54 : f32 to vector<8x128xf32>
    %210 = arith.addf %209, %208 : vector<8x128xf32>
    %211 = arith.divf %209, %210 : vector<8x128xf32>
    %212 = vector.extract_strided_slice %205 {offsets = [0, 128], sizes = [8, 128], strides = [1, 1]} : vector<8x512xf32> to vector<8x128xf32>
    %213 = arith.negf %212 : vector<8x128xf32>
    %214 = math.exp %213 : vector<8x128xf32>
    %cst_55 = arith.constant 1.000000e+00 : f32
    %215 = vector.broadcast %cst_55 : f32 to vector<8x128xf32>
    %216 = arith.addf %215, %214 : vector<8x128xf32>
    %217 = arith.divf %215, %216 : vector<8x128xf32>
    %218 = vector.extract_strided_slice %205 {offsets = [0, 256], sizes = [8, 128], strides = [1, 1]} : vector<8x512xf32> to vector<8x128xf32>
    %219 = math.tanh %218 : vector<8x128xf32>
    %220 = vector.extract_strided_slice %205 {offsets = [0, 384], sizes = [8, 128], strides = [1, 1]} : vector<8x512xf32> to vector<8x128xf32>
    %221 = arith.negf %220 : vector<8x128xf32>
    %222 = math.exp %221 : vector<8x128xf32>
    %cst_56 = arith.constant 1.000000e+00 : f32
    %223 = vector.broadcast %cst_56 : f32 to vector<8x128xf32>
    %224 = arith.addf %223, %222 : vector<8x128xf32>
    %225 = arith.divf %223, %224 : vector<8x128xf32>
    %226 = arith.mulf %217, %196 : vector<8x128xf32>
    %227 = arith.mulf %211, %219 : vector<8x128xf32>
    %228 = arith.addf %226, %227 : vector<8x128xf32>
    %229 = math.tanh %228 : vector<8x128xf32>
    %230 = arith.mulf %225, %229 : vector<8x128xf32>
    %231 = arith.index_cast %201 : i32 to index
    %c0_57 = arith.constant 0 : index
    %232 = vector.load %arg11[%231, %c0_57] : memref<64x128xf32, #tpu.memory_space<vmem>>, vector<8x128xf32>
    tpu.vector_store %arg11[%231, %c0_57], %230 {strides = array<i32>} : memref<64x128xf32, #tpu.memory_space<vmem>>, vector<8x128xf32>,
    %c7_i32 = arith.constant 7 : i32
    %c8_i32_58 = arith.constant 8 : i32
    %233 = arith.muli %c7_i32, %c8_i32_58 : i32
    %234 = arith.index_cast %233 : i32 to index
    %c0_59 = arith.constant 0 : index
    %235 = vector.load %arg10[%234, %c0_59] : memref<64x512xf32, #tpu.memory_space<vmem>>, vector<8x512xf32>
    %cst_60 = arith.constant dense<0.000000e+00> : vector<8x512xf32>
    %236 = tpu.matmul %230, %7, %cst_60 {dimension_numbers = #tpu.dot_dimension_numbers<[1], [0], [0], [1], [0, 0, 1, 1], [], []>} : vector<8x128xf32>, vector<128x512xf32>, vector<8x512xf32> -> vector<8x512xf32>
    %237 = arith.addf %235, %236 : vector<8x512xf32>
    %238 = vector.extract_strided_slice %237 {offsets = [0, 0], sizes = [8, 128], strides = [1, 1]} : vector<8x512xf32> to vector<8x128xf32>
    %239 = arith.negf %238 : vector<8x128xf32>
    %240 = math.exp %239 : vector<8x128xf32>
    %cst_61 = arith.constant 1.000000e+00 : f32
    %241 = vector.broadcast %cst_61 : f32 to vector<8x128xf32>
    %242 = arith.addf %241, %240 : vector<8x128xf32>
    %243 = arith.divf %241, %242 : vector<8x128xf32>
    %244 = vector.extract_strided_slice %237 {offsets = [0, 128], sizes = [8, 128], strides = [1, 1]} : vector<8x512xf32> to vector<8x128xf32>
    %245 = arith.negf %244 : vector<8x128xf32>
    %246 = math.exp %245 : vector<8x128xf32>
    %cst_62 = arith.constant 1.000000e+00 : f32
    %247 = vector.broadcast %cst_62 : f32 to vector<8x128xf32>
    %248 = arith.addf %247, %246 : vector<8x128xf32>
    %249 = arith.divf %247, %248 : vector<8x128xf32>
    %250 = vector.extract_strided_slice %237 {offsets = [0, 256], sizes = [8, 128], strides = [1, 1]} : vector<8x512xf32> to vector<8x128xf32>
    %251 = math.tanh %250 : vector<8x128xf32>
    %252 = vector.extract_strided_slice %237 {offsets = [0, 384], sizes = [8, 128], strides = [1, 1]} : vector<8x512xf32> to vector<8x128xf32>
    %253 = arith.negf %252 : vector<8x128xf32>
    %254 = math.exp %253 : vector<8x128xf32>
    %cst_63 = arith.constant 1.000000e+00 : f32
    %255 = vector.broadcast %cst_63 : f32 to vector<8x128xf32>
    %256 = arith.addf %255, %254 : vector<8x128xf32>
    %257 = arith.divf %255, %256 : vector<8x128xf32>
    %258 = arith.mulf %249, %228 : vector<8x128xf32>
    %259 = arith.mulf %243, %251 : vector<8x128xf32>
    %260 = arith.addf %258, %259 : vector<8x128xf32>
    %261 = math.tanh %260 : vector<8x128xf32>
    %262 = arith.mulf %257, %261 : vector<8x128xf32>
    %263 = arith.index_cast %233 : i32 to index
    %c0_64 = arith.constant 0 : index
    %264 = vector.load %arg11[%263, %c0_64] : memref<64x128xf32, #tpu.memory_space<vmem>>, vector<8x128xf32>
    tpu.vector_store %arg11[%263, %c0_64], %262 {strides = array<i32>} : memref<64x128xf32, #tpu.memory_space<vmem>>, vector<8x128xf32>,
    %c8_i32_65 = arith.constant 8 : i32
    %c0_66 = arith.constant 0 : index
    %c0_67 = arith.constant 0 : index
    %265 = vector.load %arg11[%c0_66, %c0_67] : memref<64x128xf32, #tpu.memory_space<vmem>>, vector<64x128xf32>
    %c0_68 = arith.constant 0 : index
    %c0_69 = arith.constant 0 : index
    %266 = vector.load %arg4[%c0_68, %c0_69] : memref<128x512xf32, #tpu.memory_space<vmem>>, vector<128x512xf32>
    %cst_70 = arith.constant dense<0.000000e+00> : vector<64x512xf32>
    %267 = tpu.matmul %265, %266, %cst_70 {dimension_numbers = #tpu.dot_dimension_numbers<[1], [0], [0], [1], [0, 0, 1, 1], [], []>} : vector<64x128xf32>, vector<128x512xf32>, vector<64x512xf32> -> vector<64x512xf32>
    %c0_71 = arith.constant 0 : index
    %c0_72 = arith.constant 0 : index
    %268 = vector.load %arg6[%c0_71, %c0_72] : memref<1x512xf32, #tpu.memory_space<vmem>>, vector<1x512xf32>
    %269 = vector.broadcast %268 : vector<1x512xf32> to vector<64x512xf32>
    %270 = arith.addf %267, %269 : vector<64x512xf32>
    %c0_73 = arith.constant 0 : index
    %c0_74 = arith.constant 0 : index
    %271 = vector.load %arg10[%c0_73, %c0_74] : memref<64x512xf32, #tpu.memory_space<vmem>>, vector<64x512xf32>
    tpu.vector_store %arg10[%c0_73, %c0_74], %270 {strides = array<i32>} : memref<64x512xf32, #tpu.memory_space<vmem>>, vector<64x512xf32>,
    %c0_75 = arith.constant 0 : index
    %c0_76 = arith.constant 0 : index
    %272 = vector.load %arg5[%c0_75, %c0_76] : memref<128x512xf32, #tpu.memory_space<vmem>>, vector<128x512xf32>
    %cst_77 = arith.constant 0.000000e+00 : f32
    %273 = vector.broadcast %cst_77 : f32 to vector<8x128xf32>
    %c0_i32_78 = arith.constant 0 : i32
    %c8_i32_79 = arith.constant 8 : i32
    %274 = arith.muli %c0_i32_78, %c8_i32_79 : i32
    %275 = arith.index_cast %274 : i32 to index
    %c0_80 = arith.constant 0 : index
    %276 = vector.load %arg10[%275, %c0_80] : memref<64x512xf32, #tpu.memory_space<vmem>>, vector<8x512xf32>
    %cst_81 = arith.constant dense<0.000000e+00> : vector<8x512xf32>
    %277 = tpu.matmul %273, %272, %cst_81 {dimension_numbers = #tpu.dot_dimension_numbers<[1], [0], [0], [1], [0, 0, 1, 1], [], []>} : vector<8x128xf32>, vector<128x512xf32>, vector<8x512xf32> -> vector<8x512xf32>
    %278 = arith.addf %276, %277 : vector<8x512xf32>
    %279 = vector.extract_strided_slice %278 {offsets = [0, 0], sizes = [8, 128], strides = [1, 1]} : vector<8x512xf32> to vector<8x128xf32>
    %280 = arith.negf %279 : vector<8x128xf32>
    %281 = math.exp %280 : vector<8x128xf32>
    %cst_82 = arith.constant 1.000000e+00 : f32
    %282 = vector.broadcast %cst_82 : f32 to vector<8x128xf32>
    %283 = arith.addf %282, %281 : vector<8x128xf32>
    %284 = arith.divf %282, %283 : vector<8x128xf32>
    %285 = vector.extract_strided_slice %278 {offsets = [0, 128], sizes = [8, 128], strides = [1, 1]} : vector<8x512xf32> to vector<8x128xf32>
    %286 = arith.negf %285 : vector<8x128xf32>
    %287 = math.exp %286 : vector<8x128xf32>
    %cst_83 = arith.constant 1.000000e+00 : f32
    %288 = vector.broadcast %cst_83 : f32 to vector<8x128xf32>
    %289 = arith.addf %288, %287 : vector<8x128xf32>
    %290 = arith.divf %288, %289 : vector<8x128xf32>
    %291 = vector.extract_strided_slice %278 {offsets = [0, 256], sizes = [8, 128], strides = [1, 1]} : vector<8x512xf32> to vector<8x128xf32>
    %292 = math.tanh %291 : vector<8x128xf32>
    %293 = vector.extract_strided_slice %278 {offsets = [0, 384], sizes = [8, 128], strides = [1, 1]} : vector<8x512xf32> to vector<8x128xf32>
    %294 = arith.negf %293 : vector<8x128xf32>
    %295 = math.exp %294 : vector<8x128xf32>
    %cst_84 = arith.constant 1.000000e+00 : f32
    %296 = vector.broadcast %cst_84 : f32 to vector<8x128xf32>
    %297 = arith.addf %296, %295 : vector<8x128xf32>
    %298 = arith.divf %296, %297 : vector<8x128xf32>
    %299 = arith.mulf %290, %273 : vector<8x128xf32>
    %300 = arith.mulf %284, %292 : vector<8x128xf32>
    %301 = arith.addf %299, %300 : vector<8x128xf32>
    %302 = math.tanh %301 : vector<8x128xf32>
    %303 = arith.mulf %298, %302 : vector<8x128xf32>
    %304 = arith.index_cast %274 : i32 to index
    %c0_85 = arith.constant 0 : index
    %305 = vector.load %arg11[%304, %c0_85] : memref<64x128xf32, #tpu.memory_space<vmem>>, vector<8x128xf32>
    tpu.vector_store %arg11[%304, %c0_85], %303 {strides = array<i32>} : memref<64x128xf32, #tpu.memory_space<vmem>>, vector<8x128xf32>,
    %c1_i32_86 = arith.constant 1 : i32
    %c8_i32_87 = arith.constant 8 : i32
    %306 = arith.muli %c1_i32_86, %c8_i32_87 : i32
    %307 = arith.index_cast %306 : i32 to index
    %c0_88 = arith.constant 0 : index
    %308 = vector.load %arg10[%307, %c0_88] : memref<64x512xf32, #tpu.memory_space<vmem>>, vector<8x512xf32>
    %cst_89 = arith.constant dense<0.000000e+00> : vector<8x512xf32>
    %309 = tpu.matmul %303, %272, %cst_89 {dimension_numbers = #tpu.dot_dimension_numbers<[1], [0], [0], [1], [0, 0, 1, 1], [], []>} : vector<8x128xf32>, vector<128x512xf32>, vector<8x512xf32> -> vector<8x512xf32>
    %310 = arith.addf %308, %309 : vector<8x512xf32>
    %311 = vector.extract_strided_slice %310 {offsets = [0, 0], sizes = [8, 128], strides = [1, 1]} : vector<8x512xf32> to vector<8x128xf32>
    %312 = arith.negf %311 : vector<8x128xf32>
    %313 = math.exp %312 : vector<8x128xf32>
    %cst_90 = arith.constant 1.000000e+00 : f32
    %314 = vector.broadcast %cst_90 : f32 to vector<8x128xf32>
    %315 = arith.addf %314, %313 : vector<8x128xf32>
    %316 = arith.divf %314, %315 : vector<8x128xf32>
    %317 = vector.extract_strided_slice %310 {offsets = [0, 128], sizes = [8, 128], strides = [1, 1]} : vector<8x512xf32> to vector<8x128xf32>
    %318 = arith.negf %317 : vector<8x128xf32>
    %319 = math.exp %318 : vector<8x128xf32>
    %cst_91 = arith.constant 1.000000e+00 : f32
    %320 = vector.broadcast %cst_91 : f32 to vector<8x128xf32>
    %321 = arith.addf %320, %319 : vector<8x128xf32>
    %322 = arith.divf %320, %321 : vector<8x128xf32>
    %323 = vector.extract_strided_slice %310 {offsets = [0, 256], sizes = [8, 128], strides = [1, 1]} : vector<8x512xf32> to vector<8x128xf32>
    %324 = math.tanh %323 : vector<8x128xf32>
    %325 = vector.extract_strided_slice %310 {offsets = [0, 384], sizes = [8, 128], strides = [1, 1]} : vector<8x512xf32> to vector<8x128xf32>
    %326 = arith.negf %325 : vector<8x128xf32>
    %327 = math.exp %326 : vector<8x128xf32>
    %cst_92 = arith.constant 1.000000e+00 : f32
    %328 = vector.broadcast %cst_92 : f32 to vector<8x128xf32>
    %329 = arith.addf %328, %327 : vector<8x128xf32>
    %330 = arith.divf %328, %329 : vector<8x128xf32>
    %331 = arith.mulf %322, %301 : vector<8x128xf32>
    %332 = arith.mulf %316, %324 : vector<8x128xf32>
    %333 = arith.addf %331, %332 : vector<8x128xf32>
    %334 = math.tanh %333 : vector<8x128xf32>
    %335 = arith.mulf %330, %334 : vector<8x128xf32>
    %336 = arith.index_cast %306 : i32 to index
    %c0_93 = arith.constant 0 : index
    %337 = vector.load %arg11[%336, %c0_93] : memref<64x128xf32, #tpu.memory_space<vmem>>, vector<8x128xf32>
    tpu.vector_store %arg11[%336, %c0_93], %335 {strides = array<i32>} : memref<64x128xf32, #tpu.memory_space<vmem>>, vector<8x128xf32>,
    %c2_i32_94 = arith.constant 2 : i32
    %c8_i32_95 = arith.constant 8 : i32
    %338 = arith.muli %c2_i32_94, %c8_i32_95 : i32
    %339 = arith.index_cast %338 : i32 to index
    %c0_96 = arith.constant 0 : index
    %340 = vector.load %arg10[%339, %c0_96] : memref<64x512xf32, #tpu.memory_space<vmem>>, vector<8x512xf32>
    %cst_97 = arith.constant dense<0.000000e+00> : vector<8x512xf32>
    %341 = tpu.matmul %335, %272, %cst_97 {dimension_numbers = #tpu.dot_dimension_numbers<[1], [0], [0], [1], [0, 0, 1, 1], [], []>} : vector<8x128xf32>, vector<128x512xf32>, vector<8x512xf32> -> vector<8x512xf32>
    %342 = arith.addf %340, %341 : vector<8x512xf32>
    %343 = vector.extract_strided_slice %342 {offsets = [0, 0], sizes = [8, 128], strides = [1, 1]} : vector<8x512xf32> to vector<8x128xf32>
    %344 = arith.negf %343 : vector<8x128xf32>
    %345 = math.exp %344 : vector<8x128xf32>
    %cst_98 = arith.constant 1.000000e+00 : f32
    %346 = vector.broadcast %cst_98 : f32 to vector<8x128xf32>
    %347 = arith.addf %346, %345 : vector<8x128xf32>
    %348 = arith.divf %346, %347 : vector<8x128xf32>
    %349 = vector.extract_strided_slice %342 {offsets = [0, 128], sizes = [8, 128], strides = [1, 1]} : vector<8x512xf32> to vector<8x128xf32>
    %350 = arith.negf %349 : vector<8x128xf32>
    %351 = math.exp %350 : vector<8x128xf32>
    %cst_99 = arith.constant 1.000000e+00 : f32
    %352 = vector.broadcast %cst_99 : f32 to vector<8x128xf32>
    %353 = arith.addf %352, %351 : vector<8x128xf32>
    %354 = arith.divf %352, %353 : vector<8x128xf32>
    %355 = vector.extract_strided_slice %342 {offsets = [0, 256], sizes = [8, 128], strides = [1, 1]} : vector<8x512xf32> to vector<8x128xf32>
    %356 = math.tanh %355 : vector<8x128xf32>
    %357 = vector.extract_strided_slice %342 {offsets = [0, 384], sizes = [8, 128], strides = [1, 1]} : vector<8x512xf32> to vector<8x128xf32>
    %358 = arith.negf %357 : vector<8x128xf32>
    %359 = math.exp %358 : vector<8x128xf32>
    %cst_100 = arith.constant 1.000000e+00 : f32
    %360 = vector.broadcast %cst_100 : f32 to vector<8x128xf32>
    %361 = arith.addf %360, %359 : vector<8x128xf32>
    %362 = arith.divf %360, %361 : vector<8x128xf32>
    %363 = arith.mulf %354, %333 : vector<8x128xf32>
    %364 = arith.mulf %348, %356 : vector<8x128xf32>
    %365 = arith.addf %363, %364 : vector<8x128xf32>
    %366 = math.tanh %365 : vector<8x128xf32>
    %367 = arith.mulf %362, %366 : vector<8x128xf32>
    %368 = arith.index_cast %338 : i32 to index
    %c0_101 = arith.constant 0 : index
    %369 = vector.load %arg11[%368, %c0_101] : memref<64x128xf32, #tpu.memory_space<vmem>>, vector<8x128xf32>
    tpu.vector_store %arg11[%368, %c0_101], %367 {strides = array<i32>} : memref<64x128xf32, #tpu.memory_space<vmem>>, vector<8x128xf32>,
    %c3_i32_102 = arith.constant 3 : i32
    %c8_i32_103 = arith.constant 8 : i32
    %370 = arith.muli %c3_i32_102, %c8_i32_103 : i32
    %371 = arith.index_cast %370 : i32 to index
    %c0_104 = arith.constant 0 : index
    %372 = vector.load %arg10[%371, %c0_104] : memref<64x512xf32, #tpu.memory_space<vmem>>, vector<8x512xf32>
    %cst_105 = arith.constant dense<0.000000e+00> : vector<8x512xf32>
    %373 = tpu.matmul %367, %272, %cst_105 {dimension_numbers = #tpu.dot_dimension_numbers<[1], [0], [0], [1], [0, 0, 1, 1], [], []>} : vector<8x128xf32>, vector<128x512xf32>, vector<8x512xf32> -> vector<8x512xf32>
    %374 = arith.addf %372, %373 : vector<8x512xf32>
    %375 = vector.extract_strided_slice %374 {offsets = [0, 0], sizes = [8, 128], strides = [1, 1]} : vector<8x512xf32> to vector<8x128xf32>
    %376 = arith.negf %375 : vector<8x128xf32>
    %377 = math.exp %376 : vector<8x128xf32>
    %cst_106 = arith.constant 1.000000e+00 : f32
    %378 = vector.broadcast %cst_106 : f32 to vector<8x128xf32>
    %379 = arith.addf %378, %377 : vector<8x128xf32>
    %380 = arith.divf %378, %379 : vector<8x128xf32>
    %381 = vector.extract_strided_slice %374 {offsets = [0, 128], sizes = [8, 128], strides = [1, 1]} : vector<8x512xf32> to vector<8x128xf32>
    %382 = arith.negf %381 : vector<8x128xf32>
    %383 = math.exp %382 : vector<8x128xf32>
    %cst_107 = arith.constant 1.000000e+00 : f32
    %384 = vector.broadcast %cst_107 : f32 to vector<8x128xf32>
    %385 = arith.addf %384, %383 : vector<8x128xf32>
    %386 = arith.divf %384, %385 : vector<8x128xf32>
    %387 = vector.extract_strided_slice %374 {offsets = [0, 256], sizes = [8, 128], strides = [1, 1]} : vector<8x512xf32> to vector<8x128xf32>
    %388 = math.tanh %387 : vector<8x128xf32>
    %389 = vector.extract_strided_slice %374 {offsets = [0, 384], sizes = [8, 128], strides = [1, 1]} : vector<8x512xf32> to vector<8x128xf32>
    %390 = arith.negf %389 : vector<8x128xf32>
    %391 = math.exp %390 : vector<8x128xf32>
    %cst_108 = arith.constant 1.000000e+00 : f32
    %392 = vector.broadcast %cst_108 : f32 to vector<8x128xf32>
    %393 = arith.addf %392, %391 : vector<8x128xf32>
    %394 = arith.divf %392, %393 : vector<8x128xf32>
    %395 = arith.mulf %386, %365 : vector<8x128xf32>
    %396 = arith.mulf %380, %388 : vector<8x128xf32>
    %397 = arith.addf %395, %396 : vector<8x128xf32>
    %398 = math.tanh %397 : vector<8x128xf32>
    %399 = arith.mulf %394, %398 : vector<8x128xf32>
    %400 = arith.index_cast %370 : i32 to index
    %c0_109 = arith.constant 0 : index
    %401 = vector.load %arg11[%400, %c0_109] : memref<64x128xf32, #tpu.memory_space<vmem>>, vector<8x128xf32>
    tpu.vector_store %arg11[%400, %c0_109], %399 {strides = array<i32>} : memref<64x128xf32, #tpu.memory_space<vmem>>, vector<8x128xf32>,
    %c4_i32_110 = arith.constant 4 : i32
    %c8_i32_111 = arith.constant 8 : i32
    %402 = arith.muli %c4_i32_110, %c8_i32_111 : i32
    %403 = arith.index_cast %402 : i32 to index
    %c0_112 = arith.constant 0 : index
    %404 = vector.load %arg10[%403, %c0_112] : memref<64x512xf32, #tpu.memory_space<vmem>>, vector<8x512xf32>
    %cst_113 = arith.constant dense<0.000000e+00> : vector<8x512xf32>
    %405 = tpu.matmul %399, %272, %cst_113 {dimension_numbers = #tpu.dot_dimension_numbers<[1], [0], [0], [1], [0, 0, 1, 1], [], []>} : vector<8x128xf32>, vector<128x512xf32>, vector<8x512xf32> -> vector<8x512xf32>
    %406 = arith.addf %404, %405 : vector<8x512xf32>
    %407 = vector.extract_strided_slice %406 {offsets = [0, 0], sizes = [8, 128], strides = [1, 1]} : vector<8x512xf32> to vector<8x128xf32>
    %408 = arith.negf %407 : vector<8x128xf32>
    %409 = math.exp %408 : vector<8x128xf32>
    %cst_114 = arith.constant 1.000000e+00 : f32
    %410 = vector.broadcast %cst_114 : f32 to vector<8x128xf32>
    %411 = arith.addf %410, %409 : vector<8x128xf32>
    %412 = arith.divf %410, %411 : vector<8x128xf32>
    %413 = vector.extract_strided_slice %406 {offsets = [0, 128], sizes = [8, 128], strides = [1, 1]} : vector<8x512xf32> to vector<8x128xf32>
    %414 = arith.negf %413 : vector<8x128xf32>
    %415 = math.exp %414 : vector<8x128xf32>
    %cst_115 = arith.constant 1.000000e+00 : f32
    %416 = vector.broadcast %cst_115 : f32 to vector<8x128xf32>
    %417 = arith.addf %416, %415 : vector<8x128xf32>
    %418 = arith.divf %416, %417 : vector<8x128xf32>
    %419 = vector.extract_strided_slice %406 {offsets = [0, 256], sizes = [8, 128], strides = [1, 1]} : vector<8x512xf32> to vector<8x128xf32>
    %420 = math.tanh %419 : vector<8x128xf32>
    %421 = vector.extract_strided_slice %406 {offsets = [0, 384], sizes = [8, 128], strides = [1, 1]} : vector<8x512xf32> to vector<8x128xf32>
    %422 = arith.negf %421 : vector<8x128xf32>
    %423 = math.exp %422 : vector<8x128xf32>
    %cst_116 = arith.constant 1.000000e+00 : f32
    %424 = vector.broadcast %cst_116 : f32 to vector<8x128xf32>
    %425 = arith.addf %424, %423 : vector<8x128xf32>
    %426 = arith.divf %424, %425 : vector<8x128xf32>
    %427 = arith.mulf %418, %397 : vector<8x128xf32>
    %428 = arith.mulf %412, %420 : vector<8x128xf32>
    %429 = arith.addf %427, %428 : vector<8x128xf32>
    %430 = math.tanh %429 : vector<8x128xf32>
    %431 = arith.mulf %426, %430 : vector<8x128xf32>
    %432 = arith.index_cast %402 : i32 to index
    %c0_117 = arith.constant 0 : index
    %433 = vector.load %arg11[%432, %c0_117] : memref<64x128xf32, #tpu.memory_space<vmem>>, vector<8x128xf32>
    tpu.vector_store %arg11[%432, %c0_117], %431 {strides = array<i32>} : memref<64x128xf32, #tpu.memory_space<vmem>>, vector<8x128xf32>,
    %c5_i32_118 = arith.constant 5 : i32
    %c8_i32_119 = arith.constant 8 : i32
    %434 = arith.muli %c5_i32_118, %c8_i32_119 : i32
    %435 = arith.index_cast %434 : i32 to index
    %c0_120 = arith.constant 0 : index
    %436 = vector.load %arg10[%435, %c0_120] : memref<64x512xf32, #tpu.memory_space<vmem>>, vector<8x512xf32>
    %cst_121 = arith.constant dense<0.000000e+00> : vector<8x512xf32>
    %437 = tpu.matmul %431, %272, %cst_121 {dimension_numbers = #tpu.dot_dimension_numbers<[1], [0], [0], [1], [0, 0, 1, 1], [], []>} : vector<8x128xf32>, vector<128x512xf32>, vector<8x512xf32> -> vector<8x512xf32>
    %438 = arith.addf %436, %437 : vector<8x512xf32>
    %439 = vector.extract_strided_slice %438 {offsets = [0, 0], sizes = [8, 128], strides = [1, 1]} : vector<8x512xf32> to vector<8x128xf32>
    %440 = arith.negf %439 : vector<8x128xf32>
    %441 = math.exp %440 : vector<8x128xf32>
    %cst_122 = arith.constant 1.000000e+00 : f32
    %442 = vector.broadcast %cst_122 : f32 to vector<8x128xf32>
    %443 = arith.addf %442, %441 : vector<8x128xf32>
    %444 = arith.divf %442, %443 : vector<8x128xf32>
    %445 = vector.extract_strided_slice %438 {offsets = [0, 128], sizes = [8, 128], strides = [1, 1]} : vector<8x512xf32> to vector<8x128xf32>
    %446 = arith.negf %445 : vector<8x128xf32>
    %447 = math.exp %446 : vector<8x128xf32>
    %cst_123 = arith.constant 1.000000e+00 : f32
    %448 = vector.broadcast %cst_123 : f32 to vector<8x128xf32>
    %449 = arith.addf %448, %447 : vector<8x128xf32>
    %450 = arith.divf %448, %449 : vector<8x128xf32>
    %451 = vector.extract_strided_slice %438 {offsets = [0, 256], sizes = [8, 128], strides = [1, 1]} : vector<8x512xf32> to vector<8x128xf32>
    %452 = math.tanh %451 : vector<8x128xf32>
    %453 = vector.extract_strided_slice %438 {offsets = [0, 384], sizes = [8, 128], strides = [1, 1]} : vector<8x512xf32> to vector<8x128xf32>
    %454 = arith.negf %453 : vector<8x128xf32>
    %455 = math.exp %454 : vector<8x128xf32>
    %cst_124 = arith.constant 1.000000e+00 : f32
    %456 = vector.broadcast %cst_124 : f32 to vector<8x128xf32>
    %457 = arith.addf %456, %455 : vector<8x128xf32>
    %458 = arith.divf %456, %457 : vector<8x128xf32>
    %459 = arith.mulf %450, %429 : vector<8x128xf32>
    %460 = arith.mulf %444, %452 : vector<8x128xf32>
    %461 = arith.addf %459, %460 : vector<8x128xf32>
    %462 = math.tanh %461 : vector<8x128xf32>
    %463 = arith.mulf %458, %462 : vector<8x128xf32>
    %464 = arith.index_cast %434 : i32 to index
    %c0_125 = arith.constant 0 : index
    %465 = vector.load %arg11[%464, %c0_125] : memref<64x128xf32, #tpu.memory_space<vmem>>, vector<8x128xf32>
    tpu.vector_store %arg11[%464, %c0_125], %463 {strides = array<i32>} : memref<64x128xf32, #tpu.memory_space<vmem>>, vector<8x128xf32>,
    %c6_i32_126 = arith.constant 6 : i32
    %c8_i32_127 = arith.constant 8 : i32
    %466 = arith.muli %c6_i32_126, %c8_i32_127 : i32
    %467 = arith.index_cast %466 : i32 to index
    %c0_128 = arith.constant 0 : index
    %468 = vector.load %arg10[%467, %c0_128] : memref<64x512xf32, #tpu.memory_space<vmem>>, vector<8x512xf32>
    %cst_129 = arith.constant dense<0.000000e+00> : vector<8x512xf32>
    %469 = tpu.matmul %463, %272, %cst_129 {dimension_numbers = #tpu.dot_dimension_numbers<[1], [0], [0], [1], [0, 0, 1, 1], [], []>} : vector<8x128xf32>, vector<128x512xf32>, vector<8x512xf32> -> vector<8x512xf32>
    %470 = arith.addf %468, %469 : vector<8x512xf32>
    %471 = vector.extract_strided_slice %470 {offsets = [0, 0], sizes = [8, 128], strides = [1, 1]} : vector<8x512xf32> to vector<8x128xf32>
    %472 = arith.negf %471 : vector<8x128xf32>
    %473 = math.exp %472 : vector<8x128xf32>
    %cst_130 = arith.constant 1.000000e+00 : f32
    %474 = vector.broadcast %cst_130 : f32 to vector<8x128xf32>
    %475 = arith.addf %474, %473 : vector<8x128xf32>
    %476 = arith.divf %474, %475 : vector<8x128xf32>
    %477 = vector.extract_strided_slice %470 {offsets = [0, 128], sizes = [8, 128], strides = [1, 1]} : vector<8x512xf32> to vector<8x128xf32>
    %478 = arith.negf %477 : vector<8x128xf32>
    %479 = math.exp %478 : vector<8x128xf32>
    %cst_131 = arith.constant 1.000000e+00 : f32
    %480 = vector.broadcast %cst_131 : f32 to vector<8x128xf32>
    %481 = arith.addf %480, %479 : vector<8x128xf32>
    %482 = arith.divf %480, %481 : vector<8x128xf32>
    %483 = vector.extract_strided_slice %470 {offsets = [0, 256], sizes = [8, 128], strides = [1, 1]} : vector<8x512xf32> to vector<8x128xf32>
    %484 = math.tanh %483 : vector<8x128xf32>
    %485 = vector.extract_strided_slice %470 {offsets = [0, 384], sizes = [8, 128], strides = [1, 1]} : vector<8x512xf32> to vector<8x128xf32>
    %486 = arith.negf %485 : vector<8x128xf32>
    %487 = math.exp %486 : vector<8x128xf32>
    %cst_132 = arith.constant 1.000000e+00 : f32
    %488 = vector.broadcast %cst_132 : f32 to vector<8x128xf32>
    %489 = arith.addf %488, %487 : vector<8x128xf32>
    %490 = arith.divf %488, %489 : vector<8x128xf32>
    %491 = arith.mulf %482, %461 : vector<8x128xf32>
    %492 = arith.mulf %476, %484 : vector<8x128xf32>
    %493 = arith.addf %491, %492 : vector<8x128xf32>
    %494 = math.tanh %493 : vector<8x128xf32>
    %495 = arith.mulf %490, %494 : vector<8x128xf32>
    %496 = arith.index_cast %466 : i32 to index
    %c0_133 = arith.constant 0 : index
    %497 = vector.load %arg11[%496, %c0_133] : memref<64x128xf32, #tpu.memory_space<vmem>>, vector<8x128xf32>
    tpu.vector_store %arg11[%496, %c0_133], %495 {strides = array<i32>} : memref<64x128xf32, #tpu.memory_space<vmem>>, vector<8x128xf32>,
    %c7_i32_134 = arith.constant 7 : i32
    %c8_i32_135 = arith.constant 8 : i32
    %498 = arith.muli %c7_i32_134, %c8_i32_135 : i32
    %499 = arith.index_cast %498 : i32 to index
    %c0_136 = arith.constant 0 : index
    %500 = vector.load %arg10[%499, %c0_136] : memref<64x512xf32, #tpu.memory_space<vmem>>, vector<8x512xf32>
    %cst_137 = arith.constant dense<0.000000e+00> : vector<8x512xf32>
    %501 = tpu.matmul %495, %272, %cst_137 {dimension_numbers = #tpu.dot_dimension_numbers<[1], [0], [0], [1], [0, 0, 1, 1], [], []>} : vector<8x128xf32>, vector<128x512xf32>, vector<8x512xf32> -> vector<8x512xf32>
    %502 = arith.addf %500, %501 : vector<8x512xf32>
    %503 = vector.extract_strided_slice %502 {offsets = [0, 0], sizes = [8, 128], strides = [1, 1]} : vector<8x512xf32> to vector<8x128xf32>
    %504 = arith.negf %503 : vector<8x128xf32>
    %505 = math.exp %504 : vector<8x128xf32>
    %cst_138 = arith.constant 1.000000e+00 : f32
    %506 = vector.broadcast %cst_138 : f32 to vector<8x128xf32>
    %507 = arith.addf %506, %505 : vector<8x128xf32>
    %508 = arith.divf %506, %507 : vector<8x128xf32>
    %509 = vector.extract_strided_slice %502 {offsets = [0, 128], sizes = [8, 128], strides = [1, 1]} : vector<8x512xf32> to vector<8x128xf32>
    %510 = arith.negf %509 : vector<8x128xf32>
    %511 = math.exp %510 : vector<8x128xf32>
    %cst_139 = arith.constant 1.000000e+00 : f32
    %512 = vector.broadcast %cst_139 : f32 to vector<8x128xf32>
    %513 = arith.addf %512, %511 : vector<8x128xf32>
    %514 = arith.divf %512, %513 : vector<8x128xf32>
    %515 = vector.extract_strided_slice %502 {offsets = [0, 256], sizes = [8, 128], strides = [1, 1]} : vector<8x512xf32> to vector<8x128xf32>
    %516 = math.tanh %515 : vector<8x128xf32>
    %517 = vector.extract_strided_slice %502 {offsets = [0, 384], sizes = [8, 128], strides = [1, 1]} : vector<8x512xf32> to vector<8x128xf32>
    %518 = arith.negf %517 : vector<8x128xf32>
    %519 = math.exp %518 : vector<8x128xf32>
    %cst_140 = arith.constant 1.000000e+00 : f32
    %520 = vector.broadcast %cst_140 : f32 to vector<8x128xf32>
    %521 = arith.addf %520, %519 : vector<8x128xf32>
    %522 = arith.divf %520, %521 : vector<8x128xf32>
    %523 = arith.mulf %514, %493 : vector<8x128xf32>
    %524 = arith.mulf %508, %516 : vector<8x128xf32>
    %525 = arith.addf %523, %524 : vector<8x128xf32>
    %526 = math.tanh %525 : vector<8x128xf32>
    %527 = arith.mulf %522, %526 : vector<8x128xf32>
    %528 = arith.index_cast %498 : i32 to index
    %c0_141 = arith.constant 0 : index
    %529 = vector.load %arg11[%528, %c0_141] : memref<64x128xf32, #tpu.memory_space<vmem>>, vector<8x128xf32>
    tpu.vector_store %arg11[%528, %c0_141], %527 {strides = array<i32>} : memref<64x128xf32, #tpu.memory_space<vmem>>, vector<8x128xf32>,
    %c8_i32_142 = arith.constant 8 : i32
    %c0_143 = arith.constant 0 : index
    %c0_144 = arith.constant 0 : index
    %530 = vector.load %arg11[%c0_143, %c0_144] : memref<64x128xf32, #tpu.memory_space<vmem>>, vector<64x128xf32>
    %c0_145 = arith.constant 0 : index
    %c0_146 = arith.constant 0 : index
    %531 = vector.load %arg7[%c0_145, %c0_146] : memref<128x128xf32, #tpu.memory_space<vmem>>, vector<128x128xf32>
    %cst_147 = arith.constant dense<0.000000e+00> : vector<64x128xf32>
    %532 = tpu.matmul %530, %531, %cst_147 {dimension_numbers = #tpu.dot_dimension_numbers<[1], [0], [0], [1], [0, 0, 1, 1], [], []>} : vector<64x128xf32>, vector<128x128xf32>, vector<64x128xf32> -> vector<64x128xf32>
    %c0_148 = arith.constant 0 : index
    %c0_149 = arith.constant 0 : index
    %533 = vector.load %arg8[%c0_148, %c0_149] : memref<1x128xf32, #tpu.memory_space<vmem>>, vector<1x128xf32>
    %534 = vector.broadcast %533 : vector<1x128xf32> to vector<64x128xf32>
    %535 = arith.addf %532, %534 : vector<64x128xf32>
    %c0_150 = arith.constant 0 : index
    %c0_151 = arith.constant 0 : index
    %536 = vector.load %arg9[%c0_150, %c0_151] : memref<64x128xf32, #tpu.memory_space<vmem>>, vector<64x128xf32>
    tpu.vector_store %arg9[%c0_150, %c0_151], %535 {strides = array<i32>} : memref<64x128xf32, #tpu.memory_space<vmem>>, vector<64x128xf32>,
    return
  }
}

</mosaic_0001>

<llo_original>
// kernel: _lambda_.1
$region0: #{_lambda_.1}
  #allocation0 [shape = 'u32[]', space=smem, size = 0x4, offset = 0x4, fixed_abs, tag = 'smem constant byte address 0x4 - core index']
  #allocation1 [shape = 'u32[144,128]{1,0:T(1,128)}', space=vmem, size = 0x12000, scoped, tag = 'internal scratch']
  #allocation2 [shape = 'f32[64,512]{1,0:T(8,128)}', space=vmem, size = 0x20000, scoped, tag = 'scratch operand']
  #allocation3 [shape = 'f32[64,128]{1,0:T(8,128)}', space=vmem, size = 0x8000, scoped, tag = 'scratch operand']
  %s0 = inlined_call_operand.vmem [shape: f32[64,32], index: 0, kind: input, shape index: {}]
  %s1 = inlined_call_operand.hbm [shape: f32[32,512], index: 1, kind: input, shape index: {}]
  %s2 = inlined_call_operand.hbm [shape: f32[128,512], index: 2, kind: input, shape index: {}]
  %s3 = inlined_call_operand.vmem [shape: f32[1,512], index: 3, kind: input, shape index: {}]
  %s4 = inlined_call_operand.hbm [shape: f32[128,512], index: 4, kind: input, shape index: {}]
  %s5 = inlined_call_operand.hbm [shape: f32[128,512], index: 5, kind: input, shape index: {}]
  %s6 = inlined_call_operand.vmem [shape: f32[1,512], index: 6, kind: input, shape index: {}]
  %s7 = inlined_call_operand.vmem [shape: f32[128,128], index: 7, kind: input, shape index: {}]
  %s8 = inlined_call_operand.vmem [shape: f32[1,128], index: 8, kind: input, shape index: {}]
  %s9 = inlined_call_operand.vmem [shape: f32[64,128], index: 9, kind: output, shape index: {}]
  %s10 = sld [smem:[#allocation0]]
  $region62: #{_lambda_.1} parent=0
    _
  %s12 = ssub.s32 1, %s10
  %s13 = scalar_select 0, %s12, %s10
  $region1: #{_lambda_.1} parent=0
    #allocation4 [shape = 'u8[65536]{0}', space=vmem, size = 0x10000, scoped, tag = 'input window, operand 1, single buffered']
    #allocation5 [shape = 's32[1]{0}', space=sflag, size = 0x4, scoped, tag = 'scoped memory for _lambda_.1']
    #allocation6 [shape = 'u8[262144]{0}', space=vmem, size = 0x40000, scoped, tag = 'input window, operand 2, single buffered']
    #allocation7 [shape = 's32[1]{0}', space=sflag, size = 0x4, scoped, tag = 'scoped memory for _lambda_.1']
    #allocation8 [shape = 'u8[262144]{0}', space=vmem, size = 0x40000, scoped, tag = 'input window, operand 4, single buffered']
    #allocation9 [shape = 'u8[262144]{0}', space=vmem, size = 0x40000, scoped, tag = 'input window, operand 5, single buffered']
    #allocation10 [shape = 's32[1]{0}', space=sflag, size = 0x4, scoped, tag = 'scoped memory for _lambda_.1']
    %14 = vsyncpa [#allocation5], 0
    %15 = vsyncpa [#allocation7], 0
    %16 = vsyncpa [#allocation10], 0
    // Predicated region
    $region2: #{_lambda_.1} parent=1 // pred_check
      _
    $region3: #{_lambda_.1} parent=1 // pred_check_branch
      %18 = sbr.rel (0) target = $region5
    $region4: #{_lambda_.1} parent=1 // pred_region
      _
    $region5: #{_lambda_.1} parent=1 // pred_fallthru
      _
    // Predicated region
    $region6: #{_lambda_.1} parent=1 // pred_check
      _
    $region7: #{_lambda_.1} parent=1 // pred_check_branch
      %20 = sbr.rel (0) target = $region9
    $region8: #{_lambda_.1} parent=1 // pred_region
      %s22 = ssub.s32 2048, 2048
      %23 = vsyncadd [#allocation5], %s22
      %s24 = sshll.u32 [#allocation4], 4
      %s25 = int_to_ptr.vmem [resolvable:$true] %s24
      %30 = dma.hbm_to_vmem [thread:$0]  %s1, 2048, %s25, [#allocation5], 512, 512, 32
    $region9: #{_lambda_.1} parent=1 // pred_fallthru
      _
    // Predicated region
    $region10: #{_lambda_.1} parent=1 // pred_check
      _
    $region11: #{_lambda_.1} parent=1 // pred_check_branch
      %32 = sbr.rel (0) target = $region13
    $region12: #{_lambda_.1} parent=1 // pred_region
      %s34 = ssub.s32 8192, 8192
      %35 = vsyncadd [#allocation7], %s34
      %s36 = sshll.u32 [#allocation6], 4
      %s37 = int_to_ptr.vmem [resolvable:$true] %s36
      %42 = dma.hbm_to_vmem [thread:$0]  %s2, 8192, %s37, [#allocation7], 512, 512, 32
    $region13: #{_lambda_.1} parent=1 // pred_fallthru
      _
    // Predicated region
    $region14: #{_lambda_.1} parent=1 // pred_check
      _
    $region15: #{_lambda_.1} parent=1 // pred_check_branch
      %44 = sbr.rel (0) target = $region17
    $region16: #{_lambda_.1} parent=1 // pred_region
      _
    $region17: #{_lambda_.1} parent=1 // pred_fallthru
      _
    // Predicated region
    $region18: #{_lambda_.1} parent=1 // pred_check
      _
    $region19: #{_lambda_.1} parent=1 // pred_check_branch
      %46 = sbr.rel (0) target = $region21
    $region20: #{_lambda_.1} parent=1 // pred_region
      %s48 = ssub.s32 8192, 8192
      %49 = vsyncadd [#allocation7], %s48
      %s50 = sshll.u32 [#allocation8], 4
      %s51 = int_to_ptr.vmem [resolvable:$true] %s50
      %56 = dma.hbm_to_vmem [thread:$0]  %s4, 8192, %s51, [#allocation7], 512, 512, 32
    $region21: #{_lambda_.1} parent=1 // pred_fallthru
      _
    // Predicated region
    $region22: #{_lambda_.1} parent=1 // pred_check
      _
    $region23: #{_lambda_.1} parent=1 // pred_check_branch
      %58 = sbr.rel (0) target = $region25
    $region24: #{_lambda_.1} parent=1 // pred_region
      %s60 = ssub.s32 8192, 8192
      %61 = vsyncadd [#allocation10], %s60
      %s62 = sshll.u32 [#allocation9], 4
      %s63 = int_to_ptr.vmem [resolvable:$true] %s62
      %68 = dma.hbm_to_vmem [thread:$0]  %s5, 8192, %s63, [#allocation10], 512, 512, 32
    $region25: #{_lambda_.1} parent=1 // pred_fallthru
      _
    // Predicated region
    $region26: #{_lambda_.1} parent=1 // pred_check
      _
    $region27: #{_lambda_.1} parent=1 // pred_check_branch
      %70 = sbr.rel (0) target = $region29
    $region28: #{_lambda_.1} parent=1 // pred_region
      _
    $region29: #{_lambda_.1} parent=1 // pred_fallthru
      _
    // Predicated region
    $region30: #{_lambda_.1} parent=1 // pred_check
      _
    $region31: #{_lambda_.1} parent=1 // pred_check_branch
      %72 = sbr.rel (0) target = $region33
    $region32: #{_lambda_.1} parent=1 // pred_region
      _
    $region33: #{_lambda_.1} parent=1 // pred_fallthru
      _
    // Predicated region
    $region34: #{_lambda_.1} parent=1 // pred_check
      _
    $region35: #{_lambda_.1} parent=1 // pred_check_branch
      %74 = sbr.rel (0) target = $region37
    $region36: #{_lambda_.1} parent=1 // pred_region
      _
    $region37: #{_lambda_.1} parent=1 // pred_fallthru
      _
    // Predicated region
    $region38: #{_lambda_.1} parent=1 // pred_check
      _
    $region39: #{_lambda_.1} parent=1 // pred_check_branch
      %76 = sbr.rel (0) target = $region41
    $region40: #{_lambda_.1} parent=1 // pred_region
      %77 = dma.done [#allocation5], 2048
    $region41: #{_lambda_.1} parent=1 // pred_fallthru
      _
    // Predicated region
    $region42: #{_lambda_.1} parent=1 // pred_check
      _
    $region43: #{_lambda_.1} parent=1 // pred_check_branch
      %79 = sbr.rel (0) target = $region45
    $region44: #{_lambda_.1} parent=1 // pred_region
      %80 = dma.done [#allocation7], 8192
    $region45: #{_lambda_.1} parent=1 // pred_fallthru
      _
    // Predicated region
    $region46: #{_lambda_.1} parent=1 // pred_check
      _
    $region47: #{_lambda_.1} parent=1 // pred_check_branch
      %82 = sbr.rel (0) target = $region49
    $region48: #{_lambda_.1} parent=1 // pred_region
      %83 = dma.done [#allocation7], 8192
    $region49: #{_lambda_.1} parent=1 // pred_fallthru
      _
    // Predicated region
    $region50: #{_lambda_.1} parent=1 // pred_check
      _
    $region51: #{_lambda_.1} parent=1 // pred_check_branch
      %85 = sbr.rel (0) target = $region53
    $region52: #{_lambda_.1} parent=1 // pred_region
      %86 = dma.done [#allocation10], 8192
    $region53: #{_lambda_.1} parent=1 // pred_fallthru
      _
    %v87 = vld [vmem:[%s0] sm:$0xff]
    %v88 = vld [vmem:[%s0 + $0x8] sm:$0xff]
    %v89 = vld [vmem:[%s0 + $0x10] sm:$0xff]
    %v90 = vld [vmem:[%s0 + $0x18] sm:$0xff]
    %v91 = vld [vmem:[%s0 + $0x20] sm:$0xff]
    %v92 = vld [vmem:[%s0 + $0x28] sm:$0xff]
    %v93 = vld [vmem:[%s0 + $0x30] sm:$0xff]
    %v94 = vld [vmem:[%s0 + $0x38] sm:$0xff]
    %v95 = vld [vmem:[#allocation4] sm:$0xff]
    %v96 = vld [vmem:[#allocation4 + $0x8] sm:$0xff]
    %v97 = vld [vmem:[#allocation4 + $0x10] sm:$0xff]
    %v98 = vld [vmem:[#allocation4 + $0x18] sm:$0xff]
    %v99 = vld [vmem:[#allocation4 + $0x20] sm:$0xff]
    %v100 = vld [vmem:[#allocation4 + $0x28] sm:$0xff]
    %v101 = vld [vmem:[#allocation4 + $0x30] sm:$0xff]
    %v102 = vld [vmem:[#allocation4 + $0x38] sm:$0xff]
    %v103 = vld [vmem:[#allocation4 + $0x40] sm:$0xff]
    %v104 = vld [vmem:[#allocation4 + $0x48] sm:$0xff]
    %v105 = vld [vmem:[#allocation4 + $0x50] sm:$0xff]
    %v106 = vld [vmem:[#allocation4 + $0x58] sm:$0xff]
    %v107 = vld [vmem:[#allocation4 + $0x60] sm:$0xff]
    %v108 = vld [vmem:[#allocation4 + $0x68] sm:$0xff]
    %v109 = vld [vmem:[#allocation4 + $0x70] sm:$0xff]
    %v110 = vld [vmem:[#allocation4 + $0x78] sm:$0xff]
    %v111 = vld [vmem:[%s3] sm:$0xf]
    %v113 = vlaneseq
    %v114 = vshrl.u32 %v113, 7
    %v115 = vsub.s32 0, %v114
    %v116 = vrot.slane %v111, %v115
    %v117 = vlaneseq
    %v118 = vshrl.u32 %v117, 7
    %v119 = vsub.s32 1, %v118
    %v120 = vrot.slane %v111, %v119
    %v121 = vlaneseq
    %v122 = vshrl.u32 %v121, 7
    %v123 = vsub.s32 2, %v122
    %v124 = vrot.slane %v111, %v123
    %v125 = vlaneseq
    %v126 = vshrl.u32 %v125, 7
    %v127 = vsub.s32 3, %v126
    %v128 = vrot.slane %v111, %v127
    %vm133 = vcmask 261120
    %v135 = vsel %vm133, %v87, 0
    %v138 = vsel %vm133, %v88, 0
    %v141 = vsel %vm133, %v89, 0
    %v144 = vsel %vm133, %v90, 0
    %v147 = vsel %vm133, %v91, 0
    %v150 = vsel %vm133, %v92, 0
    %v153 = vsel %vm133, %v93, 0
    %v156 = vsel %vm133, %v94, 0
    %158 = vmatprep.subr.mxu0 %v96
    %159 = vmatpush1.msra.mxu0 %v95
    %160 = vmatprep.subr.mxu0 %v100
    %161 = vmatpush1.msra.mxu0 %v99
    %162 = vmatprep.subr.mxu0 %v104
    %163 = vmatpush1.msra.mxu0 %v103
    %164 = vmatprep.subr.mxu0 %v108
    %165 = vmatpush1.msra.mxu0 %v107
    %166 = vmatprep.subr.mxu0 0.0
    %167 = vmatpush1.msra.mxu0 0.0
    %168 = vmatprep.subr.mxu0 0.0
    %169 = vmatpush1.msra.mxu0 0.0
    %170 = vmatprep.subr.mxu0 0.0
    %171 = vmatpush1.msra.mxu0 0.0
    %172 = vmatprep.subr.mxu0 0.0
    %173 = vmatpush1.msra.mxu0 0.0
    %174 = vmatprep.subr.mxu0 0.0
    %175 = vmatpush1.msra.mxu0 0.0
    %176 = vmatprep.subr.mxu0 0.0
    %177 = vmatpush1.msra.mxu0 0.0
    %178 = vmatprep.subr.mxu0 0.0
    %179 = vmatpush1.msra.mxu0 0.0
    %180 = vmatprep.subr.mxu0 0.0
    %181 = vmatpush1.msra.mxu0 0.0
    %182 = vmatprep.subr.mxu0 0.0
    %183 = vmatpush1.msra.mxu0 0.0
    %184 = vmatprep.subr.mxu0 0.0
    %185 = vmatpush1.msra.mxu0 0.0
    %186 = vmatprep.subr.mxu0 0.0
    %187 = vmatpush1.msra.mxu0 0.0
    %188 = vmatprep.subr.mxu0 0.0
    %189 = vmatpush1.msra.mxu0 0.0
    %190 = vmatprep.subr.mxu0 0.0
    %191 = vmatpush1.msra.mxu0 0.0
    %192 = vmatprep.subr.mxu0 0.0
    %193 = vmatpush1.msra.mxu0 0.0
    %194 = vmatprep.subr.mxu0 0.0
    %195 = vmatpush1.msra.mxu0 0.0
    %196 = vmatprep.subr.mxu0 0.0
    %197 = vmatpush1.msra.mxu0 0.0
    %198 = vmatprep.subr.mxu0 0.0
    %199 = vmatpush1.msra.mxu0 0.0
    %200 = vmatprep.subr.mxu0 0.0
    %201 = vmatpush1.msra.mxu0 0.0
    %202 = vmatprep.subr.mxu0 0.0
    %203 = vmatpush1.msra.mxu0 0.0
    %204 = vmatprep.subr.mxu0 0.0
    %205 = vmatpush1.msra.mxu0 0.0
    %206 = vmatprep.subr.mxu0 0.0
    %207 = vmatpush1.msra.mxu0 0.0
    %208 = vmatprep.subr.mxu0 0.0
    %209 = vmatpush1.msra.mxu0 0.0
    %210 = vmatprep.subr.mxu0 0.0
    %211 = vmatpush1.msra.mxu0 0.0
    %212 = vmatprep.subr.mxu0 0.0
    %213 = vmatpush1.msra.mxu0 0.0
    %214 = vmatprep.subr.mxu0 0.0
    %215 = vmatpush1.msra.mxu0 0.0
    %216 = vmatprep.subr.mxu0 0.0
    %217 = vmatpush1.msra.mxu0 0.0
    %218 = vmatprep.subr.mxu0 0.0
    %219 = vmatpush1.msra.mxu0 0.0
    %220 = vmatprep.subr.mxu0 0.0
    %221 = vmatpush1.msra.mxu0 0.0
    %222 = vmatprep.mubr.f32.mxu0 0.0
    %223 = vmatmul.mubr.f32.gmra.mrb[0].mxu0 %v135
    %v224 = vpop.f32.mrb[0].mxu0
    %v225 = vadd.f32 %v116, %v224
    %v226 = vpop.f32.mrb[0].mxu0
    %v227 = vadd.f32 %v120, %v226
    %228 = vmatprep.mubr.f32.mxu0 0.0
    %229 = vmatmul.mubr.f32.gmra.mrb[0].mxu0 %v138
    %v230 = vpop.f32.mrb[0].mxu0
    %v231 = vadd.f32 %v116, %v230
    %v232 = vpop.f32.mrb[0].mxu0
    %v233 = vadd.f32 %v120, %v232
    %234 = vmatprep.mubr.f32.mxu0 0.0
    %235 = vmatmul.mubr.f32.gmra.mrb[0].mxu0 %v141
    %v236 = vpop.f32.mrb[0].mxu0
    %v237 = vadd.f32 %v116, %v236
    %v238 = vpop.f32.mrb[0].mxu0
    %v239 = vadd.f32 %v120, %v238
    %240 = vmatprep.mubr.f32.mxu0 0.0
    %241 = vmatmul.mubr.f32.gmra.mrb[0].mxu0 %v144
    %v242 = vpop.f32.mrb[0].mxu0
    %v243 = vadd.f32 %v116, %v242
    %v244 = vpop.f32.mrb[0].mxu0
    %v245 = vadd.f32 %v120, %v244
    %246 = vmatprep.mubr.f32.mxu0 0.0
    %247 = vmatmul.mubr.f32.gmra.mrb[0].mxu0 %v147
    %v248 = vpop.f32.mrb[0].mxu0
    %v249 = vadd.f32 %v116, %v248
    %v250 = vpop.f32.mrb[0].mxu0
    %v251 = vadd.f32 %v120, %v250
    %252 = vmatprep.mubr.f32.mxu0 0.0
    %253 = vmatmul.mubr.f32.gmra.mrb[0].mxu0 %v150
    %v254 = vpop.f32.mrb[0].mxu0
    %v255 = vadd.f32 %v116, %v254
    %v256 = vpop.f32.mrb[0].mxu0
    %v257 = vadd.f32 %v120, %v256
    %258 = vmatprep.mubr.f32.mxu0 0.0
    %259 = vmatmul.mubr.f32.gmra.mrb[0].mxu0 %v153
    %v260 = vpop.f32.mrb[0].mxu0
    %v261 = vadd.f32 %v116, %v260
    %v262 = vpop.f32.mrb[0].mxu0
    %v263 = vadd.f32 %v120, %v262
    %264 = vmatprep.mubr.f32.mxu0 0.0
    %265 = vmatmul.mubr.f32.gmra.mrb[0].mxu0 %v156
    %v266 = vpop.f32.mrb[0].mxu0
    %v267 = vadd.f32 %v116, %v266
    %v268 = vpop.f32.mrb[0].mxu0
    %v269 = vadd.f32 %v120, %v268
    %270 = vdwg.mxu0
    %271 = vmatprep.subr.mxu0 %v98
    %272 = vmatpush1.msra.mxu0 %v97
    %273 = vmatprep.subr.mxu0 %v102
    %274 = vmatpush1.msra.mxu0 %v101
    %275 = vmatprep.subr.mxu0 %v106
    %276 = vmatpush1.msra.mxu0 %v105
    %277 = vmatprep.subr.mxu0 %v110
    %278 = vmatpush1.msra.mxu0 %v109
    %279 = vmatprep.subr.mxu0 0.0
    %280 = vmatpush1.msra.mxu0 0.0
    %281 = vmatprep.subr.mxu0 0.0
    %282 = vmatpush1.msra.mxu0 0.0
    %283 = vmatprep.subr.mxu0 0.0
    %284 = vmatpush1.msra.mxu0 0.0
    %285 = vmatprep.subr.mxu0 0.0
    %286 = vmatpush1.msra.mxu0 0.0
    %287 = vmatprep.subr.mxu0 0.0
    %288 = vmatpush1.msra.mxu0 0.0
    %289 = vmatprep.subr.mxu0 0.0
    %290 = vmatpush1.msra.mxu0 0.0
    %291 = vmatprep.subr.mxu0 0.0
    %292 = vmatpush1.msra.mxu0 0.0
    %293 = vmatprep.subr.mxu0 0.0
    %294 = vmatpush1.msra.mxu0 0.0
    %295 = vmatprep.subr.mxu0 0.0
    %296 = vmatpush1.msra.mxu0 0.0
    %297 = vmatprep.subr.mxu0 0.0
    %298 = vmatpush1.msra.mxu0 0.0
    %299 = vmatprep.subr.mxu0 0.0
    %300 = vmatpush1.msra.mxu0 0.0
    %301 = vmatprep.subr.mxu0 0.0
    %302 = vmatpush1.msra.mxu0 0.0
    %303 = vmatprep.subr.mxu0 0.0
    %304 = vmatpush1.msra.mxu0 0.0
    %305 = vmatprep.subr.mxu0 0.0
    %306 = vmatpush1.msra.mxu0 0.0
    %307 = vmatprep.subr.mxu0 0.0
    %308 = vmatpush1.msra.mxu0 0.0
    %309 = vmatprep.subr.mxu0 0.0
    %310 = vmatpush1.msra.mxu0 0.0
    %311 = vmatprep.subr.mxu0 0.0
    %312 = vmatpush1.msra.mxu0 0.0
    %313 = vmatprep.subr.mxu0 0.0
    %314 = vmatpush1.msra.mxu0 0.0
    %315 = vmatprep.subr.mxu0 0.0
    %316 = vmatpush1.msra.mxu0 0.0
    %317 = vmatprep.subr.mxu0 0.0
    %318 = vmatpush1.msra.mxu0 0.0
    %319 = vmatprep.subr.mxu0 0.0
    %320 = vmatpush1.msra.mxu0 0.0
    %321 = vmatprep.subr.mxu0 0.0
    %322 = vmatpush1.msra.mxu0 0.0
    %323 = vmatprep.subr.mxu0 0.0
    %324 = vmatpush1.msra.mxu0 0.0
    %325 = vmatprep.subr.mxu0 0.0
    %326 = vmatpush1.msra.mxu0 0.0
    %327 = vmatprep.subr.mxu0 0.0
    %328 = vmatpush1.msra.mxu0 0.0
    %329 = vmatprep.subr.mxu0 0.0
    %330 = vmatpush1.msra.mxu0 0.0
    %331 = vmatprep.subr.mxu0 0.0
    %332 = vmatpush1.msra.mxu0 0.0
    %333 = vmatprep.subr.mxu0 0.0
    %334 = vmatpush1.msra.mxu0 0.0
    %335 = vmatprep.mubr.f32.mxu0 0.0
    %336 = vmatmul.mubr.f32.gmra.mrb[0].mxu0 %v135
    %v337 = vpop.f32.mrb[0].mxu0
    %v338 = vadd.f32 %v124, %v337
    %v339 = vpop.f32.mrb[0].mxu0
    %v340 = vadd.f32 %v128, %v339
    %341 = vmatprep.mubr.f32.mxu0 0.0
    %342 = vmatmul.mubr.f32.gmra.mrb[0].mxu0 %v138
    %v343 = vpop.f32.mrb[0].mxu0
    %v344 = vadd.f32 %v124, %v343
    %v345 = vpop.f32.mrb[0].mxu0
    %v346 = vadd.f32 %v128, %v345
    %347 = vmatprep.mubr.f32.mxu0 0.0
    %348 = vmatmul.mubr.f32.gmra.mrb[0].mxu0 %v141
    %v349 = vpop.f32.mrb[0].mxu0
    %v350 = vadd.f32 %v124, %v349
    %v351 = vpop.f32.mrb[0].mxu0
    %v352 = vadd.f32 %v128, %v351
    %353 = vmatprep.mubr.f32.mxu0 0.0
    %354 = vmatmul.mubr.f32.gmra.mrb[0].mxu0 %v144
    %v355 = vpop.f32.mrb[0].mxu0
    %v356 = vadd.f32 %v124, %v355
    %v357 = vpop.f32.mrb[0].mxu0
    %v358 = vadd.f32 %v128, %v357
    %359 = vmatprep.mubr.f32.mxu0 0.0
    %360 = vmatmul.mubr.f32.gmra.mrb[0].mxu0 %v147
    %v361 = vpop.f32.mrb[0].mxu0
    %v362 = vadd.f32 %v124, %v361
    %v363 = vpop.f32.mrb[0].mxu0
    %v364 = vadd.f32 %v128, %v363
    %365 = vmatprep.mubr.f32.mxu0 0.0
    %366 = vmatmul.mubr.f32.gmra.mrb[0].mxu0 %v150
    %v367 = vpop.f32.mrb[0].mxu0
    %v368 = vadd.f32 %v124, %v367
    %v369 = vpop.f32.mrb[0].mxu0
    %v370 = vadd.f32 %v128, %v369
    %371 = vmatprep.mubr.f32.mxu0 0.0
    %372 = vmatmul.mubr.f32.gmra.mrb[0].mxu0 %v153
    %v373 = vpop.f32.mrb[0].mxu0
    %v374 = vadd.f32 %v124, %v373
    %v375 = vpop.f32.mrb[0].mxu0
    %v376 = vadd.f32 %v128, %v375
    %377 = vmatprep.mubr.f32.mxu0 0.0
    %378 = vmatmul.mubr.f32.gmra.mrb[0].mxu0 %v156
    %v379 = vpop.f32.mrb[0].mxu0
    %v380 = vadd.f32 %v124, %v379
    %v381 = vpop.f32.mrb[0].mxu0
    %v382 = vadd.f32 %v128, %v381
    %383 = vdwg.mxu0
    %384 = vst [vmem:[#allocation2] sm:$0xff] %v225
    %385 = vst [vmem:[#allocation2 + $0x8] sm:$0xff] %v227
    %386 = vst [vmem:[#allocation2 + $0x10] sm:$0xff] %v338
    %387 = vst [vmem:[#allocation2 + $0x18] sm:$0xff] %v340
    %388 = vst [vmem:[#allocation2 + $0x20] sm:$0xff] %v231
    %389 = vst [vmem:[#allocation2 + $0x28] sm:$0xff] %v233
    %390 = vst [vmem:[#allocation2 + $0x30] sm:$0xff] %v344
    %391 = vst [vmem:[#allocation2 + $0x38] sm:$0xff] %v346
    %392 = vst [vmem:[#allocation2 + $0x40] sm:$0xff] %v237
    %393 = vst [vmem:[#allocation2 + $0x48] sm:$0xff] %v239
    %394 = vst [vmem:[#allocation2 + $0x50] sm:$0xff] %v350
    %395 = vst [vmem:[#allocation2 + $0x58] sm:$0xff] %v352
    %396 = vst [vmem:[#allocation2 + $0x60] sm:$0xff] %v243
    %397 = vst [vmem:[#allocation2 + $0x68] sm:$0xff] %v245
    %398 = vst [vmem:[#allocation2 + $0x70] sm:$0xff] %v356
    %399 = vst [vmem:[#allocation2 + $0x78] sm:$0xff] %v358
    %400 = vst [vmem:[#allocation2 + $0x80] sm:$0xff] %v249
    %401 = vst [vmem:[#allocation2 + $0x88] sm:$0xff] %v251
    %402 = vst [vmem:[#allocation2 + $0x90] sm:$0xff] %v362
    %403 = vst [vmem:[#allocation2 + $0x98] sm:$0xff] %v364
    %404 = vst [vmem:[#allocation2 + $0xa0] sm:$0xff] %v255
    %405 = vst [vmem:[#allocation2 + $0xa8] sm:$0xff] %v257
    %406 = vst [vmem:[#allocation2 + $0xb0] sm:$0xff] %v368
    %407 = vst [vmem:[#allocation2 + $0xb8] sm:$0xff] %v370
    %408 = vst [vmem:[#allocation2 + $0xc0] sm:$0xff] %v261
    %409 = vst [vmem:[#allocation2 + $0xc8] sm:$0xff] %v263
    %410 = vst [vmem:[#allocation2 + $0xd0] sm:$0xff] %v374
    %411 = vst [vmem:[#allocation2 + $0xd8] sm:$0xff] %v376
    %412 = vst [vmem:[#allocation2 + $0xe0] sm:$0xff] %v267
    %413 = vst [vmem:[#allocation2 + $0xe8] sm:$0xff] %v269
    %414 = vst [vmem:[#allocation2 + $0xf0] sm:$0xff] %v380
    %415 = vst [vmem:[#allocation2 + $0xf8] sm:$0xff] %v382
    %v416 = vld [vmem:[#allocation6] sm:$0xff]
    %v417 = vld [vmem:[#allocation6 + $0x8] sm:$0xff]
    %v418 = vld [vmem:[#allocation6 + $0x10] sm:$0xff]
    %v419 = vld [vmem:[#allocation6 + $0x18] sm:$0xff]
    %v420 = vld [vmem:[#allocation6 + $0x20] sm:$0xff]
    %v421 = vld [vmem:[#allocation6 + $0x28] sm:$0xff]
    %v422 = vld [vmem:[#allocation6 + $0x30] sm:$0xff]
    %v423 = vld [vmem:[#allocation6 + $0x38] sm:$0xff]
    %v424 = vld [vmem:[#allocation6 + $0x40] sm:$0xff]
    %v425 = vld [vmem:[#allocation6 + $0x48] sm:$0xff]
    %v426 = vld [vmem:[#allocation6 + $0x50] sm:$0xff]
    %v427 = vld [vmem:[#allocation6 + $0x58] sm:$0xff]
    %v428 = vld [vmem:[#allocation6 + $0x60] sm:$0xff]
    %v429 = vld [vmem:[#allocation6 + $0x68] sm:$0xff]
    %v430 = vld [vmem:[#allocation6 + $0x70] sm:$0xff]
    %v431 = vld [vmem:[#allocation6 + $0x78] sm:$0xff]
    %v432 = vld [vmem:[#allocation6 + $0x80] sm:$0xff]
    %v433 = vld [vmem:[#allocation6 + $0x88] sm:$0xff]
    %v434 = vld [vmem:[#allocation6 + $0x90] sm:$0xff]
    %v435 = vld [vmem:[#allocation6 + $0x98] sm:$0xff]
    %v436 = vld [vmem:[#allocation6 + $0xa0] sm:$0xff]
    %v437 = vld [vmem:[#allocation6 + $0xa8] sm:$0xff]
    %v438 = vld [vmem:[#allocation6 + $0xb0] sm:$0xff]
    %v439 = vld [vmem:[#allocation6 + $0xb8] sm:$0xff]
    %v440 = vld [vmem:[#allocation6 + $0xc0] sm:$0xff]
    %v441 = vld [vmem:[#allocation6 + $0xc8] sm:$0xff]
    %v442 = vld [vmem:[#allocation6 + $0xd0] sm:$0xff]
    %v443 = vld [vmem:[#allocation6 + $0xd8] sm:$0xff]
    %v444 = vld [vmem:[#allocation6 + $0xe0] sm:$0xff]
    %v445 = vld [vmem:[#allocation6 + $0xe8] sm:$0xff]
    %v446 = vld [vmem:[#allocation6 + $0xf0] sm:$0xff]
    %v447 = vld [vmem:[#allocation6 + $0xf8] sm:$0xff]
    %v448 = vld [vmem:[#allocation6 + $0x100] sm:$0xff]
    %v449 = vld [vmem:[#allocation6 + $0x108] sm:$0xff]
    %v450 = vld [vmem:[#allocation6 + $0x110] sm:$0xff]
    %v451 = vld [vmem:[#allocation6 + $0x118] sm:$0xff]
    %v452 = vld [vmem:[#allocation6 + $0x120] sm:$0xff]
    %v453 = vld [vmem:[#allocation6 + $0x128] sm:$0xff]
    %v454 = vld [vmem:[#allocation6 + $0x130] sm:$0xff]
    %v455 = vld [vmem:[#allocation6 + $0x138] sm:$0xff]
    %v456 = vld [vmem:[#allocation6 + $0x140] sm:$0xff]
    %v457 = vld [vmem:[#allocation6 + $0x148] sm:$0xff]
    %v458 = vld [vmem:[#allocation6 + $0x150] sm:$0xff]
    %v459 = vld [vmem:[#allocation6 + $0x158] sm:$0xff]
    %v460 = vld [vmem:[#allocation6 + $0x160] sm:$0xff]
    %v461 = vld [vmem:[#allocation6 + $0x168] sm:$0xff]
    %v462 = vld [vmem:[#allocation6 + $0x170] sm:$0xff]
    %v463 = vld [vmem:[#allocation6 + $0x178] sm:$0xff]
    %v464 = vld [vmem:[#allocation6 + $0x180] sm:$0xff]
    %v465 = vld [vmem:[#allocation6 + $0x188] sm:$0xff]
    %v466 = vld [vmem:[#allocation6 + $0x190] sm:$0xff]
    %v467 = vld [vmem:[#allocation6 + $0x198] sm:$0xff]
    %v468 = vld [vmem:[#allocation6 + $0x1a0] sm:$0xff]
    %v469 = vld [vmem:[#allocation6 + $0x1a8] sm:$0xff]
    %v470 = vld [vmem:[#allocation6 + $0x1b0] sm:$0xff]
    %v471 = vld [vmem:[#allocation6 + $0x1b8] sm:$0xff]
    %v472 = vld [vmem:[#allocation6 + $0x1c0] sm:$0xff]
    %v473 = vld [vmem:[#allocation6 + $0x1c8] sm:$0xff]
    %v474 = vld [vmem:[#allocation6 + $0x1d0] sm:$0xff]
    %v475 = vld [vmem:[#allocation6 + $0x1d8] sm:$0xff]
    %v476 = vld [vmem:[#allocation6 + $0x1e0] sm:$0xff]
    %v477 = vld [vmem:[#allocation6 + $0x1e8] sm:$0xff]
    %v478 = vld [vmem:[#allocation6 + $0x1f0] sm:$0xff]
    %v479 = vld [vmem:[#allocation6 + $0x1f8] sm:$0xff]
    %v480 = vld [vmem:[#allocation2] sm:$0xff]
    %v481 = vld [vmem:[#allocation2 + $0x8] sm:$0xff]
    %v482 = vld [vmem:[#allocation2 + $0x10] sm:$0xff]
    %v483 = vld [vmem:[#allocation2 + $0x18] sm:$0xff]
    %484 = vmatprep.subr.mxu0 %v417
    %485 = vmatpush1.msra.mxu0 %v416
    %486 = vmatprep.subr.mxu0 %v421
    %487 = vmatpush1.msra.mxu0 %v420
    %488 = vmatprep.subr.mxu0 %v425
    %489 = vmatpush1.msra.mxu0 %v424
    %490 = vmatprep.subr.mxu0 %v429
    %491 = vmatpush1.msra.mxu0 %v428
    %492 = vmatprep.subr.mxu0 %v433
    %493 = vmatpush1.msra.mxu0 %v432
    %494 = vmatprep.subr.mxu0 %v437
    %495 = vmatpush1.msra.mxu0 %v436
    %496 = vmatprep.subr.mxu0 %v441
    %497 = vmatpush1.msra.mxu0 %v440
    %498 = vmatprep.subr.mxu0 %v445
    %499 = vmatpush1.msra.mxu0 %v444
    %500 = vmatprep.subr.mxu0 %v449
    %501 = vmatpush1.msra.mxu0 %v448
    %502 = vmatprep.subr.mxu0 %v453
    %503 = vmatpush1.msra.mxu0 %v452
    %504 = vmatprep.subr.mxu0 %v457
    %505 = vmatpush1.msra.mxu0 %v456
    %506 = vmatprep.subr.mxu0 %v461
    %507 = vmatpush1.msra.mxu0 %v460
    %508 = vmatprep.subr.mxu0 %v465
    %509 = vmatpush1.msra.mxu0 %v464
    %510 = vmatprep.subr.mxu0 %v469
    %511 = vmatpush1.msra.mxu0 %v468
    %512 = vmatprep.subr.mxu0 %v473
    %513 = vmatpush1.msra.mxu0 %v472
    %514 = vmatprep.subr.mxu0 %v477
    %515 = vmatpush1.msra.mxu0 %v476
    %516 = vmatprep.subr.mxu0 0.0
    %517 = vmatpush1.msra.mxu0 0.0
    %518 = vmatprep.subr.mxu0 0.0
    %519 = vmatpush1.msra.mxu0 0.0
    %520 = vmatprep.subr.mxu0 0.0
    %521 = vmatpush1.msra.mxu0 0.0
    %522 = vmatprep.subr.mxu0 0.0
    %523 = vmatpush1.msra.mxu0 0.0
    %524 = vmatprep.subr.mxu0 0.0
    %525 = vmatpush1.msra.mxu0 0.0
    %526 = vmatprep.subr.mxu0 0.0
    %527 = vmatpush1.msra.mxu0 0.0
    %528 = vmatprep.subr.mxu0 0.0
    %529 = vmatpush1.msra.mxu0 0.0
    %530 = vmatprep.subr.mxu0 0.0
    %531 = vmatpush1.msra.mxu0 0.0
    %532 = vmatprep.subr.mxu0 0.0
    %533 = vmatpush1.msra.mxu0 0.0
    %534 = vmatprep.subr.mxu0 0.0
    %535 = vmatpush1.msra.mxu0 0.0
    %536 = vmatprep.subr.mxu0 0.0
    %537 = vmatpush1.msra.mxu0 0.0
    %538 = vmatprep.subr.mxu0 0.0
    %539 = vmatpush1.msra.mxu0 0.0
    %540 = vmatprep.subr.mxu0 0.0
    %541 = vmatpush1.msra.mxu0 0.0
    %542 = vmatprep.subr.mxu0 0.0
    %543 = vmatpush1.msra.mxu0 0.0
    %544 = vmatprep.subr.mxu0 0.0
    %545 = vmatpush1.msra.mxu0 0.0
    %546 = vmatprep.subr.mxu0 0.0
    %547 = vmatpush1.msra.mxu0 0.0
    %548 = vmatprep.mubr.f32.mxu0 0.0
    %549 = vmatmul.mubr.f32.gmra.mrb[0].mxu0 0.0
    %v550 = vpop.f32.mrb[0].mxu0
    %v551 = vadd.f32 0.0, %v550
    %v552 = vpop.f32.mrb[0].mxu0
    %v553 = vadd.f32 0.0, %v552
    %554 = vdwg.mxu0
    %555 = vmatprep.subr.mxu0 %v419
    %556 = vmatpush1.msra.mxu0 %v418
    %557 = vmatprep.subr.mxu0 %v423
    %558 = vmatpush1.msra.mxu0 %v422
    %559 = vmatprep.subr.mxu0 %v427
    %560 = vmatpush1.msra.mxu0 %v426
    %561 = vmatprep.subr.mxu0 %v431
    %562 = vmatpush1.msra.mxu0 %v430
    %563 = vmatprep.subr.mxu0 %v435
    %564 = vmatpush1.msra.mxu0 %v434
    %565 = vmatprep.subr.mxu0 %v439
    %566 = vmatpush1.msra.mxu0 %v438
    %567 = vmatprep.subr.mxu0 %v443
    %568 = vmatpush1.msra.mxu0 %v442
    %569 = vmatprep.subr.mxu0 %v447
    %570 = vmatpush1.msra.mxu0 %v446
    %571 = vmatprep.subr.mxu0 %v451
    %572 = vmatpush1.msra.mxu0 %v450
    %573 = vmatprep.subr.mxu0 %v455
    %574 = vmatpush1.msra.mxu0 %v454
    %575 = vmatprep.subr.mxu0 %v459
    %576 = vmatpush1.msra.mxu0 %v458
    %577 = vmatprep.subr.mxu0 %v463
    %578 = vmatpush1.msra.mxu0 %v462
    %579 = vmatprep.subr.mxu0 %v467
    %580 = vmatpush1.msra.mxu0 %v466
    %581 = vmatprep.subr.mxu0 %v471
    %582 = vmatpush1.msra.mxu0 %v470
    %583 = vmatprep.subr.mxu0 %v475
    %584 = vmatpush1.msra.mxu0 %v474
    %585 = vmatprep.subr.mxu0 %v479
    %586 = vmatpush1.msra.mxu0 %v478
    %587 = vmatprep.subr.mxu0 0.0
    %588 = vmatpush1.msra.mxu0 0.0
    %589 = vmatprep.subr.mxu0 0.0
    %590 = vmatpush1.msra.mxu0 0.0
    %591 = vmatprep.subr.mxu0 0.0
    %592 = vmatpush1.msra.mxu0 0.0
    %593 = vmatprep.subr.mxu0 0.0
    %594 = vmatpush1.msra.mxu0 0.0
    %595 = vmatprep.subr.mxu0 0.0
    %596 = vmatpush1.msra.mxu0 0.0
    %597 = vmatprep.subr.mxu0 0.0
    %598 = vmatpush1.msra.mxu0 0.0
    %599 = vmatprep.subr.mxu0 0.0
    %600 = vmatpush1.msra.mxu0 0.0
    %601 = vmatprep.subr.mxu0 0.0
    %602 = vmatpush1.msra.mxu0 0.0
    %603 = vmatprep.subr.mxu0 0.0
    %604 = vmatpush1.msra.mxu0 0.0
    %605 = vmatprep.subr.mxu0 0.0
    %606 = vmatpush1.msra.mxu0 0.0
    %607 = vmatprep.subr.mxu0 0.0
    %608 = vmatpush1.msra.mxu0 0.0
    %609 = vmatprep.subr.mxu0 0.0
    %610 = vmatpush1.msra.mxu0 0.0
    %611 = vmatprep.subr.mxu0 0.0
    %612 = vmatpush1.msra.mxu0 0.0
    %613 = vmatprep.subr.mxu0 0.0
    %614 = vmatpush1.msra.mxu0 0.0
    %615 = vmatprep.subr.mxu0 0.0
    %616 = vmatpush1.msra.mxu0 0.0
    %617 = vmatprep.subr.mxu0 0.0
    %618 = vmatpush1.msra.mxu0 0.0
    %619 = vmatprep.mubr.f32.mxu0 0.0
    %620 = vmatmul.mubr.f32.gmra.mrb[0].mxu0 0.0
    %v621 = vpop.f32.mrb[0].mxu0
    %v622 = vadd.f32 0.0, %v621
    %v623 = vpop.f32.mrb[0].mxu0
    %v624 = vadd.f32 0.0, %v623
    %625 = vdwg.mxu0
    %v626 = vadd.f32 %v480, %v551
    %v627 = vadd.f32 %v481, %v553
    %v628 = vadd.f32 %v482, %v622
    %v629 = vadd.f32 %v483, %v624
    %v630 = vxor.u32 %v626, 2147483648
    %v631 = vmul.f32 %v630, 1.442695
    %v632 = vpow.pop %v631
    %v633 = vadd.f32 %v632, 1.0
    %v634 = vrcp.pop %v633
    %v635 = vmul.f32 1.0, %v634
    %v636 = vxor.u32 %v627, 2147483648
    %v637 = vmul.f32 %v636, 1.442695
    %v638 = vpow.pop %v637
    %v639 = vadd.f32 %v638, 1.0
    %v640 = vrcp.pop %v639
    %v641 = vmul.f32 1.0, %v640
    %v642 = vtanh.pop %v628
    %v643 = vxor.u32 %v629, 2147483648
    %v644 = vmul.f32 %v643, 1.442695
    %v645 = vpow.pop %v644
    %v646 = vadd.f32 %v645, 1.0
    %v647 = vrcp.pop %v646
    %v648 = vmul.f32 1.0, %v647
    %v649 = vmul.f32 %v641, 0.0
    %v650 = vmul.f32 %v635, %v642
    %v651 = vadd.f32 %v649, %v650
    %v652 = vtanh.pop %v651
    %v653 = vmul.f32 %v648, %v652
    %654 = vst [vmem:[#allocation3] sm:$0xff] %v653
    %v655 = vld [vmem:[#allocation2 + $0x20] sm:$0xff]
    %v656 = vld [vmem:[#allocation2 + $0x28] sm:$0xff]
    %v657 = vld [vmem:[#allocation2 + $0x30] sm:$0xff]
    %v658 = vld [vmem:[#allocation2 + $0x38] sm:$0xff]
    %659 = vmatprep.subr.mxu0 %v417
    %660 = vmatpush1.msra.mxu0 %v416
    %661 = vmatprep.subr.mxu0 %v421
    %662 = vmatpush1.msra.mxu0 %v420
    %663 = vmatprep.subr.mxu0 %v425
    %664 = vmatpush1.msra.mxu0 %v424
    %665 = vmatprep.subr.mxu0 %v429
    %666 = vmatpush1.msra.mxu0 %v428
    %667 = vmatprep.subr.mxu0 %v433
    %668 = vmatpush1.msra.mxu0 %v432
    %669 = vmatprep.subr.mxu0 %v437
    %670 = vmatpush1.msra.mxu0 %v436
    %671 = vmatprep.subr.mxu0 %v441
    %672 = vmatpush1.msra.mxu0 %v440
    %673 = vmatprep.subr.mxu0 %v445
    %674 = vmatpush1.msra.mxu0 %v444
    %675 = vmatprep.subr.mxu0 %v449
    %676 = vmatpush1.msra.mxu0 %v448
    %677 = vmatprep.subr.mxu0 %v453
    %678 = vmatpush1.msra.mxu0 %v452
    %679 = vmatprep.subr.mxu0 %v457
    %680 = vmatpush1.msra.mxu0 %v456
    %681 = vmatprep.subr.mxu0 %v461
    %682 = vmatpush1.msra.mxu0 %v460
    %683 = vmatprep.subr.mxu0 %v465
    %684 = vmatpush1.msra.mxu0 %v464
    %685 = vmatprep.subr.mxu0 %v469
    %686 = vmatpush1.msra.mxu0 %v468
    %687 = vmatprep.subr.mxu0 %v473
    %688 = vmatpush1.msra.mxu0 %v472
    %689 = vmatprep.subr.mxu0 %v477
    %690 = vmatpush1.msra.mxu0 %v476
    %691 = vmatprep.subr.mxu0 0.0
    %692 = vmatpush1.msra.mxu0 0.0
    %693 = vmatprep.subr.mxu0 0.0
    %694 = vmatpush1.msra.mxu0 0.0
    %695 = vmatprep.subr.mxu0 0.0
    %696 = vmatpush1.msra.mxu0 0.0
    %697 = vmatprep.subr.mxu0 0.0
    %698 = vmatpush1.msra.mxu0 0.0
    %699 = vmatprep.subr.mxu0 0.0
    %700 = vmatpush1.msra.mxu0 0.0
    %701 = vmatprep.subr.mxu0 0.0
    %702 = vmatpush1.msra.mxu0 0.0
    %703 = vmatprep.subr.mxu0 0.0
    %704 = vmatpush1.msra.mxu0 0.0
    %705 = vmatprep.subr.mxu0 0.0
    %706 = vmatpush1.msra.mxu0 0.0
    %707 = vmatprep.subr.mxu0 0.0
    %708 = vmatpush1.msra.mxu0 0.0
    %709 = vmatprep.subr.mxu0 0.0
    %710 = vmatpush1.msra.mxu0 0.0
    %711 = vmatprep.subr.mxu0 0.0
    %712 = vmatpush1.msra.mxu0 0.0
    %713 = vmatprep.subr.mxu0 0.0
    %714 = vmatpush1.msra.mxu0 0.0
    %715 = vmatprep.subr.mxu0 0.0
    %716 = vmatpush1.msra.mxu0 0.0
    %717 = vmatprep.subr.mxu0 0.0
    %718 = vmatpush1.msra.mxu0 0.0
    %719 = vmatprep.subr.mxu0 0.0
    %720 = vmatpush1.msra.mxu0 0.0
    %721 = vmatprep.subr.mxu0 0.0
    %722 = vmatpush1.msra.mxu0 0.0
    %723 = vmatprep.mubr.f32.mxu0 0.0
    %724 = vmatmul.mubr.f32.gmra.mrb[0].mxu0 %v653
    %v725 = vpop.f32.mrb[0].mxu0
    %v726 = vadd.f32 0.0, %v725
    %v727 = vpop.f32.mrb[0].mxu0
    %v728 = vadd.f32 0.0, %v727
    %729 = vdwg.mxu0
    %730 = vmatprep.subr.mxu0 %v419
    %731 = vmatpush1.msra.mxu0 %v418
    %732 = vmatprep.subr.mxu0 %v423
    %733 = vmatpush1.msra.mxu0 %v422
    %734 = vmatprep.subr.mxu0 %v427
    %735 = vmatpush1.msra.mxu0 %v426
    %736 = vmatprep.subr.mxu0 %v431
    %737 = vmatpush1.msra.mxu0 %v430
    %738 = vmatprep.subr.mxu0 %v435
    %739 = vmatpush1.msra.mxu0 %v434
    %740 = vmatprep.subr.mxu0 %v439
    %741 = vmatpush1.msra.mxu0 %v438
    %742 = vmatprep.subr.mxu0 %v443
    %743 = vmatpush1.msra.mxu0 %v442
    %744 = vmatprep.subr.mxu0 %v447
    %745 = vmatpush1.msra.mxu0 %v446
    %746 = vmatprep.subr.mxu0 %v451
    %747 = vmatpush1.msra.mxu0 %v450
    %748 = vmatprep.subr.mxu0 %v455
    %749 = vmatpush1.msra.mxu0 %v454
    %750 = vmatprep.subr.mxu0 %v459
    %751 = vmatpush1.msra.mxu0 %v458
    %752 = vmatprep.subr.mxu0 %v463
    %753 = vmatpush1.msra.mxu0 %v462
    %754 = vmatprep.subr.mxu0 %v467
    %755 = vmatpush1.msra.mxu0 %v466
    %756 = vmatprep.subr.mxu0 %v471
    %757 = vmatpush1.msra.mxu0 %v470
    %758 = vmatprep.subr.mxu0 %v475
    %759 = vmatpush1.msra.mxu0 %v474
    %760 = vmatprep.subr.mxu0 %v479
    %761 = vmatpush1.msra.mxu0 %v478
    %762 = vmatprep.subr.mxu0 0.0
    %763 = vmatpush1.msra.mxu0 0.0
    %764 = vmatprep.subr.mxu0 0.0
    %765 = vmatpush1.msra.mxu0 0.0
    %766 = vmatprep.subr.mxu0 0.0
    %767 = vmatpush1.msra.mxu0 0.0
    %768 = vmatprep.subr.mxu0 0.0
    %769 = vmatpush1.msra.mxu0 0.0
    %770 = vmatprep.subr.mxu0 0.0
    %771 = vmatpush1.msra.mxu0 0.0
    %772 = vmatprep.subr.mxu0 0.0
    %773 = vmatpush1.msra.mxu0 0.0
    %774 = vmatprep.subr.mxu0 0.0
    %775 = vmatpush1.msra.mxu0 0.0
    %776 = vmatprep.subr.mxu0 0.0
    %777 = vmatpush1.msra.mxu0 0.0
    %778 = vmatprep.subr.mxu0 0.0
    %779 = vmatpush1.msra.mxu0 0.0
    %780 = vmatprep.subr.mxu0 0.0
    %781 = vmatpush1.msra.mxu0 0.0
    %782 = vmatprep.subr.mxu0 0.0
    %783 = vmatpush1.msra.mxu0 0.0
    %784 = vmatprep.subr.mxu0 0.0
    %785 = vmatpush1.msra.mxu0 0.0
    %786 = vmatprep.subr.mxu0 0.0
    %787 = vmatpush1.msra.mxu0 0.0
    %788 = vmatprep.subr.mxu0 0.0
    %789 = vmatpush1.msra.mxu0 0.0
    %790 = vmatprep.subr.mxu0 0.0
    %791 = vmatpush1.msra.mxu0 0.0
    %792 = vmatprep.subr.mxu0 0.0
    %793 = vmatpush1.msra.mxu0 0.0
    %794 = vmatprep.mubr.f32.mxu0 0.0
    %795 = vmatmul.mubr.f32.gmra.mrb[0].mxu0 %v653
    %v796 = vpop.f32.mrb[0].mxu0
    %v797 = vadd.f32 0.0, %v796
    %v798 = vpop.f32.mrb[0].mxu0
    %v799 = vadd.f32 0.0, %v798
    %800 = vdwg.mxu0
    %v801 = vadd.f32 %v655, %v726
    %v802 = vadd.f32 %v656, %v728
    %v803 = vadd.f32 %v657, %v797
    %v804 = vadd.f32 %v658, %v799
    %v805 = vxor.u32 %v801, 2147483648
    %v806 = vmul.f32 %v805, 1.442695
    %v807 = vpow.pop %v806
    %v808 = vadd.f32 %v807, 1.0
    %v809 = vrcp.pop %v808
    %v810 = vmul.f32 1.0, %v809
    %v811 = vxor.u32 %v802, 2147483648
    %v812 = vmul.f32 %v811, 1.442695
    %v813 = vpow.pop %v812
    %v814 = vadd.f32 %v813, 1.0
    %v815 = vrcp.pop %v814
    %v816 = vmul.f32 1.0, %v815
    %v817 = vtanh.pop %v803
    %v818 = vxor.u32 %v804, 2147483648
    %v819 = vmul.f32 %v818, 1.442695
    %v820 = vpow.pop %v819
    %v821 = vadd.f32 %v820, 1.0
    %v822 = vrcp.pop %v821
    %v823 = vmul.f32 1.0, %v822
    %v824 = vmul.f32 %v816, %v651
    %v825 = vmul.f32 %v810, %v817
    %v826 = vadd.f32 %v824, %v825
    %v827 = vtanh.pop %v826
    %v828 = vmul.f32 %v823, %v827
    %829 = vst [vmem:[#allocation3 + $0x8] sm:$0xff] %v828
    %v830 = vld [vmem:[#allocation2 + $0x40] sm:$0xff]
    %v831 = vld [vmem:[#allocation2 + $0x48] sm:$0xff]
    %v832 = vld [vmem:[#allocation2 + $0x50] sm:$0xff]
    %v833 = vld [vmem:[#allocation2 + $0x58] sm:$0xff]
    %834 = vmatprep.subr.mxu0 %v417
    %835 = vmatpush1.msra.mxu0 %v416
    %836 = vmatprep.subr.mxu0 %v421
    %837 = vmatpush1.msra.mxu0 %v420
    %838 = vmatprep.subr.mxu0 %v425
    %839 = vmatpush1.msra.mxu0 %v424
    %840 = vmatprep.subr.mxu0 %v429
    %841 = vmatpush1.msra.mxu0 %v428
    %842 = vmatprep.subr.mxu0 %v433
    %843 = vmatpush1.msra.mxu0 %v432
    %844 = vmatprep.subr.mxu0 %v437
    %845 = vmatpush1.msra.mxu0 %v436
    %846 = vmatprep.subr.mxu0 %v441
    %847 = vmatpush1.msra.mxu0 %v440
    %848 = vmatprep.subr.mxu0 %v445
    %849 = vmatpush1.msra.mxu0 %v444
    %850 = vmatprep.subr.mxu0 %v449
    %851 = vmatpush1.msra.mxu0 %v448
    %852 = vmatprep.subr.mxu0 %v453
    %853 = vmatpush1.msra.mxu0 %v452
    %854 = vmatprep.subr.mxu0 %v457
    %855 = vmatpush1.msra.mxu0 %v456
    %856 = vmatprep.subr.mxu0 %v461
    %857 = vmatpush1.msra.mxu0 %v460
    %858 = vmatprep.subr.mxu0 %v465
    %859 = vmatpush1.msra.mxu0 %v464
    %860 = vmatprep.subr.mxu0 %v469
    %861 = vmatpush1.msra.mxu0 %v468
    %862 = vmatprep.subr.mxu0 %v473
    %863 = vmatpush1.msra.mxu0 %v472
    %864 = vmatprep.subr.mxu0 %v477
    %865 = vmatpush1.msra.mxu0 %v476
    %866 = vmatprep.subr.mxu0 0.0
    %867 = vmatpush1.msra.mxu0 0.0
    %868 = vmatprep.subr.mxu0 0.0
    %869 = vmatpush1.msra.mxu0 0.0
    %870 = vmatprep.subr.mxu0 0.0
    %871 = vmatpush1.msra.mxu0 0.0
    %872 = vmatprep.subr.mxu0 0.0
    %873 = vmatpush1.msra.mxu0 0.0
    %874 = vmatprep.subr.mxu0 0.0
    %875 = vmatpush1.msra.mxu0 0.0
    %876 = vmatprep.subr.mxu0 0.0
    %877 = vmatpush1.msra.mxu0 0.0
    %878 = vmatprep.subr.mxu0 0.0
    %879 = vmatpush1.msra.mxu0 0.0
    %880 = vmatprep.subr.mxu0 0.0
    %881 = vmatpush1.msra.mxu0 0.0
    %882 = vmatprep.subr.mxu0 0.0
    %883 = vmatpush1.msra.mxu0 0.0
    %884 = vmatprep.subr.mxu0 0.0
    %885 = vmatpush1.msra.mxu0 0.0
    %886 = vmatprep.subr.mxu0 0.0
    %887 = vmatpush1.msra.mxu0 0.0
    %888 = vmatprep.subr.mxu0 0.0
    %889 = vmatpush1.msra.mxu0 0.0
    %890 = vmatprep.subr.mxu0 0.0
    %891 = vmatpush1.msra.mxu0 0.0
    %892 = vmatprep.subr.mxu0 0.0
    %893 = vmatpush1.msra.mxu0 0.0
    %894 = vmatprep.subr.mxu0 0.0
    %895 = vmatpush1.msra.mxu0 0.0
    %896 = vmatprep.subr.mxu0 0.0
    %897 = vmatpush1.msra.mxu0 0.0
    %898 = vmatprep.mubr.f32.mxu0 0.0
    %899 = vmatmul.mubr.f32.gmra.mrb[0].mxu0 %v828
    %v900 = vpop.f32.mrb[0].mxu0
    %v901 = vadd.f32 0.0, %v900
    %v902 = vpop.f32.mrb[0].mxu0
    %v903 = vadd.f32 0.0, %v902
    %904 = vdwg.mxu0
    %905 = vmatprep.subr.mxu0 %v419
    %906 = vmatpush1.msra.mxu0 %v418
    %907 = vmatprep.subr.mxu0 %v423
    %908 = vmatpush1.msra.mxu0 %v422
    %909 = vmatprep.subr.mxu0 %v427
    %910 = vmatpush1.msra.mxu0 %v426
    %911 = vmatprep.subr.mxu0 %v431
    %912 = vmatpush1.msra.mxu0 %v430
    %913 = vmatprep.subr.mxu0 %v435
    %914 = vmatpush1.msra.mxu0 %v434
    %915 = vmatprep.subr.mxu0 %v439
    %916 = vmatpush1.msra.mxu0 %v438
    %917 = vmatprep.subr.mxu0 %v443
    %918 = vmatpush1.msra.mxu0 %v442
    %919 = vmatprep.subr.mxu0 %v447
    %920 = vmatpush1.msra.mxu0 %v446
    %921 = vmatprep.subr.mxu0 %v451
    %922 = vmatpush1.msra.mxu0 %v450
    %923 = vmatprep.subr.mxu0 %v455
    %924 = vmatpush1.msra.mxu0 %v454
    %925 = vmatprep.subr.mxu0 %v459
    %926 = vmatpush1.msra.mxu0 %v458
    %927 = vmatprep.subr.mxu0 %v463
    %928 = vmatpush1.msra.mxu0 %v462
    %929 = vmatprep.subr.mxu0 %v467
    %930 = vmatpush1.msra.mxu0 %v466
    %931 = vmatprep.subr.mxu0 %v471
    %932 = vmatpush1.msra.mxu0 %v470
    %933 = vmatprep.subr.mxu0 %v475
    %934 = vmatpush1.msra.mxu0 %v474
    %935 = vmatprep.subr.mxu0 %v479
    %936 = vmatpush1.msra.mxu0 %v478
    %937 = vmatprep.subr.mxu0 0.0
    %938 = vmatpush1.msra.mxu0 0.0
    %939 = vmatprep.subr.mxu0 0.0
    %940 = vmatpush1.msra.mxu0 0.0
    %941 = vmatprep.subr.mxu0 0.0
    %942 = vmatpush1.msra.mxu0 0.0
    %943 = vmatprep.subr.mxu0 0.0
    %944 = vmatpush1.msra.mxu0 0.0
    %945 = vmatprep.subr.mxu0 0.0
    %946 = vmatpush1.msra.mxu0 0.0
    %947 = vmatprep.subr.mxu0 0.0
    %948 = vmatpush1.msra.mxu0 0.0
    %949 = vmatprep.subr.mxu0 0.0
    %950 = vmatpush1.msra.mxu0 0.0
    %951 = vmatprep.subr.mxu0 0.0
    %952 = vmatpush1.msra.mxu0 0.0
    %953 = vmatprep.subr.mxu0 0.0
    %954 = vmatpush1.msra.mxu0 0.0
    %955 = vmatprep.subr.mxu0 0.0
    %956 = vmatpush1.msra.mxu0 0.0
    %957 = vmatprep.subr.mxu0 0.0
    %958 = vmatpush1.msra.mxu0 0.0
    %959 = vmatprep.subr.mxu0 0.0
    %960 = vmatpush1.msra.mxu0 0.0
    %961 = vmatprep.subr.mxu0 0.0
    %962 = vmatpush1.msra.mxu0 0.0
    %963 = vmatprep.subr.mxu0 0.0
    %964 = vmatpush1.msra.mxu0 0.0
    %965 = vmatprep.subr.mxu0 0.0
    %966 = vmatpush1.msra.mxu0 0.0
    %967 = vmatprep.subr.mxu0 0.0
    %968 = vmatpush1.msra.mxu0 0.0
    %969 = vmatprep.mubr.f32.mxu0 0.0
    %970 = vmatmul.mubr.f32.gmra.mrb[0].mxu0 %v828
    %v971 = vpop.f32.mrb[0].mxu0
    %v972 = vadd.f32 0.0, %v971
    %v973 = vpop.f32.mrb[0].mxu0
    %v974 = vadd.f32 0.0, %v973
    %975 = vdwg.mxu0
    %v976 = vadd.f32 %v830, %v901
    %v977 = vadd.f32 %v831, %v903
    %v978 = vadd.f32 %v832, %v972
    %v979 = vadd.f32 %v833, %v974
    %v980 = vxor.u32 %v976, 2147483648
    %v981 = vmul.f32 %v980, 1.442695
    %v982 = vpow.pop %v981
    %v983 = vadd.f32 %v982, 1.0
    %v984 = vrcp.pop %v983
    %v985 = vmul.f32 1.0, %v984
    %v986 = vxor.u32 %v977, 2147483648
    %v987 = vmul.f32 %v986, 1.442695
    %v988 = vpow.pop %v987
    %v989 = vadd.f32 %v988, 1.0
    %v990 = vrcp.pop %v989
    %v991 = vmul.f32 1.0, %v990
    %v992 = vtanh.pop %v978
    %v993 = vxor.u32 %v979, 2147483648
    %v994 = vmul.f32 %v993, 1.442695
    %v995 = vpow.pop %v994
    %v996 = vadd.f32 %v995, 1.0
    %v997 = vrcp.pop %v996
    %v998 = vmul.f32 1.0, %v997
    %v999 = vmul.f32 %v991, %v826
    %v1000 = vmul.f32 %v985, %v992
    %v1001 = vadd.f32 %v999, %v1000
    %v1002 = vtanh.pop %v1001
    %v1003 = vmul.f32 %v998, %v1002
    %1004 = vst [vmem:[#allocation3 + $0x10] sm:$0xff] %v1003
    %v1005 = vld [vmem:[#allocation2 + $0x60] sm:$0xff]
    %v1006 = vld [vmem:[#allocation2 + $0x68] sm:$0xff]
    %v1007 = vld [vmem:[#allocation2 + $0x70] sm:$0xff]
    %v1008 = vld [vmem:[#allocation2 + $0x78] sm:$0xff]
    %1009 = vmatprep.subr.mxu0 %v417
    %1010 = vmatpush1.msra.mxu0 %v416
    %1011 = vmatprep.subr.mxu0 %v421
    %1012 = vmatpush1.msra.mxu0 %v420
    %1013 = vmatprep.subr.mxu0 %v425
    %1014 = vmatpush1.msra.mxu0 %v424
    %1015 = vmatprep.subr.mxu0 %v429
    %1016 = vmatpush1.msra.mxu0 %v428
    %1017 = vmatprep.subr.mxu0 %v433
    %1018 = vmatpush1.msra.mxu0 %v432
    %1019 = vmatprep.subr.mxu0 %v437
    %1020 = vmatpush1.msra.mxu0 %v436
    %1021 = vmatprep.subr.mxu0 %v441
    %1022 = vmatpush1.msra.mxu0 %v440
    %1023 = vmatprep.subr.mxu0 %v445
    %1024 = vmatpush1.msra.mxu0 %v444
    %1025 = vmatprep.subr.mxu0 %v449
    %1026 = vmatpush1.msra.mxu0 %v448
    %1027 = vmatprep.subr.mxu0 %v453
    %1028 = vmatpush1.msra.mxu0 %v452
    %1029 = vmatprep.subr.mxu0 %v457
    %1030 = vmatpush1.msra.mxu0 %v456
    %1031 = vmatprep.subr.mxu0 %v461
    %1032 = vmatpush1.msra.mxu0 %v460
    %1033 = vmatprep.subr.mxu0 %v465
    %1034 = vmatpush1.msra.mxu0 %v464
    %1035 = vmatprep.subr.mxu0 %v469
    %1036 = vmatpush1.msra.mxu0 %v468
    %1037 = vmatprep.subr.mxu0 %v473
    %1038 = vmatpush1.msra.mxu0 %v472
    %1039 = vmatprep.subr.mxu0 %v477
    %1040 = vmatpush1.msra.mxu0 %v476
    %1041 = vmatprep.subr.mxu0 0.0
    %1042 = vmatpush1.msra.mxu0 0.0
    %1043 = vmatprep.subr.mxu0 0.0
    %1044 = vmatpush1.msra.mxu0 0.0
    %1045 = vmatprep.subr.mxu0 0.0
    %1046 = vmatpush1.msra.mxu0 0.0
    %1047 = vmatprep.subr.mxu0 0.0
    %1048 = vmatpush1.msra.mxu0 0.0
    %1049 = vmatprep.subr.mxu0 0.0
    %1050 = vmatpush1.msra.mxu0 0.0
    %1051 = vmatprep.subr.mxu0 0.0
    %1052 = vmatpush1.msra.mxu0 0.0
    %1053 = vmatprep.subr.mxu0 0.0
    %1054 = vmatpush1.msra.mxu0 0.0
    %1055 = vmatprep.subr.mxu0 0.0
    %1056 = vmatpush1.msra.mxu0 0.0
    %1057 = vmatprep.subr.mxu0 0.0
    %1058 = vmatpush1.msra.mxu0 0.0
    %1059 = vmatprep.subr.mxu0 0.0
    %1060 = vmatpush1.msra.mxu0 0.0
    %1061 = vmatprep.subr.mxu0 0.0
    %1062 = vmatpush1.msra.mxu0 0.0
    %1063 = vmatprep.subr.mxu0 0.0
    %1064 = vmatpush1.msra.mxu0 0.0
    %1065 = vmatprep.subr.mxu0 0.0
    %1066 = vmatpush1.msra.mxu0 0.0
    %1067 = vmatprep.subr.mxu0 0.0
    %1068 = vmatpush1.msra.mxu0 0.0
    %1069 = vmatprep.subr.mxu0 0.0
    %1070 = vmatpush1.msra.mxu0 0.0
    %1071 = vmatprep.subr.mxu0 0.0
    %1072 = vmatpush1.msra.mxu0 0.0
    %1073 = vmatprep.mubr.f32.mxu0 0.0
    %1074 = vmatmul.mubr.f32.gmra.mrb[0].mxu0 %v1003
    %v1075 = vpop.f32.mrb[0].mxu0
    %v1076 = vadd.f32 0.0, %v1075
    %v1077 = vpop.f32.mrb[0].mxu0
    %v1078 = vadd.f32 0.0, %v1077
    %1079 = vdwg.mxu0
    %1080 = vmatprep.subr.mxu0 %v419
    %1081 = vmatpush1.msra.mxu0 %v418
    %1082 = vmatprep.subr.mxu0 %v423
    %1083 = vmatpush1.msra.mxu0 %v422
    %1084 = vmatprep.subr.mxu0 %v427
    %1085 = vmatpush1.msra.mxu0 %v426
    %1086 = vmatprep.subr.mxu0 %v431
    %1087 = vmatpush1.msra.mxu0 %v430
    %1088 = vmatprep.subr.mxu0 %v435
    %1089 = vmatpush1.msra.mxu0 %v434
    %1090 = vmatprep.subr.mxu0 %v439
    %1091 = vmatpush1.msra.mxu0 %v438
    %1092 = vmatprep.subr.mxu0 %v443
    %1093 = vmatpush1.msra.mxu0 %v442
    %1094 = vmatprep.subr.mxu0 %v447
    %1095 = vmatpush1.msra.mxu0 %v446
    %1096 = vmatprep.subr.mxu0 %v451
    %1097 = vmatpush1.msra.mxu0 %v450
    %1098 = vmatprep.subr.mxu0 %v455
    %1099 = vmatpush1.msra.mxu0 %v454
    %1100 = vmatprep.subr.mxu0 %v459
    %1101 = vmatpush1.msra.mxu0 %v458
    %1102 = vmatprep.subr.mxu0 %v463
    %1103 = vmatpush1.msra.mxu0 %v462
    %1104 = vmatprep.subr.mxu0 %v467
    %1105 = vmatpush1.msra.mxu0 %v466
    %1106 = vmatprep.subr.mxu0 %v471
    %1107 = vmatpush1.msra.mxu0 %v470
    %1108 = vmatprep.subr.mxu0 %v475
    %1109 = vmatpush1.msra.mxu0 %v474
    %1110 = vmatprep.subr.mxu0 %v479
    %1111 = vmatpush1.msra.mxu0 %v478
    %1112 = vmatprep.subr.mxu0 0.0
    %1113 = vmatpush1.msra.mxu0 0.0
    %1114 = vmatprep.subr.mxu0 0.0
    %1115 = vmatpush1.msra.mxu0 0.0
    %1116 = vmatprep.subr.mxu0 0.0
    %1117 = vmatpush1.msra.mxu0 0.0
    %1118 = vmatprep.subr.mxu0 0.0
    %1119 = vmatpush1.msra.mxu0 0.0
    %1120 = vmatprep.subr.mxu0 0.0
    %1121 = vmatpush1.msra.mxu0 0.0
    %1122 = vmatprep.subr.mxu0 0.0
    %1123 = vmatpush1.msra.mxu0 0.0
    %1124 = vmatprep.subr.mxu0 0.0
    %1125 = vmatpush1.msra.mxu0 0.0
    %1126 = vmatprep.subr.mxu0 0.0
    %1127 = vmatpush1.msra.mxu0 0.0
    %1128 = vmatprep.subr.mxu0 0.0
    %1129 = vmatpush1.msra.mxu0 0.0
    %1130 = vmatprep.subr.mxu0 0.0
    %1131 = vmatpush1.msra.mxu0 0.0
    %1132 = vmatprep.subr.mxu0 0.0
    %1133 = vmatpush1.msra.mxu0 0.0
    %1134 = vmatprep.subr.mxu0 0.0
    %1135 = vmatpush1.msra.mxu0 0.0
    %1136 = vmatprep.subr.mxu0 0.0
    %1137 = vmatpush1.msra.mxu0 0.0
    %1138 = vmatprep.subr.mxu0 0.0
    %1139 = vmatpush1.msra.mxu0 0.0
    %1140 = vmatprep.subr.mxu0 0.0
    %1141 = vmatpush1.msra.mxu0 0.0
    %1142 = vmatprep.subr.mxu0 0.0
    %1143 = vmatpush1.msra.mxu0 0.0
    %1144 = vmatprep.mubr.f32.mxu0 0.0
    %1145 = vmatmul.mubr.f32.gmra.mrb[0].mxu0 %v1003
    %v1146 = vpop.f32.mrb[0].mxu0
    %v1147 = vadd.f32 0.0, %v1146
    %v1148 = vpop.f32.mrb[0].mxu0
    %v1149 = vadd.f32 0.0, %v1148
    %1150 = vdwg.mxu0
    %v1151 = vadd.f32 %v1005, %v1076
    %v1152 = vadd.f32 %v1006, %v1078
    %v1153 = vadd.f32 %v1007, %v1147
    %v1154 = vadd.f32 %v1008, %v1149
    %v1155 = vxor.u32 %v1151, 2147483648
    %v1156 = vmul.f32 %v1155, 1.442695
    %v1157 = vpow.pop %v1156
    %v1158 = vadd.f32 %v1157, 1.0
    %v1159 = vrcp.pop %v1158
    %v1160 = vmul.f32 1.0, %v1159
    %v1161 = vxor.u32 %v1152, 2147483648
    %v1162 = vmul.f32 %v1161, 1.442695
    %v1163 = vpow.pop %v1162
    %v1164 = vadd.f32 %v1163, 1.0
    %v1165 = vrcp.pop %v1164
    %v1166 = vmul.f32 1.0, %v1165
    %v1167 = vtanh.pop %v1153
    %v1168 = vxor.u32 %v1154, 2147483648
    %v1169 = vmul.f32 %v1168, 1.442695
    %v1170 = vpow.pop %v1169
    %v1171 = vadd.f32 %v1170, 1.0
    %v1172 = vrcp.pop %v1171
    %v1173 = vmul.f32 1.0, %v1172
    %v1174 = vmul.f32 %v1166, %v1001
    %v1175 = vmul.f32 %v1160, %v1167
    %v1176 = vadd.f32 %v1174, %v1175
    %v1177 = vtanh.pop %v1176
    %v1178 = vmul.f32 %v1173, %v1177
    %1179 = vst [vmem:[#allocation3 + $0x18] sm:$0xff] %v1178
    %v1180 = vld [vmem:[#allocation2 + $0x80] sm:$0xff]
    %v1181 = vld [vmem:[#allocation2 + $0x88] sm:$0xff]
    %v1182 = vld [vmem:[#allocation2 + $0x90] sm:$0xff]
    %v1183 = vld [vmem:[#allocation2 + $0x98] sm:$0xff]
    %1184 = vmatprep.subr.mxu0 %v417
    %1185 = vmatpush1.msra.mxu0 %v416
    %1186 = vmatprep.subr.mxu0 %v421
    %1187 = vmatpush1.msra.mxu0 %v420
    %1188 = vmatprep.subr.mxu0 %v425
    %1189 = vmatpush1.msra.mxu0 %v424
    %1190 = vmatprep.subr.mxu0 %v429
    %1191 = vmatpush1.msra.mxu0 %v428
    %1192 = vmatprep.subr.mxu0 %v433
    %1193 = vmatpush1.msra.mxu0 %v432
    %1194 = vmatprep.subr.mxu0 %v437
    %1195 = vmatpush1.msra.mxu0 %v436
    %1196 = vmatprep.subr.mxu0 %v441
    %1197 = vmatpush1.msra.mxu0 %v440
    %1198 = vmatprep.subr.mxu0 %v445
    %1199 = vmatpush1.msra.mxu0 %v444
    %1200 = vmatprep.subr.mxu0 %v449
    %1201 = vmatpush1.msra.mxu0 %v448
    %1202 = vmatprep.subr.mxu0 %v453
    %1203 = vmatpush1.msra.mxu0 %v452
    %1204 = vmatprep.subr.mxu0 %v457
    %1205 = vmatpush1.msra.mxu0 %v456
    %1206 = vmatprep.subr.mxu0 %v461
    %1207 = vmatpush1.msra.mxu0 %v460
    %1208 = vmatprep.subr.mxu0 %v465
    %1209 = vmatpush1.msra.mxu0 %v464
    %1210 = vmatprep.subr.mxu0 %v469
    %1211 = vmatpush1.msra.mxu0 %v468
    %1212 = vmatprep.subr.mxu0 %v473
    %1213 = vmatpush1.msra.mxu0 %v472
    %1214 = vmatprep.subr.mxu0 %v477
    %1215 = vmatpush1.msra.mxu0 %v476
    %1216 = vmatprep.subr.mxu0 0.0
    %1217 = vmatpush1.msra.mxu0 0.0
    %1218 = vmatprep.subr.mxu0 0.0
    %1219 = vmatpush1.msra.mxu0 0.0
    %1220 = vmatprep.subr.mxu0 0.0
    %1221 = vmatpush1.msra.mxu0 0.0
    %1222 = vmatprep.subr.mxu0 0.0
    %1223 = vmatpush1.msra.mxu0 0.0
    %1224 = vmatprep.subr.mxu0 0.0
    %1225 = vmatpush1.msra.mxu0 0.0
    %1226 = vmatprep.subr.mxu0 0.0
    %1227 = vmatpush1.msra.mxu0 0.0
    %1228 = vmatprep.subr.mxu0 0.0
    %1229 = vmatpush1.msra.mxu0 0.0
    %1230 = vmatprep.subr.mxu0 0.0
    %1231 = vmatpush1.msra.mxu0 0.0
    %1232 = vmatprep.subr.mxu0 0.0
    %1233 = vmatpush1.msra.mxu0 0.0
    %1234 = vmatprep.subr.mxu0 0.0
    %1235 = vmatpush1.msra.mxu0 0.0
    %1236 = vmatprep.subr.mxu0 0.0
    %1237 = vmatpush1.msra.mxu0 0.0
    %1238 = vmatprep.subr.mxu0 0.0
    %1239 = vmatpush1.msra.mxu0 0.0
    %1240 = vmatprep.subr.mxu0 0.0
    %1241 = vmatpush1.msra.mxu0 0.0
    %1242 = vmatprep.subr.mxu0 0.0
    %1243 = vmatpush1.msra.mxu0 0.0
    %1244 = vmatprep.subr.mxu0 0.0
    %1245 = vmatpush1.msra.mxu0 0.0
    %1246 = vmatprep.subr.mxu0 0.0
    %1247 = vmatpush1.msra.mxu0 0.0
    %1248 = vmatprep.mubr.f32.mxu0 0.0
    %1249 = vmatmul.mubr.f32.gmra.mrb[0].mxu0 %v1178
    %v1250 = vpop.f32.mrb[0].mxu0
    %v1251 = vadd.f32 0.0, %v1250
    %v1252 = vpop.f32.mrb[0].mxu0
    %v1253 = vadd.f32 0.0, %v1252
    %1254 = vdwg.mxu0
    %1255 = vmatprep.subr.mxu0 %v419
    %1256 = vmatpush1.msra.mxu0 %v418
    %1257 = vmatprep.subr.mxu0 %v423
    %1258 = vmatpush1.msra.mxu0 %v422
    %1259 = vmatprep.subr.mxu0 %v427
    %1260 = vmatpush1.msra.mxu0 %v426
    %1261 = vmatprep.subr.mxu0 %v431
    %1262 = vmatpush1.msra.mxu0 %v430
    %1263 = vmatprep.subr.mxu0 %v435
    %1264 = vmatpush1.msra.mxu0 %v434
    %1265 = vmatprep.subr.mxu0 %v439
    %1266 = vmatpush1.msra.mxu0 %v438
    %1267 = vmatprep.subr.mxu0 %v443
    %1268 = vmatpush1.msra.mxu0 %v442
    %1269 = vmatprep.subr.mxu0 %v447
    %1270 = vmatpush1.msra.mxu0 %v446
    %1271 = vmatprep.subr.mxu0 %v451
    %1272 = vmatpush1.msra.mxu0 %v450
    %1273 = vmatprep.subr.mxu0 %v455
    %1274 = vmatpush1.msra.mxu0 %v454
    %1275 = vmatprep.subr.mxu0 %v459
    %1276 = vmatpush1.msra.mxu0 %v458
    %1277 = vmatprep.subr.mxu0 %v463
    %1278 = vmatpush1.msra.mxu0 %v462
    %1279 = vmatprep.subr.mxu0 %v467
    %1280 = vmatpush1.msra.mxu0 %v466
    %1281 = vmatprep.subr.mxu0 %v471
    %1282 = vmatpush1.msra.mxu0 %v470
    %1283 = vmatprep.subr.mxu0 %v475
    %1284 = vmatpush1.msra.mxu0 %v474
    %1285 = vmatprep.subr.mxu0 %v479
    %1286 = vmatpush1.msra.mxu0 %v478
    %1287 = vmatprep.subr.mxu0 0.0
    %1288 = vmatpush1.msra.mxu0 0.0
    %1289 = vmatprep.subr.mxu0 0.0
    %1290 = vmatpush1.msra.mxu0 0.0
    %1291 = vmatprep.subr.mxu0 0.0
    %1292 = vmatpush1.msra.mxu0 0.0
    %1293 = vmatprep.subr.mxu0 0.0
    %1294 = vmatpush1.msra.mxu0 0.0
    %1295 = vmatprep.subr.mxu0 0.0
    %1296 = vmatpush1.msra.mxu0 0.0
    %1297 = vmatprep.subr.mxu0 0.0
    %1298 = vmatpush1.msra.mxu0 0.0
    %1299 = vmatprep.subr.mxu0 0.0
    %1300 = vmatpush1.msra.mxu0 0.0
    %1301 = vmatprep.subr.mxu0 0.0
    %1302 = vmatpush1.msra.mxu0 0.0
    %1303 = vmatprep.subr.mxu0 0.0
    %1304 = vmatpush1.msra.mxu0 0.0
    %1305 = vmatprep.subr.mxu0 0.0
    %1306 = vmatpush1.msra.mxu0 0.0
    %1307 = vmatprep.subr.mxu0 0.0
    %1308 = vmatpush1.msra.mxu0 0.0
    %1309 = vmatprep.subr.mxu0 0.0
    %1310 = vmatpush1.msra.mxu0 0.0
    %1311 = vmatprep.subr.mxu0 0.0
    %1312 = vmatpush1.msra.mxu0 0.0
    %1313 = vmatprep.subr.mxu0 0.0
    %1314 = vmatpush1.msra.mxu0 0.0
    %1315 = vmatprep.subr.mxu0 0.0
    %1316 = vmatpush1.msra.mxu0 0.0
    %1317 = vmatprep.subr.mxu0 0.0
    %1318 = vmatpush1.msra.mxu0 0.0
    %1319 = vmatprep.mubr.f32.mxu0 0.0
    %1320 = vmatmul.mubr.f32.gmra.mrb[0].mxu0 %v1178
    %v1321 = vpop.f32.mrb[0].mxu0
    %v1322 = vadd.f32 0.0, %v1321
    %v1323 = vpop.f32.mrb[0].mxu0
    %v1324 = vadd.f32 0.0, %v1323
    %1325 = vdwg.mxu0
    %v1326 = vadd.f32 %v1180, %v1251
    %v1327 = vadd.f32 %v1181, %v1253
    %v1328 = vadd.f32 %v1182, %v1322
    %v1329 = vadd.f32 %v1183, %v1324
    %v1330 = vxor.u32 %v1326, 2147483648
    %v1331 = vmul.f32 %v1330, 1.442695
    %v1332 = vpow.pop %v1331
    %v1333 = vadd.f32 %v1332, 1.0
    %v1334 = vrcp.pop %v1333
    %v1335 = vmul.f32 1.0, %v1334
    %v1336 = vxor.u32 %v1327, 2147483648
    %v1337 = vmul.f32 %v1336, 1.442695
    %v1338 = vpow.pop %v1337
    %v1339 = vadd.f32 %v1338, 1.0
    %v1340 = vrcp.pop %v1339
    %v1341 = vmul.f32 1.0, %v1340
    %v1342 = vtanh.pop %v1328
    %v1343 = vxor.u32 %v1329, 2147483648
    %v1344 = vmul.f32 %v1343, 1.442695
    %v1345 = vpow.pop %v1344
    %v1346 = vadd.f32 %v1345, 1.0
    %v1347 = vrcp.pop %v1346
    %v1348 = vmul.f32 1.0, %v1347
    %v1349 = vmul.f32 %v1341, %v1176
    %v1350 = vmul.f32 %v1335, %v1342
    %v1351 = vadd.f32 %v1349, %v1350
    %v1352 = vtanh.pop %v1351
    %v1353 = vmul.f32 %v1348, %v1352
    %1354 = vst [vmem:[#allocation3 + $0x20] sm:$0xff] %v1353
    %v1355 = vld [vmem:[#allocation2 + $0xa0] sm:$0xff]
    %v1356 = vld [vmem:[#allocation2 + $0xa8] sm:$0xff]
    %v1357 = vld [vmem:[#allocation2 + $0xb0] sm:$0xff]
    %v1358 = vld [vmem:[#allocation2 + $0xb8] sm:$0xff]
    %1359 = vmatprep.subr.mxu0 %v417
    %1360 = vmatpush1.msra.mxu0 %v416
    %1361 = vmatprep.subr.mxu0 %v421
    %1362 = vmatpush1.msra.mxu0 %v420
    %1363 = vmatprep.subr.mxu0 %v425
    %1364 = vmatpush1.msra.mxu0 %v424
    %1365 = vmatprep.subr.mxu0 %v429
    %1366 = vmatpush1.msra.mxu0 %v428
    %1367 = vmatprep.subr.mxu0 %v433
    %1368 = vmatpush1.msra.mxu0 %v432
    %1369 = vmatprep.subr.mxu0 %v437
    %1370 = vmatpush1.msra.mxu0 %v436
    %1371 = vmatprep.subr.mxu0 %v441
    %1372 = vmatpush1.msra.mxu0 %v440
    %1373 = vmatprep.subr.mxu0 %v445
    %1374 = vmatpush1.msra.mxu0 %v444
    %1375 = vmatprep.subr.mxu0 %v449
    %1376 = vmatpush1.msra.mxu0 %v448
    %1377 = vmatprep.subr.mxu0 %v453
    %1378 = vmatpush1.msra.mxu0 %v452
    %1379 = vmatprep.subr.mxu0 %v457
    %1380 = vmatpush1.msra.mxu0 %v456
    %1381 = vmatprep.subr.mxu0 %v461
    %1382 = vmatpush1.msra.mxu0 %v460
    %1383 = vmatprep.subr.mxu0 %v465
    %1384 = vmatpush1.msra.mxu0 %v464
    %1385 = vmatprep.subr.mxu0 %v469
    %1386 = vmatpush1.msra.mxu0 %v468
    %1387 = vmatprep.subr.mxu0 %v473
    %1388 = vmatpush1.msra.mxu0 %v472
    %1389 = vmatprep.subr.mxu0 %v477
    %1390 = vmatpush1.msra.mxu0 %v476
    %1391 = vmatprep.subr.mxu0 0.0
    %1392 = vmatpush1.msra.mxu0 0.0
    %1393 = vmatprep.subr.mxu0 0.0
    %1394 = vmatpush1.msra.mxu0 0.0
    %1395 = vmatprep.subr.mxu0 0.0
    %1396 = vmatpush1.msra.mxu0 0.0
    %1397 = vmatprep.subr.mxu0 0.0
    %1398 = vmatpush1.msra.mxu0 0.0
    %1399 = vmatprep.subr.mxu0 0.0
    %1400 = vmatpush1.msra.mxu0 0.0
    %1401 = vmatprep.subr.mxu0 0.0
    %1402 = vmatpush1.msra.mxu0 0.0
    %1403 = vmatprep.subr.mxu0 0.0
    %1404 = vmatpush1.msra.mxu0 0.0
    %1405 = vmatprep.subr.mxu0 0.0
    %1406 = vmatpush1.msra.mxu0 0.0
    %1407 = vmatprep.subr.mxu0 0.0
    %1408 = vmatpush1.msra.mxu0 0.0
    %1409 = vmatprep.subr.mxu0 0.0
    %1410 = vmatpush1.msra.mxu0 0.0
    %1411 = vmatprep.subr.mxu0 0.0
    %1412 = vmatpush1.msra.mxu0 0.0
    %1413 = vmatprep.subr.mxu0 0.0
    %1414 = vmatpush1.msra.mxu0 0.0
    %1415 = vmatprep.subr.mxu0 0.0
    %1416 = vmatpush1.msra.mxu0 0.0
    %1417 = vmatprep.subr.mxu0 0.0
    %1418 = vmatpush1.msra.mxu0 0.0
    %1419 = vmatprep.subr.mxu0 0.0
    %1420 = vmatpush1.msra.mxu0 0.0
    %1421 = vmatprep.subr.mxu0 0.0
    %1422 = vmatpush1.msra.mxu0 0.0
    %1423 = vmatprep.mubr.f32.mxu0 0.0
    %1424 = vmatmul.mubr.f32.gmra.mrb[0].mxu0 %v1353
    %v1425 = vpop.f32.mrb[0].mxu0
    %v1426 = vadd.f32 0.0, %v1425
    %v1427 = vpop.f32.mrb[0].mxu0
    %v1428 = vadd.f32 0.0, %v1427
    %1429 = vdwg.mxu0
    %1430 = vmatprep.subr.mxu0 %v419
    %1431 = vmatpush1.msra.mxu0 %v418
    %1432 = vmatprep.subr.mxu0 %v423
    %1433 = vmatpush1.msra.mxu0 %v422
    %1434 = vmatprep.subr.mxu0 %v427
    %1435 = vmatpush1.msra.mxu0 %v426
    %1436 = vmatprep.subr.mxu0 %v431
    %1437 = vmatpush1.msra.mxu0 %v430
    %1438 = vmatprep.subr.mxu0 %v435
    %1439 = vmatpush1.msra.mxu0 %v434
    %1440 = vmatprep.subr.mxu0 %v439
    %1441 = vmatpush1.msra.mxu0 %v438
    %1442 = vmatprep.subr.mxu0 %v443
    %1443 = vmatpush1.msra.mxu0 %v442
    %1444 = vmatprep.subr.mxu0 %v447
    %1445 = vmatpush1.msra.mxu0 %v446
    %1446 = vmatprep.subr.mxu0 %v451
    %1447 = vmatpush1.msra.mxu0 %v450
    %1448 = vmatprep.subr.mxu0 %v455
    %1449 = vmatpush1.msra.mxu0 %v454
    %1450 = vmatprep.subr.mxu0 %v459
    %1451 = vmatpush1.msra.mxu0 %v458
    %1452 = vmatprep.subr.mxu0 %v463
    %1453 = vmatpush1.msra.mxu0 %v462
    %1454 = vmatprep.subr.mxu0 %v467
    %1455 = vmatpush1.msra.mxu0 %v466
    %1456 = vmatprep.subr.mxu0 %v471
    %1457 = vmatpush1.msra.mxu0 %v470
    %1458 = vmatprep.subr.mxu0 %v475
    %1459 = vmatpush1.msra.mxu0 %v474
    %1460 = vmatprep.subr.mxu0 %v479
    %1461 = vmatpush1.msra.mxu0 %v478
    %1462 = vmatprep.subr.mxu0 0.0
    %1463 = vmatpush1.msra.mxu0 0.0
    %1464 = vmatprep.subr.mxu0 0.0
    %1465 = vmatpush1.msra.mxu0 0.0
    %1466 = vmatprep.subr.mxu0 0.0
    %1467 = vmatpush1.msra.mxu0 0.0
    %1468 = vmatprep.subr.mxu0 0.0
    %1469 = vmatpush1.msra.mxu0 0.0
    %1470 = vmatprep.subr.mxu0 0.0
    %1471 = vmatpush1.msra.mxu0 0.0
    %1472 = vmatprep.subr.mxu0 0.0
    %1473 = vmatpush1.msra.mxu0 0.0
    %1474 = vmatprep.subr.mxu0 0.0
    %1475 = vmatpush1.msra.mxu0 0.0
    %1476 = vmatprep.subr.mxu0 0.0
    %1477 = vmatpush1.msra.mxu0 0.0
    %1478 = vmatprep.subr.mxu0 0.0
    %1479 = vmatpush1.msra.mxu0 0.0
    %1480 = vmatprep.subr.mxu0 0.0
    %1481 = vmatpush1.msra.mxu0 0.0
    %1482 = vmatprep.subr.mxu0 0.0
    %1483 = vmatpush1.msra.mxu0 0.0
    %1484 = vmatprep.subr.mxu0 0.0
    %1485 = vmatpush1.msra.mxu0 0.0
    %1486 = vmatprep.subr.mxu0 0.0
    %1487 = vmatpush1.msra.mxu0 0.0
    %1488 = vmatprep.subr.mxu0 0.0
    %1489 = vmatpush1.msra.mxu0 0.0
    %1490 = vmatprep.subr.mxu0 0.0
    %1491 = vmatpush1.msra.mxu0 0.0
    %1492 = vmatprep.subr.mxu0 0.0
    %1493 = vmatpush1.msra.mxu0 0.0
    %1494 = vmatprep.mubr.f32.mxu0 0.0
    %1495 = vmatmul.mubr.f32.gmra.mrb[0].mxu0 %v1353
    %v1496 = vpop.f32.mrb[0].mxu0
    %v1497 = vadd.f32 0.0, %v1496
    %v1498 = vpop.f32.mrb[0].mxu0
    %v1499 = vadd.f32 0.0, %v1498
    %1500 = vdwg.mxu0
    %v1501 = vadd.f32 %v1355, %v1426
    %v1502 = vadd.f32 %v1356, %v1428
    %v1503 = vadd.f32 %v1357, %v1497
    %v1504 = vadd.f32 %v1358, %v1499
    %v1505 = vxor.u32 %v1501, 2147483648
    %v1506 = vmul.f32 %v1505, 1.442695
    %v1507 = vpow.pop %v1506
    %v1508 = vadd.f32 %v1507, 1.0
    %v1509 = vrcp.pop %v1508
    %v1510 = vmul.f32 1.0, %v1509
    %v1511 = vxor.u32 %v1502, 2147483648
    %v1512 = vmul.f32 %v1511, 1.442695
    %v1513 = vpow.pop %v1512
    %v1514 = vadd.f32 %v1513, 1.0
    %v1515 = vrcp.pop %v1514
    %v1516 = vmul.f32 1.0, %v1515
    %v1517 = vtanh.pop %v1503
    %v1518 = vxor.u32 %v1504, 2147483648
    %v1519 = vmul.f32 %v1518, 1.442695
    %v1520 = vpow.pop %v1519
    %v1521 = vadd.f32 %v1520, 1.0
    %v1522 = vrcp.pop %v1521
    %v1523 = vmul.f32 1.0, %v1522
    %v1524 = vmul.f32 %v1516, %v1351
    %v1525 = vmul.f32 %v1510, %v1517
    %v1526 = vadd.f32 %v1524, %v1525
    %v1527 = vtanh.pop %v1526
    %v1528 = vmul.f32 %v1523, %v1527
    %1529 = vst [vmem:[#allocation3 + $0x28] sm:$0xff] %v1528
    %v1530 = vld [vmem:[#allocation2 + $0xc0] sm:$0xff]
    %v1531 = vld [vmem:[#allocation2 + $0xc8] sm:$0xff]
    %v1532 = vld [vmem:[#allocation2 + $0xd0] sm:$0xff]
    %v1533 = vld [vmem:[#allocation2 + $0xd8] sm:$0xff]
    %1534 = vmatprep.subr.mxu0 %v417
    %1535 = vmatpush1.msra.mxu0 %v416
    %1536 = vmatprep.subr.mxu0 %v421
    %1537 = vmatpush1.msra.mxu0 %v420
    %1538 = vmatprep.subr.mxu0 %v425
    %1539 = vmatpush1.msra.mxu0 %v424
    %1540 = vmatprep.subr.mxu0 %v429
    %1541 = vmatpush1.msra.mxu0 %v428
    %1542 = vmatprep.subr.mxu0 %v433
    %1543 = vmatpush1.msra.mxu0 %v432
    %1544 = vmatprep.subr.mxu0 %v437
    %1545 = vmatpush1.msra.mxu0 %v436
    %1546 = vmatprep.subr.mxu0 %v441
    %1547 = vmatpush1.msra.mxu0 %v440
    %1548 = vmatprep.subr.mxu0 %v445
    %1549 = vmatpush1.msra.mxu0 %v444
    %1550 = vmatprep.subr.mxu0 %v449
    %1551 = vmatpush1.msra.mxu0 %v448
    %1552 = vmatprep.subr.mxu0 %v453
    %1553 = vmatpush1.msra.mxu0 %v452
    %1554 = vmatprep.subr.mxu0 %v457
    %1555 = vmatpush1.msra.mxu0 %v456
    %1556 = vmatprep.subr.mxu0 %v461
    %1557 = vmatpush1.msra.mxu0 %v460
    %1558 = vmatprep.subr.mxu0 %v465
    %1559 = vmatpush1.msra.mxu0 %v464
    %1560 = vmatprep.subr.mxu0 %v469
    %1561 = vmatpush1.msra.mxu0 %v468
    %1562 = vmatprep.subr.mxu0 %v473
    %1563 = vmatpush1.msra.mxu0 %v472
    %1564 = vmatprep.subr.mxu0 %v477
    %1565 = vmatpush1.msra.mxu0 %v476
    %1566 = vmatprep.subr.mxu0 0.0
    %1567 = vmatpush1.msra.mxu0 0.0
    %1568 = vmatprep.subr.mxu0 0.0
    %1569 = vmatpush1.msra.mxu0 0.0
    %1570 = vmatprep.subr.mxu0 0.0
    %1571 = vmatpush1.msra.mxu0 0.0
    %1572 = vmatprep.subr.mxu0 0.0
    %1573 = vmatpush1.msra.mxu0 0.0
    %1574 = vmatprep.subr.mxu0 0.0
    %1575 = vmatpush1.msra.mxu0 0.0
    %1576 = vmatprep.subr.mxu0 0.0
    %1577 = vmatpush1.msra.mxu0 0.0
    %1578 = vmatprep.subr.mxu0 0.0
    %1579 = vmatpush1.msra.mxu0 0.0
    %1580 = vmatprep.subr.mxu0 0.0
    %1581 = vmatpush1.msra.mxu0 0.0
    %1582 = vmatprep.subr.mxu0 0.0
    %1583 = vmatpush1.msra.mxu0 0.0
    %1584 = vmatprep.subr.mxu0 0.0
    %1585 = vmatpush1.msra.mxu0 0.0
    %1586 = vmatprep.subr.mxu0 0.0
    %1587 = vmatpush1.msra.mxu0 0.0
    %1588 = vmatprep.subr.mxu0 0.0
    %1589 = vmatpush1.msra.mxu0 0.0
    %1590 = vmatprep.subr.mxu0 0.0
    %1591 = vmatpush1.msra.mxu0 0.0
    %1592 = vmatprep.subr.mxu0 0.0
    %1593 = vmatpush1.msra.mxu0 0.0
    %1594 = vmatprep.subr.mxu0 0.0
    %1595 = vmatpush1.msra.mxu0 0.0
    %1596 = vmatprep.subr.mxu0 0.0
    %1597 = vmatpush1.msra.mxu0 0.0
    %1598 = vmatprep.mubr.f32.mxu0 0.0
    %1599 = vmatmul.mubr.f32.gmra.mrb[0].mxu0 %v1528
    %v1600 = vpop.f32.mrb[0].mxu0
    %v1601 = vadd.f32 0.0, %v1600
    %v1602 = vpop.f32.mrb[0].mxu0
    %v1603 = vadd.f32 0.0, %v1602
    %1604 = vdwg.mxu0
    %1605 = vmatprep.subr.mxu0 %v419
    %1606 = vmatpush1.msra.mxu0 %v418
    %1607 = vmatprep.subr.mxu0 %v423
    %1608 = vmatpush1.msra.mxu0 %v422
    %1609 = vmatprep.subr.mxu0 %v427
    %1610 = vmatpush1.msra.mxu0 %v426
    %1611 = vmatprep.subr.mxu0 %v431
    %1612 = vmatpush1.msra.mxu0 %v430
    %1613 = vmatprep.subr.mxu0 %v435
    %1614 = vmatpush1.msra.mxu0 %v434
    %1615 = vmatprep.subr.mxu0 %v439
    %1616 = vmatpush1.msra.mxu0 %v438
    %1617 = vmatprep.subr.mxu0 %v443
    %1618 = vmatpush1.msra.mxu0 %v442
    %1619 = vmatprep.subr.mxu0 %v447
    %1620 = vmatpush1.msra.mxu0 %v446
    %1621 = vmatprep.subr.mxu0 %v451
    %1622 = vmatpush1.msra.mxu0 %v450
    %1623 = vmatprep.subr.mxu0 %v455
    %1624 = vmatpush1.msra.mxu0 %v454
    %1625 = vmatprep.subr.mxu0 %v459
    %1626 = vmatpush1.msra.mxu0 %v458
    %1627 = vmatprep.subr.mxu0 %v463
    %1628 = vmatpush1.msra.mxu0 %v462
    %1629 = vmatprep.subr.mxu0 %v467
    %1630 = vmatpush1.msra.mxu0 %v466
    %1631 = vmatprep.subr.mxu0 %v471
    %1632 = vmatpush1.msra.mxu0 %v470
    %1633 = vmatprep.subr.mxu0 %v475
    %1634 = vmatpush1.msra.mxu0 %v474
    %1635 = vmatprep.subr.mxu0 %v479
    %1636 = vmatpush1.msra.mxu0 %v478
    %1637 = vmatprep.subr.mxu0 0.0
    %1638 = vmatpush1.msra.mxu0 0.0
    %1639 = vmatprep.subr.mxu0 0.0
    %1640 = vmatpush1.msra.mxu0 0.0
    %1641 = vmatprep.subr.mxu0 0.0
    %1642 = vmatpush1.msra.mxu0 0.0
    %1643 = vmatprep.subr.mxu0 0.0
    %1644 = vmatpush1.msra.mxu0 0.0
    %1645 = vmatprep.subr.mxu0 0.0
    %1646 = vmatpush1.msra.mxu0 0.0
    %1647 = vmatprep.subr.mxu0 0.0
    %1648 = vmatpush1.msra.mxu0 0.0
    %1649 = vmatprep.subr.mxu0 0.0
    %1650 = vmatpush1.msra.mxu0 0.0
    %1651 = vmatprep.subr.mxu0 0.0
    %1652 = vmatpush1.msra.mxu0 0.0
    %1653 = vmatprep.subr.mxu0 0.0
    %1654 = vmatpush1.msra.mxu0 0.0
    %1655 = vmatprep.subr.mxu0 0.0
    %1656 = vmatpush1.msra.mxu0 0.0
    %1657 = vmatprep.subr.mxu0 0.0
    %1658 = vmatpush1.msra.mxu0 0.0
    %1659 = vmatprep.subr.mxu0 0.0
    %1660 = vmatpush1.msra.mxu0 0.0
    %1661 = vmatprep.subr.mxu0 0.0
    %1662 = vmatpush1.msra.mxu0 0.0
    %1663 = vmatprep.subr.mxu0 0.0
    %1664 = vmatpush1.msra.mxu0 0.0
    %1665 = vmatprep.subr.mxu0 0.0
    %1666 = vmatpush1.msra.mxu0 0.0
    %1667 = vmatprep.subr.mxu0 0.0
    %1668 = vmatpush1.msra.mxu0 0.0
    %1669 = vmatprep.mubr.f32.mxu0 0.0
    %1670 = vmatmul.mubr.f32.gmra.mrb[0].mxu0 %v1528
    %v1671 = vpop.f32.mrb[0].mxu0
    %v1672 = vadd.f32 0.0, %v1671
    %v1673 = vpop.f32.mrb[0].mxu0
    %v1674 = vadd.f32 0.0, %v1673
    %1675 = vdwg.mxu0
    %v1676 = vadd.f32 %v1530, %v1601
    %v1677 = vadd.f32 %v1531, %v1603
    %v1678 = vadd.f32 %v1532, %v1672
    %v1679 = vadd.f32 %v1533, %v1674
    %v1680 = vxor.u32 %v1676, 2147483648
    %v1681 = vmul.f32 %v1680, 1.442695
    %v1682 = vpow.pop %v1681
    %v1683 = vadd.f32 %v1682, 1.0
    %v1684 = vrcp.pop %v1683
    %v1685 = vmul.f32 1.0, %v1684
    %v1686 = vxor.u32 %v1677, 2147483648
    %v1687 = vmul.f32 %v1686, 1.442695
    %v1688 = vpow.pop %v1687
    %v1689 = vadd.f32 %v1688, 1.0
    %v1690 = vrcp.pop %v1689
    %v1691 = vmul.f32 1.0, %v1690
    %v1692 = vtanh.pop %v1678
    %v1693 = vxor.u32 %v1679, 2147483648
    %v1694 = vmul.f32 %v1693, 1.442695
    %v1695 = vpow.pop %v1694
    %v1696 = vadd.f32 %v1695, 1.0
    %v1697 = vrcp.pop %v1696
    %v1698 = vmul.f32 1.0, %v1697
    %v1699 = vmul.f32 %v1691, %v1526
    %v1700 = vmul.f32 %v1685, %v1692
    %v1701 = vadd.f32 %v1699, %v1700
    %v1702 = vtanh.pop %v1701
    %v1703 = vmul.f32 %v1698, %v1702
    %1704 = vst [vmem:[#allocation3 + $0x30] sm:$0xff] %v1703
    %v1705 = vld [vmem:[#allocation2 + $0xe0] sm:$0xff]
    %v1706 = vld [vmem:[#allocation2 + $0xe8] sm:$0xff]
    %v1707 = vld [vmem:[#allocation2 + $0xf0] sm:$0xff]
    %v1708 = vld [vmem:[#allocation2 + $0xf8] sm:$0xff]
    %1709 = vmatprep.subr.mxu0 %v417
    %1710 = vmatpush1.msra.mxu0 %v416
    %1711 = vmatprep.subr.mxu0 %v421
    %1712 = vmatpush1.msra.mxu0 %v420
    %1713 = vmatprep.subr.mxu0 %v425
    %1714 = vmatpush1.msra.mxu0 %v424
    %1715 = vmatprep.subr.mxu0 %v429
    %1716 = vmatpush1.msra.mxu0 %v428
    %1717 = vmatprep.subr.mxu0 %v433
    %1718 = vmatpush1.msra.mxu0 %v432
    %1719 = vmatprep.subr.mxu0 %v437
    %1720 = vmatpush1.msra.mxu0 %v436
    %1721 = vmatprep.subr.mxu0 %v441
    %1722 = vmatpush1.msra.mxu0 %v440
    %1723 = vmatprep.subr.mxu0 %v445
    %1724 = vmatpush1.msra.mxu0 %v444
    %1725 = vmatprep.subr.mxu0 %v449
    %1726 = vmatpush1.msra.mxu0 %v448
    %1727 = vmatprep.subr.mxu0 %v453
    %1728 = vmatpush1.msra.mxu0 %v452
    %1729 = vmatprep.subr.mxu0 %v457
    %1730 = vmatpush1.msra.mxu0 %v456
    %1731 = vmatprep.subr.mxu0 %v461
    %1732 = vmatpush1.msra.mxu0 %v460
    %1733 = vmatprep.subr.mxu0 %v465
    %1734 = vmatpush1.msra.mxu0 %v464
    %1735 = vmatprep.subr.mxu0 %v469
    %1736 = vmatpush1.msra.mxu0 %v468
    %1737 = vmatprep.subr.mxu0 %v473
    %1738 = vmatpush1.msra.mxu0 %v472
    %1739 = vmatprep.subr.mxu0 %v477
    %1740 = vmatpush1.msra.mxu0 %v476
    %1741 = vmatprep.subr.mxu0 0.0
    %1742 = vmatpush1.msra.mxu0 0.0
    %1743 = vmatprep.subr.mxu0 0.0
    %1744 = vmatpush1.msra.mxu0 0.0
    %1745 = vmatprep.subr.mxu0 0.0
    %1746 = vmatpush1.msra.mxu0 0.0
    %1747 = vmatprep.subr.mxu0 0.0
    %1748 = vmatpush1.msra.mxu0 0.0
    %1749 = vmatprep.subr.mxu0 0.0
    %1750 = vmatpush1.msra.mxu0 0.0
    %1751 = vmatprep.subr.mxu0 0.0
    %1752 = vmatpush1.msra.mxu0 0.0
    %1753 = vmatprep.subr.mxu0 0.0
    %1754 = vmatpush1.msra.mxu0 0.0
    %1755 = vmatprep.subr.mxu0 0.0
    %1756 = vmatpush1.msra.mxu0 0.0
    %1757 = vmatprep.subr.mxu0 0.0
    %1758 = vmatpush1.msra.mxu0 0.0
    %1759 = vmatprep.subr.mxu0 0.0
    %1760 = vmatpush1.msra.mxu0 0.0
    %1761 = vmatprep.subr.mxu0 0.0
    %1762 = vmatpush1.msra.mxu0 0.0
    %1763 = vmatprep.subr.mxu0 0.0
    %1764 = vmatpush1.msra.mxu0 0.0
    %1765 = vmatprep.subr.mxu0 0.0
    %1766 = vmatpush1.msra.mxu0 0.0
    %1767 = vmatprep.subr.mxu0 0.0
    %1768 = vmatpush1.msra.mxu0 0.0
    %1769 = vmatprep.subr.mxu0 0.0
    %1770 = vmatpush1.msra.mxu0 0.0
    %1771 = vmatprep.subr.mxu0 0.0
    %1772 = vmatpush1.msra.mxu0 0.0
    %1773 = vmatprep.mubr.f32.mxu0 0.0
    %1774 = vmatmul.mubr.f32.gmra.mrb[0].mxu0 %v1703
    %v1775 = vpop.f32.mrb[0].mxu0
    %v1776 = vadd.f32 0.0, %v1775
    %v1777 = vpop.f32.mrb[0].mxu0
    %v1778 = vadd.f32 0.0, %v1777
    %1779 = vdwg.mxu0
    %1780 = vmatprep.subr.mxu0 %v419
    %1781 = vmatpush1.msra.mxu0 %v418
    %1782 = vmatprep.subr.mxu0 %v423
    %1783 = vmatpush1.msra.mxu0 %v422
    %1784 = vmatprep.subr.mxu0 %v427
    %1785 = vmatpush1.msra.mxu0 %v426
    %1786 = vmatprep.subr.mxu0 %v431
    %1787 = vmatpush1.msra.mxu0 %v430
    %1788 = vmatprep.subr.mxu0 %v435
    %1789 = vmatpush1.msra.mxu0 %v434
    %1790 = vmatprep.subr.mxu0 %v439
    %1791 = vmatpush1.msra.mxu0 %v438
    %1792 = vmatprep.subr.mxu0 %v443
    %1793 = vmatpush1.msra.mxu0 %v442
    %1794 = vmatprep.subr.mxu0 %v447
    %1795 = vmatpush1.msra.mxu0 %v446
    %1796 = vmatprep.subr.mxu0 %v451
    %1797 = vmatpush1.msra.mxu0 %v450
    %1798 = vmatprep.subr.mxu0 %v455
    %1799 = vmatpush1.msra.mxu0 %v454
    %1800 = vmatprep.subr.mxu0 %v459
    %1801 = vmatpush1.msra.mxu0 %v458
    %1802 = vmatprep.subr.mxu0 %v463
    %1803 = vmatpush1.msra.mxu0 %v462
    %1804 = vmatprep.subr.mxu0 %v467
    %1805 = vmatpush1.msra.mxu0 %v466
    %1806 = vmatprep.subr.mxu0 %v471
    %1807 = vmatpush1.msra.mxu0 %v470
    %1808 = vmatprep.subr.mxu0 %v475
    %1809 = vmatpush1.msra.mxu0 %v474
    %1810 = vmatprep.subr.mxu0 %v479
    %1811 = vmatpush1.msra.mxu0 %v478
    %1812 = vmatprep.subr.mxu0 0.0
    %1813 = vmatpush1.msra.mxu0 0.0
    %1814 = vmatprep.subr.mxu0 0.0
    %1815 = vmatpush1.msra.mxu0 0.0
    %1816 = vmatprep.subr.mxu0 0.0
    %1817 = vmatpush1.msra.mxu0 0.0
    %1818 = vmatprep.subr.mxu0 0.0
    %1819 = vmatpush1.msra.mxu0 0.0
    %1820 = vmatprep.subr.mxu0 0.0
    %1821 = vmatpush1.msra.mxu0 0.0
    %1822 = vmatprep.subr.mxu0 0.0
    %1823 = vmatpush1.msra.mxu0 0.0
    %1824 = vmatprep.subr.mxu0 0.0
    %1825 = vmatpush1.msra.mxu0 0.0
    %1826 = vmatprep.subr.mxu0 0.0
    %1827 = vmatpush1.msra.mxu0 0.0
    %1828 = vmatprep.subr.mxu0 0.0
    %1829 = vmatpush1.msra.mxu0 0.0
    %1830 = vmatprep.subr.mxu0 0.0
    %1831 = vmatpush1.msra.mxu0 0.0
    %1832 = vmatprep.subr.mxu0 0.0
    %1833 = vmatpush1.msra.mxu0 0.0
    %1834 = vmatprep.subr.mxu0 0.0
    %1835 = vmatpush1.msra.mxu0 0.0
    %1836 = vmatprep.subr.mxu0 0.0
    %1837 = vmatpush1.msra.mxu0 0.0
    %1838 = vmatprep.subr.mxu0 0.0
    %1839 = vmatpush1.msra.mxu0 0.0
    %1840 = vmatprep.subr.mxu0 0.0
    %1841 = vmatpush1.msra.mxu0 0.0
    %1842 = vmatprep.subr.mxu0 0.0
    %1843 = vmatpush1.msra.mxu0 0.0
    %1844 = vmatprep.mubr.f32.mxu0 0.0
    %1845 = vmatmul.mubr.f32.gmra.mrb[0].mxu0 %v1703
    %v1846 = vpop.f32.mrb[0].mxu0
    %v1847 = vadd.f32 0.0, %v1846
    %v1848 = vpop.f32.mrb[0].mxu0
    %v1849 = vadd.f32 0.0, %v1848
    %1850 = vdwg.mxu0
    %v1851 = vadd.f32 %v1705, %v1776
    %v1852 = vadd.f32 %v1706, %v1778
    %v1853 = vadd.f32 %v1707, %v1847
    %v1854 = vadd.f32 %v1708, %v1849
    %v1855 = vxor.u32 %v1851, 2147483648
    %v1856 = vmul.f32 %v1855, 1.442695
    %v1857 = vpow.pop %v1856
    %v1858 = vadd.f32 %v1857, 1.0
    %v1859 = vrcp.pop %v1858
    %v1860 = vmul.f32 1.0, %v1859
    %v1861 = vxor.u32 %v1852, 2147483648
    %v1862 = vmul.f32 %v1861, 1.442695
    %v1863 = vpow.pop %v1862
    %v1864 = vadd.f32 %v1863, 1.0
    %v1865 = vrcp.pop %v1864
    %v1866 = vmul.f32 1.0, %v1865
    %v1867 = vtanh.pop %v1853
    %v1868 = vxor.u32 %v1854, 2147483648
    %v1869 = vmul.f32 %v1868, 1.442695
    %v1870 = vpow.pop %v1869
    %v1871 = vadd.f32 %v1870, 1.0
    %v1872 = vrcp.pop %v1871
    %v1873 = vmul.f32 1.0, %v1872
    %v1874 = vmul.f32 %v1866, %v1701
    %v1875 = vmul.f32 %v1860, %v1867
    %v1876 = vadd.f32 %v1874, %v1875
    %v1877 = vtanh.pop %v1876
    %v1878 = vmul.f32 %v1873, %v1877
    %1879 = vst [vmem:[#allocation3 + $0x38] sm:$0xff] %v1878
    %v1880 = vld [vmem:[#allocation3] sm:$0xff]
    %v1881 = vld [vmem:[#allocation3 + $0x8] sm:$0xff]
    %v1882 = vld [vmem:[#allocation3 + $0x10] sm:$0xff]
    %v1883 = vld [vmem:[#allocation3 + $0x18] sm:$0xff]
    %v1884 = vld [vmem:[#allocation3 + $0x20] sm:$0xff]
    %v1885 = vld [vmem:[#allocation3 + $0x28] sm:$0xff]
    %v1886 = vld [vmem:[#allocation3 + $0x30] sm:$0xff]
    %v1887 = vld [vmem:[#allocation3 + $0x38] sm:$0xff]
    %v1888 = vld [vmem:[#allocation8] sm:$0xff]
    %v1889 = vld [vmem:[#allocation8 + $0x8] sm:$0xff]
    %v1890 = vld [vmem:[#allocation8 + $0x10] sm:$0xff]
    %v1891 = vld [vmem:[#allocation8 + $0x18] sm:$0xff]
    %v1892 = vld [vmem:[#allocation8 + $0x20] sm:$0xff]
    %v1893 = vld [vmem:[#allocation8 + $0x28] sm:$0xff]
    %v1894 = vld [vmem:[#allocation8 + $0x30] sm:$0xff]
    %v1895 = vld [vmem:[#allocation8 + $0x38] sm:$0xff]
    %v1896 = vld [vmem:[#allocation8 + $0x40] sm:$0xff]
    %v1897 = vld [vmem:[#allocation8 + $0x48] sm:$0xff]
    %v1898 = vld [vmem:[#allocation8 + $0x50] sm:$0xff]
    %v1899 = vld [vmem:[#allocation8 + $0x58] sm:$0xff]
    %v1900 = vld [vmem:[#allocation8 + $0x60] sm:$0xff]
    %v1901 = vld [vmem:[#allocation8 + $0x68] sm:$0xff]
    %v1902 = vld [vmem:[#allocation8 + $0x70] sm:$0xff]
    %v1903 = vld [vmem:[#allocation8 + $0x78] sm:$0xff]
    %v1904 = vld [vmem:[#allocation8 + $0x80] sm:$0xff]
    %v1905 = vld [vmem:[#allocation8 + $0x88] sm:$0xff]
    %v1906 = vld [vmem:[#allocation8 + $0x90] sm:$0xff]
    %v1907 = vld [vmem:[#allocation8 + $0x98] sm:$0xff]
    %v1908 = vld [vmem:[#allocation8 + $0xa0] sm:$0xff]
    %v1909 = vld [vmem:[#allocation8 + $0xa8] sm:$0xff]
    %v1910 = vld [vmem:[#allocation8 + $0xb0] sm:$0xff]
    %v1911 = vld [vmem:[#allocation8 + $0xb8] sm:$0xff]
    %v1912 = vld [vmem:[#allocation8 + $0xc0] sm:$0xff]
    %v1913 = vld [vmem:[#allocation8 + $0xc8] sm:$0xff]
    %v1914 = vld [vmem:[#allocation8 + $0xd0] sm:$0xff]
    %v1915 = vld [vmem:[#allocation8 + $0xd8] sm:$0xff]
    %v1916 = vld [vmem:[#allocation8 + $0xe0] sm:$0xff]
    %v1917 = vld [vmem:[#allocation8 + $0xe8] sm:$0xff]
    %v1918 = vld [vmem:[#allocation8 + $0xf0] sm:$0xff]
    %v1919 = vld [vmem:[#allocation8 + $0xf8] sm:$0xff]
    %v1920 = vld [vmem:[#allocation8 + $0x100] sm:$0xff]
    %v1921 = vld [vmem:[#allocation8 + $0x108] sm:$0xff]
    %v1922 = vld [vmem:[#allocation8 + $0x110] sm:$0xff]
    %v1923 = vld [vmem:[#allocation8 + $0x118] sm:$0xff]
    %v1924 = vld [vmem:[#allocation8 + $0x120] sm:$0xff]
    %v1925 = vld [vmem:[#allocation8 + $0x128] sm:$0xff]
    %v1926 = vld [vmem:[#allocation8 + $0x130] sm:$0xff]
    %v1927 = vld [vmem:[#allocation8 + $0x138] sm:$0xff]
    %v1928 = vld [vmem:[#allocation8 + $0x140] sm:$0xff]
    %v1929 = vld [vmem:[#allocation8 + $0x148] sm:$0xff]
    %v1930 = vld [vmem:[#allocation8 + $0x150] sm:$0xff]
    %v1931 = vld [vmem:[#allocation8 + $0x158] sm:$0xff]
    %v1932 = vld [vmem:[#allocation8 + $0x160] sm:$0xff]
    %v1933 = vld [vmem:[#allocation8 + $0x168] sm:$0xff]
    %v1934 = vld [vmem:[#allocation8 + $0x170] sm:$0xff]
    %v1935 = vld [vmem:[#allocation8 + $0x178] sm:$0xff]
    %v1936 = vld [vmem:[#allocation8 + $0x180] sm:$0xff]
    %v1937 = vld [vmem:[#allocation8 + $0x188] sm:$0xff]
    %v1938 = vld [vmem:[#allocation8 + $0x190] sm:$0xff]
    %v1939 = vld [vmem:[#allocation8 + $0x198] sm:$0xff]
    %v1940 = vld [vmem:[#allocation8 + $0x1a0] sm:$0xff]
    %v1941 = vld [vmem:[#allocation8 + $0x1a8] sm:$0xff]
    %v1942 = vld [vmem:[#allocation8 + $0x1b0] sm:$0xff]
    %v1943 = vld [vmem:[#allocation8 + $0x1b8] sm:$0xff]
    %v1944 = vld [vmem:[#allocation8 + $0x1c0] sm:$0xff]
    %v1945 = vld [vmem:[#allocation8 + $0x1c8] sm:$0xff]
    %v1946 = vld [vmem:[#allocation8 + $0x1d0] sm:$0xff]
    %v1947 = vld [vmem:[#allocation8 + $0x1d8] sm:$0xff]
    %v1948 = vld [vmem:[#allocation8 + $0x1e0] sm:$0xff]
    %v1949 = vld [vmem:[#allocation8 + $0x1e8] sm:$0xff]
    %v1950 = vld [vmem:[#allocation8 + $0x1f0] sm:$0xff]
    %v1951 = vld [vmem:[#allocation8 + $0x1f8] sm:$0xff]
    %v1952 = vld [vmem:[%s6] sm:$0xf]
    %v1954 = vlaneseq
    %v1955 = vshrl.u32 %v1954, 7
    %v1956 = vsub.s32 0, %v1955
    %v1957 = vrot.slane %v1952, %v1956
    %v1958 = vlaneseq
    %v1959 = vshrl.u32 %v1958, 7
    %v1960 = vsub.s32 1, %v1959
    %v1961 = vrot.slane %v1952, %v1960
    %v1962 = vlaneseq
    %v1963 = vshrl.u32 %v1962, 7
    %v1964 = vsub.s32 2, %v1963
    %v1965 = vrot.slane %v1952, %v1964
    %v1966 = vlaneseq
    %v1967 = vshrl.u32 %v1966, 7
    %v1968 = vsub.s32 3, %v1967
    %v1969 = vrot.slane %v1952, %v1968
    %1974 = vmatprep.subr.mxu0 %v1889
    %1975 = vmatpush1.msra.mxu0 %v1888
    %1976 = vmatprep.subr.mxu0 %v1893
    %1977 = vmatpush1.msra.mxu0 %v1892
    %1978 = vmatprep.subr.mxu0 %v1897
    %1979 = vmatpush1.msra.mxu0 %v1896
    %1980 = vmatprep.subr.mxu0 %v1901
    %1981 = vmatpush1.msra.mxu0 %v1900
    %1982 = vmatprep.subr.mxu0 %v1905
    %1983 = vmatpush1.msra.mxu0 %v1904
    %1984 = vmatprep.subr.mxu0 %v1909
    %1985 = vmatpush1.msra.mxu0 %v1908
    %1986 = vmatprep.subr.mxu0 %v1913
    %1987 = vmatpush1.msra.mxu0 %v1912
    %1988 = vmatprep.subr.mxu0 %v1917
    %1989 = vmatpush1.msra.mxu0 %v1916
    %1990 = vmatprep.subr.mxu0 %v1921
    %1991 = vmatpush1.msra.mxu0 %v1920
    %1992 = vmatprep.subr.mxu0 %v1925
    %1993 = vmatpush1.msra.mxu0 %v1924
    %1994 = vmatprep.subr.mxu0 %v1929
    %1995 = vmatpush1.msra.mxu0 %v1928
    %1996 = vmatprep.subr.mxu0 %v1933
    %1997 = vmatpush1.msra.mxu0 %v1932
    %1998 = vmatprep.subr.mxu0 %v1937
    %1999 = vmatpush1.msra.mxu0 %v1936
    %2000 = vmatprep.subr.mxu0 %v1941
    %2001 = vmatpush1.msra.mxu0 %v1940
    %2002 = vmatprep.subr.mxu0 %v1945
    %2003 = vmatpush1.msra.mxu0 %v1944
    %2004 = vmatprep.subr.mxu0 %v1949
    %2005 = vmatpush1.msra.mxu0 %v1948
    %2006 = vmatprep.subr.mxu0 0.0
    %2007 = vmatpush1.msra.mxu0 0.0
    %2008 = vmatprep.subr.mxu0 0.0
    %2009 = vmatpush1.msra.mxu0 0.0
    %2010 = vmatprep.subr.mxu0 0.0
    %2011 = vmatpush1.msra.mxu0 0.0
    %2012 = vmatprep.subr.mxu0 0.0
    %2013 = vmatpush1.msra.mxu0 0.0
    %2014 = vmatprep.subr.mxu0 0.0
    %2015 = vmatpush1.msra.mxu0 0.0
    %2016 = vmatprep.subr.mxu0 0.0
    %2017 = vmatpush1.msra.mxu0 0.0
    %2018 = vmatprep.subr.mxu0 0.0
    %2019 = vmatpush1.msra.mxu0 0.0
    %2020 = vmatprep.subr.mxu0 0.0
    %2021 = vmatpush1.msra.mxu0 0.0
    %2022 = vmatprep.subr.mxu0 0.0
    %2023 = vmatpush1.msra.mxu0 0.0
    %2024 = vmatprep.subr.mxu0 0.0
    %2025 = vmatpush1.msra.mxu0 0.0
    %2026 = vmatprep.subr.mxu0 0.0
    %2027 = vmatpush1.msra.mxu0 0.0
    %2028 = vmatprep.subr.mxu0 0.0
    %2029 = vmatpush1.msra.mxu0 0.0
    %2030 = vmatprep.subr.mxu0 0.0
    %2031 = vmatpush1.msra.mxu0 0.0
    %2032 = vmatprep.subr.mxu0 0.0
    %2033 = vmatpush1.msra.mxu0 0.0
    %2034 = vmatprep.subr.mxu0 0.0
    %2035 = vmatpush1.msra.mxu0 0.0
    %2036 = vmatprep.subr.mxu0 0.0
    %2037 = vmatpush1.msra.mxu0 0.0
    %2038 = vmatprep.mubr.f32.mxu0 0.0
    %2039 = vmatmul.mubr.f32.gmra.mrb[0].mxu0 %v1880
    %v2040 = vpop.f32.mrb[0].mxu0
    %v2041 = vadd.f32 %v1957, %v2040
    %v2042 = vpop.f32.mrb[0].mxu0
    %v2043 = vadd.f32 %v1961, %v2042
    %2044 = vmatprep.mubr.f32.mxu0 0.0
    %2045 = vmatmul.mubr.f32.gmra.mrb[0].mxu0 %v1881
    %v2046 = vpop.f32.mrb[0].mxu0
    %v2047 = vadd.f32 %v1957, %v2046
    %v2048 = vpop.f32.mrb[0].mxu0
    %v2049 = vadd.f32 %v1961, %v2048
    %2050 = vmatprep.mubr.f32.mxu0 0.0
    %2051 = vmatmul.mubr.f32.gmra.mrb[0].mxu0 %v1882
    %v2052 = vpop.f32.mrb[0].mxu0
    %v2053 = vadd.f32 %v1957, %v2052
    %v2054 = vpop.f32.mrb[0].mxu0
    %v2055 = vadd.f32 %v1961, %v2054
    %2056 = vmatprep.mubr.f32.mxu0 0.0
    %2057 = vmatmul.mubr.f32.gmra.mrb[0].mxu0 %v1883
    %v2058 = vpop.f32.mrb[0].mxu0
    %v2059 = vadd.f32 %v1957, %v2058
    %v2060 = vpop.f32.mrb[0].mxu0
    %v2061 = vadd.f32 %v1961, %v2060
    %2062 = vmatprep.mubr.f32.mxu0 0.0
    %2063 = vmatmul.mubr.f32.gmra.mrb[0].mxu0 %v1884
    %v2064 = vpop.f32.mrb[0].mxu0
    %v2065 = vadd.f32 %v1957, %v2064
    %v2066 = vpop.f32.mrb[0].mxu0
    %v2067 = vadd.f32 %v1961, %v2066
    %2068 = vmatprep.mubr.f32.mxu0 0.0
    %2069 = vmatmul.mubr.f32.gmra.mrb[0].mxu0 %v1885
    %v2070 = vpop.f32.mrb[0].mxu0
    %v2071 = vadd.f32 %v1957, %v2070
    %v2072 = vpop.f32.mrb[0].mxu0
    %v2073 = vadd.f32 %v1961, %v2072
    %2074 = vmatprep.mubr.f32.mxu0 0.0
    %2075 = vmatmul.mubr.f32.gmra.mrb[0].mxu0 %v1886
    %v2076 = vpop.f32.mrb[0].mxu0
    %v2077 = vadd.f32 %v1957, %v2076
    %v2078 = vpop.f32.mrb[0].mxu0
    %v2079 = vadd.f32 %v1961, %v2078
    %2080 = vmatprep.mubr.f32.mxu0 0.0
    %2081 = vmatmul.mubr.f32.gmra.mrb[0].mxu0 %v1887
    %v2082 = vpop.f32.mrb[0].mxu0
    %v2083 = vadd.f32 %v1957, %v2082
    %v2084 = vpop.f32.mrb[0].mxu0
    %v2085 = vadd.f32 %v1961, %v2084
    %2086 = vdwg.mxu0
    %2087 = vmatprep.subr.mxu0 %v1891
    %2088 = vmatpush1.msra.mxu0 %v1890
    %2089 = vmatprep.subr.mxu0 %v1895
    %2090 = vmatpush1.msra.mxu0 %v1894
    %2091 = vmatprep.subr.mxu0 %v1899
    %2092 = vmatpush1.msra.mxu0 %v1898
    %2093 = vmatprep.subr.mxu0 %v1903
    %2094 = vmatpush1.msra.mxu0 %v1902
    %2095 = vmatprep.subr.mxu0 %v1907
    %2096 = vmatpush1.msra.mxu0 %v1906
    %2097 = vmatprep.subr.mxu0 %v1911
    %2098 = vmatpush1.msra.mxu0 %v1910
    %2099 = vmatprep.subr.mxu0 %v1915
    %2100 = vmatpush1.msra.mxu0 %v1914
    %2101 = vmatprep.subr.mxu0 %v1919
    %2102 = vmatpush1.msra.mxu0 %v1918
    %2103 = vmatprep.subr.mxu0 %v1923
    %2104 = vmatpush1.msra.mxu0 %v1922
    %2105 = vmatprep.subr.mxu0 %v1927
    %2106 = vmatpush1.msra.mxu0 %v1926
    %2107 = vmatprep.subr.mxu0 %v1931
    %2108 = vmatpush1.msra.mxu0 %v1930
    %2109 = vmatprep.subr.mxu0 %v1935
    %2110 = vmatpush1.msra.mxu0 %v1934
    %2111 = vmatprep.subr.mxu0 %v1939
    %2112 = vmatpush1.msra.mxu0 %v1938
    %2113 = vmatprep.subr.mxu0 %v1943
    %2114 = vmatpush1.msra.mxu0 %v1942
    %2115 = vmatprep.subr.mxu0 %v1947
    %2116 = vmatpush1.msra.mxu0 %v1946
    %2117 = vmatprep.subr.mxu0 %v1951
    %2118 = vmatpush1.msra.mxu0 %v1950
    %2119 = vmatprep.subr.mxu0 0.0
    %2120 = vmatpush1.msra.mxu0 0.0
    %2121 = vmatprep.subr.mxu0 0.0
    %2122 = vmatpush1.msra.mxu0 0.0
    %2123 = vmatprep.subr.mxu0 0.0
    %2124 = vmatpush1.msra.mxu0 0.0
    %2125 = vmatprep.subr.mxu0 0.0
    %2126 = vmatpush1.msra.mxu0 0.0
    %2127 = vmatprep.subr.mxu0 0.0
    %2128 = vmatpush1.msra.mxu0 0.0
    %2129 = vmatprep.subr.mxu0 0.0
    %2130 = vmatpush1.msra.mxu0 0.0
    %2131 = vmatprep.subr.mxu0 0.0
    %2132 = vmatpush1.msra.mxu0 0.0
    %2133 = vmatprep.subr.mxu0 0.0
    %2134 = vmatpush1.msra.mxu0 0.0
    %2135 = vmatprep.subr.mxu0 0.0
    %2136 = vmatpush1.msra.mxu0 0.0
    %2137 = vmatprep.subr.mxu0 0.0
    %2138 = vmatpush1.msra.mxu0 0.0
    %2139 = vmatprep.subr.mxu0 0.0
    %2140 = vmatpush1.msra.mxu0 0.0
    %2141 = vmatprep.subr.mxu0 0.0
    %2142 = vmatpush1.msra.mxu0 0.0
    %2143 = vmatprep.subr.mxu0 0.0
    %2144 = vmatpush1.msra.mxu0 0.0
    %2145 = vmatprep.subr.mxu0 0.0
    %2146 = vmatpush1.msra.mxu0 0.0
    %2147 = vmatprep.subr.mxu0 0.0
    %2148 = vmatpush1.msra.mxu0 0.0
    %2149 = vmatprep.subr.mxu0 0.0
    %2150 = vmatpush1.msra.mxu0 0.0
    %2151 = vmatprep.mubr.f32.mxu0 0.0
    %2152 = vmatmul.mubr.f32.gmra.mrb[0].mxu0 %v1880
    %v2153 = vpop.f32.mrb[0].mxu0
    %v2154 = vadd.f32 %v1965, %v2153
    %v2155 = vpop.f32.mrb[0].mxu0
    %v2156 = vadd.f32 %v1969, %v2155
    %2157 = vmatprep.mubr.f32.mxu0 0.0
    %2158 = vmatmul.mubr.f32.gmra.mrb[0].mxu0 %v1881
    %v2159 = vpop.f32.mrb[0].mxu0
    %v2160 = vadd.f32 %v1965, %v2159
    %v2161 = vpop.f32.mrb[0].mxu0
    %v2162 = vadd.f32 %v1969, %v2161
    %2163 = vmatprep.mubr.f32.mxu0 0.0
    %2164 = vmatmul.mubr.f32.gmra.mrb[0].mxu0 %v1882
    %v2165 = vpop.f32.mrb[0].mxu0
    %v2166 = vadd.f32 %v1965, %v2165
    %v2167 = vpop.f32.mrb[0].mxu0
    %v2168 = vadd.f32 %v1969, %v2167
    %2169 = vmatprep.mubr.f32.mxu0 0.0
    %2170 = vmatmul.mubr.f32.gmra.mrb[0].mxu0 %v1883
    %v2171 = vpop.f32.mrb[0].mxu0
    %v2172 = vadd.f32 %v1965, %v2171
    %v2173 = vpop.f32.mrb[0].mxu0
    %v2174 = vadd.f32 %v1969, %v2173
    %2175 = vmatprep.mubr.f32.mxu0 0.0
    %2176 = vmatmul.mubr.f32.gmra.mrb[0].mxu0 %v1884
    %v2177 = vpop.f32.mrb[0].mxu0
    %v2178 = vadd.f32 %v1965, %v2177
    %v2179 = vpop.f32.mrb[0].mxu0
    %v2180 = vadd.f32 %v1969, %v2179
    %2181 = vmatprep.mubr.f32.mxu0 0.0
    %2182 = vmatmul.mubr.f32.gmra.mrb[0].mxu0 %v1885
    %v2183 = vpop.f32.mrb[0].mxu0
    %v2184 = vadd.f32 %v1965, %v2183
    %v2185 = vpop.f32.mrb[0].mxu0
    %v2186 = vadd.f32 %v1969, %v2185
    %2187 = vmatprep.mubr.f32.mxu0 0.0
    %2188 = vmatmul.mubr.f32.gmra.mrb[0].mxu0 %v1886
    %v2189 = vpop.f32.mrb[0].mxu0
    %v2190 = vadd.f32 %v1965, %v2189
    %v2191 = vpop.f32.mrb[0].mxu0
    %v2192 = vadd.f32 %v1969, %v2191
    %2193 = vmatprep.mubr.f32.mxu0 0.0
    %2194 = vmatmul.mubr.f32.gmra.mrb[0].mxu0 %v1887
    %v2195 = vpop.f32.mrb[0].mxu0
    %v2196 = vadd.f32 %v1965, %v2195
    %v2197 = vpop.f32.mrb[0].mxu0
    %v2198 = vadd.f32 %v1969, %v2197
    %2199 = vdwg.mxu0
    %2200 = vst [vmem:[#allocation2] sm:$0xff] %v2041
    %2201 = vst [vmem:[#allocation2 + $0x8] sm:$0xff] %v2043
    %2202 = vst [vmem:[#allocation2 + $0x10] sm:$0xff] %v2154
    %2203 = vst [vmem:[#allocation2 + $0x18] sm:$0xff] %v2156
    %2204 = vst [vmem:[#allocation2 + $0x20] sm:$0xff] %v2047
    %2205 = vst [vmem:[#allocation2 + $0x28] sm:$0xff] %v2049
    %2206 = vst [vmem:[#allocation2 + $0x30] sm:$0xff] %v2160
    %2207 = vst [vmem:[#allocation2 + $0x38] sm:$0xff] %v2162
    %2208 = vst [vmem:[#allocation2 + $0x40] sm:$0xff] %v2053
    %2209 = vst [vmem:[#allocation2 + $0x48] sm:$0xff] %v2055
    %2210 = vst [vmem:[#allocation2 + $0x50] sm:$0xff] %v2166
    %2211 = vst [vmem:[#allocation2 + $0x58] sm:$0xff] %v2168
    %2212 = vst [vmem:[#allocation2 + $0x60] sm:$0xff] %v2059
    %2213 = vst [vmem:[#allocation2 + $0x68] sm:$0xff] %v2061
    %2214 = vst [vmem:[#allocation2 + $0x70] sm:$0xff] %v2172
    %2215 = vst [vmem:[#allocation2 + $0x78] sm:$0xff] %v2174
    %2216 = vst [vmem:[#allocation2 + $0x80] sm:$0xff] %v2065
    %2217 = vst [vmem:[#allocation2 + $0x88] sm:$0xff] %v2067
    %2218 = vst [vmem:[#allocation2 + $0x90] sm:$0xff] %v2178
    %2219 = vst [vmem:[#allocation2 + $0x98] sm:$0xff] %v2180
    %2220 = vst [vmem:[#allocation2 + $0xa0] sm:$0xff] %v2071
    %2221 = vst [vmem:[#allocation2 + $0xa8] sm:$0xff] %v2073
    %2222 = vst [vmem:[#allocation2 + $0xb0] sm:$0xff] %v2184
    %2223 = vst [vmem:[#allocation2 + $0xb8] sm:$0xff] %v2186
    %2224 = vst [vmem:[#allocation2 + $0xc0] sm:$0xff] %v2077
    %2225 = vst [vmem:[#allocation2 + $0xc8] sm:$0xff] %v2079
    %2226 = vst [vmem:[#allocation2 + $0xd0] sm:$0xff] %v2190
    %2227 = vst [vmem:[#allocation2 + $0xd8] sm:$0xff] %v2192
    %2228 = vst [vmem:[#allocation2 + $0xe0] sm:$0xff] %v2083
    %2229 = vst [vmem:[#allocation2 + $0xe8] sm:$0xff] %v2085
    %2230 = vst [vmem:[#allocation2 + $0xf0] sm:$0xff] %v2196
    %2231 = vst [vmem:[#allocation2 + $0xf8] sm:$0xff] %v2198
    %v2232 = vld [vmem:[#allocation9] sm:$0xff]
    %v2233 = vld [vmem:[#allocation9 + $0x8] sm:$0xff]
    %v2234 = vld [vmem:[#allocation9 + $0x10] sm:$0xff]
    %v2235 = vld [vmem:[#allocation9 + $0x18] sm:$0xff]
    %v2236 = vld [vmem:[#allocation9 + $0x20] sm:$0xff]
    %v2237 = vld [vmem:[#allocation9 + $0x28] sm:$0xff]
    %v2238 = vld [vmem:[#allocation9 + $0x30] sm:$0xff]
    %v2239 = vld [vmem:[#allocation9 + $0x38] sm:$0xff]
    %v2240 = vld [vmem:[#allocation9 + $0x40] sm:$0xff]
    %v2241 = vld [vmem:[#allocation9 + $0x48] sm:$0xff]
    %v2242 = vld [vmem:[#allocation9 + $0x50] sm:$0xff]
    %v2243 = vld [vmem:[#allocation9 + $0x58] sm:$0xff]
    %v2244 = vld [vmem:[#allocation9 + $0x60] sm:$0xff]
    %v2245 = vld [vmem:[#allocation9 + $0x68] sm:$0xff]
    %v2246 = vld [vmem:[#allocation9 + $0x70] sm:$0xff]
    %v2247 = vld [vmem:[#allocation9 + $0x78] sm:$0xff]
    %v2248 = vld [vmem:[#allocation9 + $0x80] sm:$0xff]
    %v2249 = vld [vmem:[#allocation9 + $0x88] sm:$0xff]
    %v2250 = vld [vmem:[#allocation9 + $0x90] sm:$0xff]
    %v2251 = vld [vmem:[#allocation9 + $0x98] sm:$0xff]
    %v2252 = vld [vmem:[#allocation9 + $0xa0] sm:$0xff]
    %v2253 = vld [vmem:[#allocation9 + $0xa8] sm:$0xff]
    %v2254 = vld [vmem:[#allocation9 + $0xb0] sm:$0xff]
    %v2255 = vld [vmem:[#allocation9 + $0xb8] sm:$0xff]
    %v2256 = vld [vmem:[#allocation9 + $0xc0] sm:$0xff]
    %v2257 = vld [vmem:[#allocation9 + $0xc8] sm:$0xff]
    %v2258 = vld [vmem:[#allocation9 + $0xd0] sm:$0xff]
    %v2259 = vld [vmem:[#allocation9 + $0xd8] sm:$0xff]
    %v2260 = vld [vmem:[#allocation9 + $0xe0] sm:$0xff]
    %v2261 = vld [vmem:[#allocation9 + $0xe8] sm:$0xff]
    %v2262 = vld [vmem:[#allocation9 + $0xf0] sm:$0xff]
    %v2263 = vld [vmem:[#allocation9 + $0xf8] sm:$0xff]
    %v2264 = vld [vmem:[#allocation9 + $0x100] sm:$0xff]
    %v2265 = vld [vmem:[#allocation9 + $0x108] sm:$0xff]
    %v2266 = vld [vmem:[#allocation9 + $0x110] sm:$0xff]
    %v2267 = vld [vmem:[#allocation9 + $0x118] sm:$0xff]
    %v2268 = vld [vmem:[#allocation9 + $0x120] sm:$0xff]
    %v2269 = vld [vmem:[#allocation9 + $0x128] sm:$0xff]
    %v2270 = vld [vmem:[#allocation9 + $0x130] sm:$0xff]
    %v2271 = vld [vmem:[#allocation9 + $0x138] sm:$0xff]
    %v2272 = vld [vmem:[#allocation9 + $0x140] sm:$0xff]
    %v2273 = vld [vmem:[#allocation9 + $0x148] sm:$0xff]
    %v2274 = vld [vmem:[#allocation9 + $0x150] sm:$0xff]
    %v2275 = vld [vmem:[#allocation9 + $0x158] sm:$0xff]
    %v2276 = vld [vmem:[#allocation9 + $0x160] sm:$0xff]
    %v2277 = vld [vmem:[#allocation9 + $0x168] sm:$0xff]
    %v2278 = vld [vmem:[#allocation9 + $0x170] sm:$0xff]
    %v2279 = vld [vmem:[#allocation9 + $0x178] sm:$0xff]
    %v2280 = vld [vmem:[#allocation9 + $0x180] sm:$0xff]
    %v2281 = vld [vmem:[#allocation9 + $0x188] sm:$0xff]
    %v2282 = vld [vmem:[#allocation9 + $0x190] sm:$0xff]
    %v2283 = vld [vmem:[#allocation9 + $0x198] sm:$0xff]
    %v2284 = vld [vmem:[#allocation9 + $0x1a0] sm:$0xff]
    %v2285 = vld [vmem:[#allocation9 + $0x1a8] sm:$0xff]
    %v2286 = vld [vmem:[#allocation9 + $0x1b0] sm:$0xff]
    %v2287 = vld [vmem:[#allocation9 + $0x1b8] sm:$0xff]
    %v2288 = vld [vmem:[#allocation9 + $0x1c0] sm:$0xff]
    %v2289 = vld [vmem:[#allocation9 + $0x1c8] sm:$0xff]
    %v2290 = vld [vmem:[#allocation9 + $0x1d0] sm:$0xff]
    %v2291 = vld [vmem:[#allocation9 + $0x1d8] sm:$0xff]
    %v2292 = vld [vmem:[#allocation9 + $0x1e0] sm:$0xff]
    %v2293 = vld [vmem:[#allocation9 + $0x1e8] sm:$0xff]
    %v2294 = vld [vmem:[#allocation9 + $0x1f0] sm:$0xff]
    %v2295 = vld [vmem:[#allocation9 + $0x1f8] sm:$0xff]
    %v2296 = vld [vmem:[#allocation2] sm:$0xff]
    %v2297 = vld [vmem:[#allocation2 + $0x8] sm:$0xff]
    %v2298 = vld [vmem:[#allocation2 + $0x10] sm:$0xff]
    %v2299 = vld [vmem:[#allocation2 + $0x18] sm:$0xff]
    %2300 = vmatprep.subr.mxu0 %v2233
    %2301 = vmatpush1.msra.mxu0 %v2232
    %2302 = vmatprep.subr.mxu0 %v2237
    %2303 = vmatpush1.msra.mxu0 %v2236
    %2304 = vmatprep.subr.mxu0 %v2241
    %2305 = vmatpush1.msra.mxu0 %v2240
    %2306 = vmatprep.subr.mxu0 %v2245
    %2307 = vmatpush1.msra.mxu0 %v2244
    %2308 = vmatprep.subr.mxu0 %v2249
    %2309 = vmatpush1.msra.mxu0 %v2248
    %2310 = vmatprep.subr.mxu0 %v2253
    %2311 = vmatpush1.msra.mxu0 %v2252
    %2312 = vmatprep.subr.mxu0 %v2257
    %2313 = vmatpush1.msra.mxu0 %v2256
    %2314 = vmatprep.subr.mxu0 %v2261
    %2315 = vmatpush1.msra.mxu0 %v2260
    %2316 = vmatprep.subr.mxu0 %v2265
    %2317 = vmatpush1.msra.mxu0 %v2264
    %2318 = vmatprep.subr.mxu0 %v2269
    %2319 = vmatpush1.msra.mxu0 %v2268
    %2320 = vmatprep.subr.mxu0 %v2273
    %2321 = vmatpush1.msra.mxu0 %v2272
    %2322 = vmatprep.subr.mxu0 %v2277
    %2323 = vmatpush1.msra.mxu0 %v2276
    %2324 = vmatprep.subr.mxu0 %v2281
    %2325 = vmatpush1.msra.mxu0 %v2280
    %2326 = vmatprep.subr.mxu0 %v2285
    %2327 = vmatpush1.msra.mxu0 %v2284
    %2328 = vmatprep.subr.mxu0 %v2289
    %2329 = vmatpush1.msra.mxu0 %v2288
    %2330 = vmatprep.subr.mxu0 %v2293
    %2331 = vmatpush1.msra.mxu0 %v2292
    %2332 = vmatprep.subr.mxu0 0.0
    %2333 = vmatpush1.msra.mxu0 0.0
    %2334 = vmatprep.subr.mxu0 0.0
    %2335 = vmatpush1.msra.mxu0 0.0
    %2336 = vmatprep.subr.mxu0 0.0
    %2337 = vmatpush1.msra.mxu0 0.0
    %2338 = vmatprep.subr.mxu0 0.0
    %2339 = vmatpush1.msra.mxu0 0.0
    %2340 = vmatprep.subr.mxu0 0.0
    %2341 = vmatpush1.msra.mxu0 0.0
    %2342 = vmatprep.subr.mxu0 0.0
    %2343 = vmatpush1.msra.mxu0 0.0
    %2344 = vmatprep.subr.mxu0 0.0
    %2345 = vmatpush1.msra.mxu0 0.0
    %2346 = vmatprep.subr.mxu0 0.0
    %2347 = vmatpush1.msra.mxu0 0.0
    %2348 = vmatprep.subr.mxu0 0.0
    %2349 = vmatpush1.msra.mxu0 0.0
    %2350 = vmatprep.subr.mxu0 0.0
    %2351 = vmatpush1.msra.mxu0 0.0
    %2352 = vmatprep.subr.mxu0 0.0
    %2353 = vmatpush1.msra.mxu0 0.0
    %2354 = vmatprep.subr.mxu0 0.0
    %2355 = vmatpush1.msra.mxu0 0.0
    %2356 = vmatprep.subr.mxu0 0.0
    %2357 = vmatpush1.msra.mxu0 0.0
    %2358 = vmatprep.subr.mxu0 0.0
    %2359 = vmatpush1.msra.mxu0 0.0
    %2360 = vmatprep.subr.mxu0 0.0
    %2361 = vmatpush1.msra.mxu0 0.0
    %2362 = vmatprep.subr.mxu0 0.0
    %2363 = vmatpush1.msra.mxu0 0.0
    %2364 = vmatprep.mubr.f32.mxu0 0.0
    %2365 = vmatmul.mubr.f32.gmra.mrb[0].mxu0 0.0
    %v2366 = vpop.f32.mrb[0].mxu0
    %v2367 = vadd.f32 0.0, %v2366
    %v2368 = vpop.f32.mrb[0].mxu0
    %v2369 = vadd.f32 0.0, %v2368
    %2370 = vdwg.mxu0
    %2371 = vmatprep.subr.mxu0 %v2235
    %2372 = vmatpush1.msra.mxu0 %v2234
    %2373 = vmatprep.subr.mxu0 %v2239
    %2374 = vmatpush1.msra.mxu0 %v2238
    %2375 = vmatprep.subr.mxu0 %v2243
    %2376 = vmatpush1.msra.mxu0 %v2242
    %2377 = vmatprep.subr.mxu0 %v2247
    %2378 = vmatpush1.msra.mxu0 %v2246
    %2379 = vmatprep.subr.mxu0 %v2251
    %2380 = vmatpush1.msra.mxu0 %v2250
    %2381 = vmatprep.subr.mxu0 %v2255
    %2382 = vmatpush1.msra.mxu0 %v2254
    %2383 = vmatprep.subr.mxu0 %v2259
    %2384 = vmatpush1.msra.mxu0 %v2258
    %2385 = vmatprep.subr.mxu0 %v2263
    %2386 = vmatpush1.msra.mxu0 %v2262
    %2387 = vmatprep.subr.mxu0 %v2267
    %2388 = vmatpush1.msra.mxu0 %v2266
    %2389 = vmatprep.subr.mxu0 %v2271
    %2390 = vmatpush1.msra.mxu0 %v2270
    %2391 = vmatprep.subr.mxu0 %v2275
    %2392 = vmatpush1.msra.mxu0 %v2274
    %2393 = vmatprep.subr.mxu0 %v2279
    %2394 = vmatpush1.msra.mxu0 %v2278
    %2395 = vmatprep.subr.mxu0 %v2283
    %2396 = vmatpush1.msra.mxu0 %v2282
    %2397 = vmatprep.subr.mxu0 %v2287
    %2398 = vmatpush1.msra.mxu0 %v2286
    %2399 = vmatprep.subr.mxu0 %v2291
    %2400 = vmatpush1.msra.mxu0 %v2290
    %2401 = vmatprep.subr.mxu0 %v2295
    %2402 = vmatpush1.msra.mxu0 %v2294
    %2403 = vmatprep.subr.mxu0 0.0
    %2404 = vmatpush1.msra.mxu0 0.0
    %2405 = vmatprep.subr.mxu0 0.0
    %2406 = vmatpush1.msra.mxu0 0.0
    %2407 = vmatprep.subr.mxu0 0.0
    %2408 = vmatpush1.msra.mxu0 0.0
    %2409 = vmatprep.subr.mxu0 0.0
    %2410 = vmatpush1.msra.mxu0 0.0
    %2411 = vmatprep.subr.mxu0 0.0
    %2412 = vmatpush1.msra.mxu0 0.0
    %2413 = vmatprep.subr.mxu0 0.0
    %2414 = vmatpush1.msra.mxu0 0.0
    %2415 = vmatprep.subr.mxu0 0.0
    %2416 = vmatpush1.msra.mxu0 0.0
    %2417 = vmatprep.subr.mxu0 0.0
    %2418 = vmatpush1.msra.mxu0 0.0
    %2419 = vmatprep.subr.mxu0 0.0
    %2420 = vmatpush1.msra.mxu0 0.0
    %2421 = vmatprep.subr.mxu0 0.0
    %2422 = vmatpush1.msra.mxu0 0.0
    %2423 = vmatprep.subr.mxu0 0.0
    %2424 = vmatpush1.msra.mxu0 0.0
    %2425 = vmatprep.subr.mxu0 0.0
    %2426 = vmatpush1.msra.mxu0 0.0
    %2427 = vmatprep.subr.mxu0 0.0
    %2428 = vmatpush1.msra.mxu0 0.0
    %2429 = vmatprep.subr.mxu0 0.0
    %2430 = vmatpush1.msra.mxu0 0.0
    %2431 = vmatprep.subr.mxu0 0.0
    %2432 = vmatpush1.msra.mxu0 0.0
    %2433 = vmatprep.subr.mxu0 0.0
    %2434 = vmatpush1.msra.mxu0 0.0
    %2435 = vmatprep.mubr.f32.mxu0 0.0
    %2436 = vmatmul.mubr.f32.gmra.mrb[0].mxu0 0.0
    %v2437 = vpop.f32.mrb[0].mxu0
    %v2438 = vadd.f32 0.0, %v2437
    %v2439 = vpop.f32.mrb[0].mxu0
    %v2440 = vadd.f32 0.0, %v2439
    %2441 = vdwg.mxu0
    %v2442 = vadd.f32 %v2296, %v2367
    %v2443 = vadd.f32 %v2297, %v2369
    %v2444 = vadd.f32 %v2298, %v2438
    %v2445 = vadd.f32 %v2299, %v2440
    %v2446 = vxor.u32 %v2442, 2147483648
    %v2447 = vmul.f32 %v2446, 1.442695
    %v2448 = vpow.pop %v2447
    %v2449 = vadd.f32 %v2448, 1.0
    %v2450 = vrcp.pop %v2449
    %v2451 = vmul.f32 1.0, %v2450
    %v2452 = vxor.u32 %v2443, 2147483648
    %v2453 = vmul.f32 %v2452, 1.442695
    %v2454 = vpow.pop %v2453
    %v2455 = vadd.f32 %v2454, 1.0
    %v2456 = vrcp.pop %v2455
    %v2457 = vmul.f32 1.0, %v2456
    %v2458 = vtanh.pop %v2444
    %v2459 = vxor.u32 %v2445, 2147483648
    %v2460 = vmul.f32 %v2459, 1.442695
    %v2461 = vpow.pop %v2460
    %v2462 = vadd.f32 %v2461, 1.0
    %v2463 = vrcp.pop %v2462
    %v2464 = vmul.f32 1.0, %v2463
    %v2465 = vmul.f32 %v2457, 0.0
    %v2466 = vmul.f32 %v2451, %v2458
    %v2467 = vadd.f32 %v2465, %v2466
    %v2468 = vtanh.pop %v2467
    %v2469 = vmul.f32 %v2464, %v2468
    %2470 = vst [vmem:[#allocation3] sm:$0xff] %v2469
    %v2471 = vld [vmem:[#allocation2 + $0x20] sm:$0xff]
    %v2472 = vld [vmem:[#allocation2 + $0x28] sm:$0xff]
    %v2473 = vld [vmem:[#allocation2 + $0x30] sm:$0xff]
    %v2474 = vld [vmem:[#allocation2 + $0x38] sm:$0xff]
    %2475 = vmatprep.subr.mxu0 %v2233
    %2476 = vmatpush1.msra.mxu0 %v2232
    %2477 = vmatprep.subr.mxu0 %v2237
    %2478 = vmatpush1.msra.mxu0 %v2236
    %2479 = vmatprep.subr.mxu0 %v2241
    %2480 = vmatpush1.msra.mxu0 %v2240
    %2481 = vmatprep.subr.mxu0 %v2245
    %2482 = vmatpush1.msra.mxu0 %v2244
    %2483 = vmatprep.subr.mxu0 %v2249
    %2484 = vmatpush1.msra.mxu0 %v2248
    %2485 = vmatprep.subr.mxu0 %v2253
    %2486 = vmatpush1.msra.mxu0 %v2252
    %2487 = vmatprep.subr.mxu0 %v2257
    %2488 = vmatpush1.msra.mxu0 %v2256
    %2489 = vmatprep.subr.mxu0 %v2261
    %2490 = vmatpush1.msra.mxu0 %v2260
    %2491 = vmatprep.subr.mxu0 %v2265
    %2492 = vmatpush1.msra.mxu0 %v2264
    %2493 = vmatprep.subr.mxu0 %v2269
    %2494 = vmatpush1.msra.mxu0 %v2268
    %2495 = vmatprep.subr.mxu0 %v2273
    %2496 = vmatpush1.msra.mxu0 %v2272
    %2497 = vmatprep.subr.mxu0 %v2277
    %2498 = vmatpush1.msra.mxu0 %v2276
    %2499 = vmatprep.subr.mxu0 %v2281
    %2500 = vmatpush1.msra.mxu0 %v2280
    %2501 = vmatprep.subr.mxu0 %v2285
    %2502 = vmatpush1.msra.mxu0 %v2284
    %2503 = vmatprep.subr.mxu0 %v2289
    %2504 = vmatpush1.msra.mxu0 %v2288
    %2505 = vmatprep.subr.mxu0 %v2293
    %2506 = vmatpush1.msra.mxu0 %v2292
    %2507 = vmatprep.subr.mxu0 0.0
    %2508 = vmatpush1.msra.mxu0 0.0
    %2509 = vmatprep.subr.mxu0 0.0
    %2510 = vmatpush1.msra.mxu0 0.0
    %2511 = vmatprep.subr.mxu0 0.0
    %2512 = vmatpush1.msra.mxu0 0.0
    %2513 = vmatprep.subr.mxu0 0.0
    %2514 = vmatpush1.msra.mxu0 0.0
    %2515 = vmatprep.subr.mxu0 0.0
    %2516 = vmatpush1.msra.mxu0 0.0
    %2517 = vmatprep.subr.mxu0 0.0
    %2518 = vmatpush1.msra.mxu0 0.0
    %2519 = vmatprep.subr.mxu0 0.0
    %2520 = vmatpush1.msra.mxu0 0.0
    %2521 = vmatprep.subr.mxu0 0.0
    %2522 = vmatpush1.msra.mxu0 0.0
    %2523 = vmatprep.subr.mxu0 0.0
    %2524 = vmatpush1.msra.mxu0 0.0
    %2525 = vmatprep.subr.mxu0 0.0
    %2526 = vmatpush1.msra.mxu0 0.0
    %2527 = vmatprep.subr.mxu0 0.0
    %2528 = vmatpush1.msra.mxu0 0.0
    %2529 = vmatprep.subr.mxu0 0.0
    %2530 = vmatpush1.msra.mxu0 0.0
    %2531 = vmatprep.subr.mxu0 0.0
    %2532 = vmatpush1.msra.mxu0 0.0
    %2533 = vmatprep.subr.mxu0 0.0
    %2534 = vmatpush1.msra.mxu0 0.0
    %2535 = vmatprep.subr.mxu0 0.0
    %2536 = vmatpush1.msra.mxu0 0.0
    %2537 = vmatprep.subr.mxu0 0.0
    %2538 = vmatpush1.msra.mxu0 0.0
    %2539 = vmatprep.mubr.f32.mxu0 0.0
    %2540 = vmatmul.mubr.f32.gmra.mrb[0].mxu0 %v2469
    %v2541 = vpop.f32.mrb[0].mxu0
    %v2542 = vadd.f32 0.0, %v2541
    %v2543 = vpop.f32.mrb[0].mxu0
    %v2544 = vadd.f32 0.0, %v2543
    %2545 = vdwg.mxu0
    %2546 = vmatprep.subr.mxu0 %v2235
    %2547 = vmatpush1.msra.mxu0 %v2234
    %2548 = vmatprep.subr.mxu0 %v2239
    %2549 = vmatpush1.msra.mxu0 %v2238
    %2550 = vmatprep.subr.mxu0 %v2243
    %2551 = vmatpush1.msra.mxu0 %v2242
    %2552 = vmatprep.subr.mxu0 %v2247
    %2553 = vmatpush1.msra.mxu0 %v2246
    %2554 = vmatprep.subr.mxu0 %v2251
    %2555 = vmatpush1.msra.mxu0 %v2250
    %2556 = vmatprep.subr.mxu0 %v2255
    %2557 = vmatpush1.msra.mxu0 %v2254
    %2558 = vmatprep.subr.mxu0 %v2259
    %2559 = vmatpush1.msra.mxu0 %v2258
    %2560 = vmatprep.subr.mxu0 %v2263
    %2561 = vmatpush1.msra.mxu0 %v2262
    %2562 = vmatprep.subr.mxu0 %v2267
    %2563 = vmatpush1.msra.mxu0 %v2266
    %2564 = vmatprep.subr.mxu0 %v2271
    %2565 = vmatpush1.msra.mxu0 %v2270
    %2566 = vmatprep.subr.mxu0 %v2275
    %2567 = vmatpush1.msra.mxu0 %v2274
    %2568 = vmatprep.subr.mxu0 %v2279
    %2569 = vmatpush1.msra.mxu0 %v2278
    %2570 = vmatprep.subr.mxu0 %v2283
    %2571 = vmatpush1.msra.mxu0 %v2282
    %2572 = vmatprep.subr.mxu0 %v2287
    %2573 = vmatpush1.msra.mxu0 %v2286
    %2574 = vmatprep.subr.mxu0 %v2291
    %2575 = vmatpush1.msra.mxu0 %v2290
    %2576 = vmatprep.subr.mxu0 %v2295
    %2577 = vmatpush1.msra.mxu0 %v2294
    %2578 = vmatprep.subr.mxu0 0.0
    %2579 = vmatpush1.msra.mxu0 0.0
    %2580 = vmatprep.subr.mxu0 0.0
    %2581 = vmatpush1.msra.mxu0 0.0
    %2582 = vmatprep.subr.mxu0 0.0
    %2583 = vmatpush1.msra.mxu0 0.0
    %2584 = vmatprep.subr.mxu0 0.0
    %2585 = vmatpush1.msra.mxu0 0.0
    %2586 = vmatprep.subr.mxu0 0.0
    %2587 = vmatpush1.msra.mxu0 0.0
    %2588 = vmatprep.subr.mxu0 0.0
    %2589 = vmatpush1.msra.mxu0 0.0
    %2590 = vmatprep.subr.mxu0 0.0
    %2591 = vmatpush1.msra.mxu0 0.0
    %2592 = vmatprep.subr.mxu0 0.0
    %2593 = vmatpush1.msra.mxu0 0.0
    %2594 = vmatprep.subr.mxu0 0.0
    %2595 = vmatpush1.msra.mxu0 0.0
    %2596 = vmatprep.subr.mxu0 0.0
    %2597 = vmatpush1.msra.mxu0 0.0
    %2598 = vmatprep.subr.mxu0 0.0
    %2599 = vmatpush1.msra.mxu0 0.0
    %2600 = vmatprep.subr.mxu0 0.0
    %2601 = vmatpush1.msra.mxu0 0.0
    %2602 = vmatprep.subr.mxu0 0.0
    %2603 = vmatpush1.msra.mxu0 0.0
    %2604 = vmatprep.subr.mxu0 0.0
    %2605 = vmatpush1.msra.mxu0 0.0
    %2606 = vmatprep.subr.mxu0 0.0
    %2607 = vmatpush1.msra.mxu0 0.0
    %2608 = vmatprep.subr.mxu0 0.0
    %2609 = vmatpush1.msra.mxu0 0.0
    %2610 = vmatprep.mubr.f32.mxu0 0.0
    %2611 = vmatmul.mubr.f32.gmra.mrb[0].mxu0 %v2469
    %v2612 = vpop.f32.mrb[0].mxu0
    %v2613 = vadd.f32 0.0, %v2612
    %v2614 = vpop.f32.mrb[0].mxu0
    %v2615 = vadd.f32 0.0, %v2614
    %2616 = vdwg.mxu0
    %v2617 = vadd.f32 %v2471, %v2542
    %v2618 = vadd.f32 %v2472, %v2544
    %v2619 = vadd.f32 %v2473, %v2613
    %v2620 = vadd.f32 %v2474, %v2615
    %v2621 = vxor.u32 %v2617, 2147483648
    %v2622 = vmul.f32 %v2621, 1.442695
    %v2623 = vpow.pop %v2622
    %v2624 = vadd.f32 %v2623, 1.0
    %v2625 = vrcp.pop %v2624
    %v2626 = vmul.f32 1.0, %v2625
    %v2627 = vxor.u32 %v2618, 2147483648
    %v2628 = vmul.f32 %v2627, 1.442695
    %v2629 = vpow.pop %v2628
    %v2630 = vadd.f32 %v2629, 1.0
    %v2631 = vrcp.pop %v2630
    %v2632 = vmul.f32 1.0, %v2631
    %v2633 = vtanh.pop %v2619
    %v2634 = vxor.u32 %v2620, 2147483648
    %v2635 = vmul.f32 %v2634, 1.442695
    %v2636 = vpow.pop %v2635
    %v2637 = vadd.f32 %v2636, 1.0
    %v2638 = vrcp.pop %v2637
    %v2639 = vmul.f32 1.0, %v2638
    %v2640 = vmul.f32 %v2632, %v2467
    %v2641 = vmul.f32 %v2626, %v2633
    %v2642 = vadd.f32 %v2640, %v2641
    %v2643 = vtanh.pop %v2642
    %v2644 = vmul.f32 %v2639, %v2643
    %2645 = vst [vmem:[#allocation3 + $0x8] sm:$0xff] %v2644
    %v2646 = vld [vmem:[#allocation2 + $0x40] sm:$0xff]
    %v2647 = vld [vmem:[#allocation2 + $0x48] sm:$0xff]
    %v2648 = vld [vmem:[#allocation2 + $0x50] sm:$0xff]
    %v2649 = vld [vmem:[#allocation2 + $0x58] sm:$0xff]
    %2650 = vmatprep.subr.mxu0 %v2233
    %2651 = vmatpush1.msra.mxu0 %v2232
    %2652 = vmatprep.subr.mxu0 %v2237
    %2653 = vmatpush1.msra.mxu0 %v2236
    %2654 = vmatprep.subr.mxu0 %v2241
    %2655 = vmatpush1.msra.mxu0 %v2240
    %2656 = vmatprep.subr.mxu0 %v2245
    %2657 = vmatpush1.msra.mxu0 %v2244
    %2658 = vmatprep.subr.mxu0 %v2249
    %2659 = vmatpush1.msra.mxu0 %v2248
    %2660 = vmatprep.subr.mxu0 %v2253
    %2661 = vmatpush1.msra.mxu0 %v2252
    %2662 = vmatprep.subr.mxu0 %v2257
    %2663 = vmatpush1.msra.mxu0 %v2256
    %2664 = vmatprep.subr.mxu0 %v2261
    %2665 = vmatpush1.msra.mxu0 %v2260
    %2666 = vmatprep.subr.mxu0 %v2265
    %2667 = vmatpush1.msra.mxu0 %v2264
    %2668 = vmatprep.subr.mxu0 %v2269
    %2669 = vmatpush1.msra.mxu0 %v2268
    %2670 = vmatprep.subr.mxu0 %v2273
    %2671 = vmatpush1.msra.mxu0 %v2272
    %2672 = vmatprep.subr.mxu0 %v2277
    %2673 = vmatpush1.msra.mxu0 %v2276
    %2674 = vmatprep.subr.mxu0 %v2281
    %2675 = vmatpush1.msra.mxu0 %v2280
    %2676 = vmatprep.subr.mxu0 %v2285
    %2677 = vmatpush1.msra.mxu0 %v2284
    %2678 = vmatprep.subr.mxu0 %v2289
    %2679 = vmatpush1.msra.mxu0 %v2288
    %2680 = vmatprep.subr.mxu0 %v2293
    %2681 = vmatpush1.msra.mxu0 %v2292
    %2682 = vmatprep.subr.mxu0 0.0
    %2683 = vmatpush1.msra.mxu0 0.0
    %2684 = vmatprep.subr.mxu0 0.0
    %2685 = vmatpush1.msra.mxu0 0.0
    %2686 = vmatprep.subr.mxu0 0.0
    %2687 = vmatpush1.msra.mxu0 0.0
    %2688 = vmatprep.subr.mxu0 0.0
    %2689 = vmatpush1.msra.mxu0 0.0
    %2690 = vmatprep.subr.mxu0 0.0
    %2691 = vmatpush1.msra.mxu0 0.0
    %2692 = vmatprep.subr.mxu0 0.0
    %2693 = vmatpush1.msra.mxu0 0.0
    %2694 = vmatprep.subr.mxu0 0.0
    %2695 = vmatpush1.msra.mxu0 0.0
    %2696 = vmatprep.subr.mxu0 0.0
    %2697 = vmatpush1.msra.mxu0 0.0
    %2698 = vmatprep.subr.mxu0 0.0
    %2699 = vmatpush1.msra.mxu0 0.0
    %2700 = vmatprep.subr.mxu0 0.0
    %2701 = vmatpush1.msra.mxu0 0.0
    %2702 = vmatprep.subr.mxu0 0.0
    %2703 = vmatpush1.msra.mxu0 0.0
    %2704 = vmatprep.subr.mxu0 0.0
    %2705 = vmatpush1.msra.mxu0 0.0
    %2706 = vmatprep.subr.mxu0 0.0
    %2707 = vmatpush1.msra.mxu0 0.0
    %2708 = vmatprep.subr.mxu0 0.0
    %2709 = vmatpush1.msra.mxu0 0.0
    %2710 = vmatprep.subr.mxu0 0.0
    %2711 = vmatpush1.msra.mxu0 0.0
    %2712 = vmatprep.subr.mxu0 0.0
    %2713 = vmatpush1.msra.mxu0 0.0
    %2714 = vmatprep.mubr.f32.mxu0 0.0
    %2715 = vmatmul.mubr.f32.gmra.mrb[0].mxu0 %v2644
    %v2716 = vpop.f32.mrb[0].mxu0
    %v2717 = vadd.f32 0.0, %v2716
    %v2718 = vpop.f32.mrb[0].mxu0
    %v2719 = vadd.f32 0.0, %v2718
    %2720 = vdwg.mxu0
    %2721 = vmatprep.subr.mxu0 %v2235
    %2722 = vmatpush1.msra.mxu0 %v2234
    %2723 = vmatprep.subr.mxu0 %v2239
    %2724 = vmatpush1.msra.mxu0 %v2238
    %2725 = vmatprep.subr.mxu0 %v2243
    %2726 = vmatpush1.msra.mxu0 %v2242
    %2727 = vmatprep.subr.mxu0 %v2247
    %2728 = vmatpush1.msra.mxu0 %v2246
    %2729 = vmatprep.subr.mxu0 %v2251
    %2730 = vmatpush1.msra.mxu0 %v2250
    %2731 = vmatprep.subr.mxu0 %v2255
    %2732 = vmatpush1.msra.mxu0 %v2254
    %2733 = vmatprep.subr.mxu0 %v2259
    %2734 = vmatpush1.msra.mxu0 %v2258
    %2735 = vmatprep.subr.mxu0 %v2263
    %2736 = vmatpush1.msra.mxu0 %v2262
    %2737 = vmatprep.subr.mxu0 %v2267
    %2738 = vmatpush1.msra.mxu0 %v2266
    %2739 = vmatprep.subr.mxu0 %v2271
    %2740 = vmatpush1.msra.mxu0 %v2270
    %2741 = vmatprep.subr.mxu0 %v2275
    %2742 = vmatpush1.msra.mxu0 %v2274
    %2743 = vmatprep.subr.mxu0 %v2279
    %2744 = vmatpush1.msra.mxu0 %v2278
    %2745 = vmatprep.subr.mxu0 %v2283
    %2746 = vmatpush1.msra.mxu0 %v2282
    %2747 = vmatprep.subr.mxu0 %v2287
    %2748 = vmatpush1.msra.mxu0 %v2286
    %2749 = vmatprep.subr.mxu0 %v2291
    %2750 = vmatpush1.msra.mxu0 %v2290
    %2751 = vmatprep.subr.mxu0 %v2295
    %2752 = vmatpush1.msra.mxu0 %v2294
    %2753 = vmatprep.subr.mxu0 0.0
    %2754 = vmatpush1.msra.mxu0 0.0
    %2755 = vmatprep.subr.mxu0 0.0
    %2756 = vmatpush1.msra.mxu0 0.0
    %2757 = vmatprep.subr.mxu0 0.0
    %2758 = vmatpush1.msra.mxu0 0.0
    %2759 = vmatprep.subr.mxu0 0.0
    %2760 = vmatpush1.msra.mxu0 0.0
    %2761 = vmatprep.subr.mxu0 0.0
    %2762 = vmatpush1.msra.mxu0 0.0
    %2763 = vmatprep.subr.mxu0 0.0
    %2764 = vmatpush1.msra.mxu0 0.0
    %2765 = vmatprep.subr.mxu0 0.0
    %2766 = vmatpush1.msra.mxu0 0.0
    %2767 = vmatprep.subr.mxu0 0.0
    %2768 = vmatpush1.msra.mxu0 0.0
    %2769 = vmatprep.subr.mxu0 0.0
    %2770 = vmatpush1.msra.mxu0 0.0
    %2771 = vmatprep.subr.mxu0 0.0
    %2772 = vmatpush1.msra.mxu0 0.0
    %2773 = vmatprep.subr.mxu0 0.0
    %2774 = vmatpush1.msra.mxu0 0.0
    %2775 = vmatprep.subr.mxu0 0.0
    %2776 = vmatpush1.msra.mxu0 0.0
    %2777 = vmatprep.subr.mxu0 0.0
    %2778 = vmatpush1.msra.mxu0 0.0
    %2779 = vmatprep.subr.mxu0 0.0
    %2780 = vmatpush1.msra.mxu0 0.0
    %2781 = vmatprep.subr.mxu0 0.0
    %2782 = vmatpush1.msra.mxu0 0.0
    %2783 = vmatprep.subr.mxu0 0.0
    %2784 = vmatpush1.msra.mxu0 0.0
    %2785 = vmatprep.mubr.f32.mxu0 0.0
    %2786 = vmatmul.mubr.f32.gmra.mrb[0].mxu0 %v2644
    %v2787 = vpop.f32.mrb[0].mxu0
    %v2788 = vadd.f32 0.0, %v2787
    %v2789 = vpop.f32.mrb[0].mxu0
    %v2790 = vadd.f32 0.0, %v2789
    %2791 = vdwg.mxu0
    %v2792 = vadd.f32 %v2646, %v2717
    %v2793 = vadd.f32 %v2647, %v2719
    %v2794 = vadd.f32 %v2648, %v2788
    %v2795 = vadd.f32 %v2649, %v2790
    %v2796 = vxor.u32 %v2792, 2147483648
    %v2797 = vmul.f32 %v2796, 1.442695
    %v2798 = vpow.pop %v2797
    %v2799 = vadd.f32 %v2798, 1.0
    %v2800 = vrcp.pop %v2799
    %v2801 = vmul.f32 1.0, %v2800
    %v2802 = vxor.u32 %v2793, 2147483648
    %v2803 = vmul.f32 %v2802, 1.442695
    %v2804 = vpow.pop %v2803
    %v2805 = vadd.f32 %v2804, 1.0
    %v2806 = vrcp.pop %v2805
    %v2807 = vmul.f32 1.0, %v2806
    %v2808 = vtanh.pop %v2794
    %v2809 = vxor.u32 %v2795, 2147483648
    %v2810 = vmul.f32 %v2809, 1.442695
    %v2811 = vpow.pop %v2810
    %v2812 = vadd.f32 %v2811, 1.0
    %v2813 = vrcp.pop %v2812
    %v2814 = vmul.f32 1.0, %v2813
    %v2815 = vmul.f32 %v2807, %v2642
    %v2816 = vmul.f32 %v2801, %v2808
    %v2817 = vadd.f32 %v2815, %v2816
    %v2818 = vtanh.pop %v2817
    %v2819 = vmul.f32 %v2814, %v2818
    %2820 = vst [vmem:[#allocation3 + $0x10] sm:$0xff] %v2819
    %v2821 = vld [vmem:[#allocation2 + $0x60] sm:$0xff]
    %v2822 = vld [vmem:[#allocation2 + $0x68] sm:$0xff]
    %v2823 = vld [vmem:[#allocation2 + $0x70] sm:$0xff]
    %v2824 = vld [vmem:[#allocation2 + $0x78] sm:$0xff]
    %2825 = vmatprep.subr.mxu0 %v2233
    %2826 = vmatpush1.msra.mxu0 %v2232
    %2827 = vmatprep.subr.mxu0 %v2237
    %2828 = vmatpush1.msra.mxu0 %v2236
    %2829 = vmatprep.subr.mxu0 %v2241
    %2830 = vmatpush1.msra.mxu0 %v2240
    %2831 = vmatprep.subr.mxu0 %v2245
    %2832 = vmatpush1.msra.mxu0 %v2244
    %2833 = vmatprep.subr.mxu0 %v2249
    %2834 = vmatpush1.msra.mxu0 %v2248
    %2835 = vmatprep.subr.mxu0 %v2253
    %2836 = vmatpush1.msra.mxu0 %v2252
    %2837 = vmatprep.subr.mxu0 %v2257
    %2838 = vmatpush1.msra.mxu0 %v2256
    %2839 = vmatprep.subr.mxu0 %v2261
    %2840 = vmatpush1.msra.mxu0 %v2260
    %2841 = vmatprep.subr.mxu0 %v2265
    %2842 = vmatpush1.msra.mxu0 %v2264
    %2843 = vmatprep.subr.mxu0 %v2269
    %2844 = vmatpush1.msra.mxu0 %v2268
    %2845 = vmatprep.subr.mxu0 %v2273
    %2846 = vmatpush1.msra.mxu0 %v2272
    %2847 = vmatprep.subr.mxu0 %v2277
    %2848 = vmatpush1.msra.mxu0 %v2276
    %2849 = vmatprep.subr.mxu0 %v2281
    %2850 = vmatpush1.msra.mxu0 %v2280
    %2851 = vmatprep.subr.mxu0 %v2285
    %2852 = vmatpush1.msra.mxu0 %v2284
    %2853 = vmatprep.subr.mxu0 %v2289
    %2854 = vmatpush1.msra.mxu0 %v2288
    %2855 = vmatprep.subr.mxu0 %v2293
    %2856 = vmatpush1.msra.mxu0 %v2292
    %2857 = vmatprep.subr.mxu0 0.0
    %2858 = vmatpush1.msra.mxu0 0.0
    %2859 = vmatprep.subr.mxu0 0.0
    %2860 = vmatpush1.msra.mxu0 0.0
    %2861 = vmatprep.subr.mxu0 0.0
    %2862 = vmatpush1.msra.mxu0 0.0
    %2863 = vmatprep.subr.mxu0 0.0
    %2864 = vmatpush1.msra.mxu0 0.0
    %2865 = vmatprep.subr.mxu0 0.0
    %2866 = vmatpush1.msra.mxu0 0.0
    %2867 = vmatprep.subr.mxu0 0.0
    %2868 = vmatpush1.msra.mxu0 0.0
    %2869 = vmatprep.subr.mxu0 0.0
    %2870 = vmatpush1.msra.mxu0 0.0
    %2871 = vmatprep.subr.mxu0 0.0
    %2872 = vmatpush1.msra.mxu0 0.0
    %2873 = vmatprep.subr.mxu0 0.0
    %2874 = vmatpush1.msra.mxu0 0.0
    %2875 = vmatprep.subr.mxu0 0.0
    %2876 = vmatpush1.msra.mxu0 0.0
    %2877 = vmatprep.subr.mxu0 0.0
    %2878 = vmatpush1.msra.mxu0 0.0
    %2879 = vmatprep.subr.mxu0 0.0
    %2880 = vmatpush1.msra.mxu0 0.0
    %2881 = vmatprep.subr.mxu0 0.0
    %2882 = vmatpush1.msra.mxu0 0.0
    %2883 = vmatprep.subr.mxu0 0.0
    %2884 = vmatpush1.msra.mxu0 0.0
    %2885 = vmatprep.subr.mxu0 0.0
    %2886 = vmatpush1.msra.mxu0 0.0
    %2887 = vmatprep.subr.mxu0 0.0
    %2888 = vmatpush1.msra.mxu0 0.0
    %2889 = vmatprep.mubr.f32.mxu0 0.0
    %2890 = vmatmul.mubr.f32.gmra.mrb[0].mxu0 %v2819
    %v2891 = vpop.f32.mrb[0].mxu0
    %v2892 = vadd.f32 0.0, %v2891
    %v2893 = vpop.f32.mrb[0].mxu0
    %v2894 = vadd.f32 0.0, %v2893
    %2895 = vdwg.mxu0
    %2896 = vmatprep.subr.mxu0 %v2235
    %2897 = vmatpush1.msra.mxu0 %v2234
    %2898 = vmatprep.subr.mxu0 %v2239
    %2899 = vmatpush1.msra.mxu0 %v2238
    %2900 = vmatprep.subr.mxu0 %v2243
    %2901 = vmatpush1.msra.mxu0 %v2242
    %2902 = vmatprep.subr.mxu0 %v2247
    %2903 = vmatpush1.msra.mxu0 %v2246
    %2904 = vmatprep.subr.mxu0 %v2251
    %2905 = vmatpush1.msra.mxu0 %v2250
    %2906 = vmatprep.subr.mxu0 %v2255
    %2907 = vmatpush1.msra.mxu0 %v2254
    %2908 = vmatprep.subr.mxu0 %v2259
    %2909 = vmatpush1.msra.mxu0 %v2258
    %2910 = vmatprep.subr.mxu0 %v2263
    %2911 = vmatpush1.msra.mxu0 %v2262
    %2912 = vmatprep.subr.mxu0 %v2267
    %2913 = vmatpush1.msra.mxu0 %v2266
    %2914 = vmatprep.subr.mxu0 %v2271
    %2915 = vmatpush1.msra.mxu0 %v2270
    %2916 = vmatprep.subr.mxu0 %v2275
    %2917 = vmatpush1.msra.mxu0 %v2274
    %2918 = vmatprep.subr.mxu0 %v2279
    %2919 = vmatpush1.msra.mxu0 %v2278
    %2920 = vmatprep.subr.mxu0 %v2283
    %2921 = vmatpush1.msra.mxu0 %v2282
    %2922 = vmatprep.subr.mxu0 %v2287
    %2923 = vmatpush1.msra.mxu0 %v2286
    %2924 = vmatprep.subr.mxu0 %v2291
    %2925 = vmatpush1.msra.mxu0 %v2290
    %2926 = vmatprep.subr.mxu0 %v2295
    %2927 = vmatpush1.msra.mxu0 %v2294
    %2928 = vmatprep.subr.mxu0 0.0
    %2929 = vmatpush1.msra.mxu0 0.0
    %2930 = vmatprep.subr.mxu0 0.0
    %2931 = vmatpush1.msra.mxu0 0.0
    %2932 = vmatprep.subr.mxu0 0.0
    %2933 = vmatpush1.msra.mxu0 0.0
    %2934 = vmatprep.subr.mxu0 0.0
    %2935 = vmatpush1.msra.mxu0 0.0
    %2936 = vmatprep.subr.mxu0 0.0
    %2937 = vmatpush1.msra.mxu0 0.0
    %2938 = vmatprep.subr.mxu0 0.0
    %2939 = vmatpush1.msra.mxu0 0.0
    %2940 = vmatprep.subr.mxu0 0.0
    %2941 = vmatpush1.msra.mxu0 0.0
    %2942 = vmatprep.subr.mxu0 0.0
    %2943 = vmatpush1.msra.mxu0 0.0
    %2944 = vmatprep.subr.mxu0 0.0
    %2945 = vmatpush1.msra.mxu0 0.0
    %2946 = vmatprep.subr.mxu0 0.0
    %2947 = vmatpush1.msra.mxu0 0.0
    %2948 = vmatprep.subr.mxu0 0.0
    %2949 = vmatpush1.msra.mxu0 0.0
    %2950 = vmatprep.subr.mxu0 0.0
    %2951 = vmatpush1.msra.mxu0 0.0
    %2952 = vmatprep.subr.mxu0 0.0
    %2953 = vmatpush1.msra.mxu0 0.0
    %2954 = vmatprep.subr.mxu0 0.0
    %2955 = vmatpush1.msra.mxu0 0.0
    %2956 = vmatprep.subr.mxu0 0.0
    %2957 = vmatpush1.msra.mxu0 0.0
    %2958 = vmatprep.subr.mxu0 0.0
    %2959 = vmatpush1.msra.mxu0 0.0
    %2960 = vmatprep.mubr.f32.mxu0 0.0
    %2961 = vmatmul.mubr.f32.gmra.mrb[0].mxu0 %v2819
    %v2962 = vpop.f32.mrb[0].mxu0
    %v2963 = vadd.f32 0.0, %v2962
    %v2964 = vpop.f32.mrb[0].mxu0
    %v2965 = vadd.f32 0.0, %v2964
    %2966 = vdwg.mxu0
    %v2967 = vadd.f32 %v2821, %v2892
    %v2968 = vadd.f32 %v2822, %v2894
    %v2969 = vadd.f32 %v2823, %v2963
    %v2970 = vadd.f32 %v2824, %v2965
    %v2971 = vxor.u32 %v2967, 2147483648
    %v2972 = vmul.f32 %v2971, 1.442695
    %v2973 = vpow.pop %v2972
    %v2974 = vadd.f32 %v2973, 1.0
    %v2975 = vrcp.pop %v2974
    %v2976 = vmul.f32 1.0, %v2975
    %v2977 = vxor.u32 %v2968, 2147483648
    %v2978 = vmul.f32 %v2977, 1.442695
    %v2979 = vpow.pop %v2978
    %v2980 = vadd.f32 %v2979, 1.0
    %v2981 = vrcp.pop %v2980
    %v2982 = vmul.f32 1.0, %v2981
    %v2983 = vtanh.pop %v2969
    %v2984 = vxor.u32 %v2970, 2147483648
    %v2985 = vmul.f32 %v2984, 1.442695
    %v2986 = vpow.pop %v2985
    %v2987 = vadd.f32 %v2986, 1.0
    %v2988 = vrcp.pop %v2987
    %v2989 = vmul.f32 1.0, %v2988
    %v2990 = vmul.f32 %v2982, %v2817
    %v2991 = vmul.f32 %v2976, %v2983
    %v2992 = vadd.f32 %v2990, %v2991
    %v2993 = vtanh.pop %v2992
    %v2994 = vmul.f32 %v2989, %v2993
    %2995 = vst [vmem:[#allocation3 + $0x18] sm:$0xff] %v2994
    %v2996 = vld [vmem:[#allocation2 + $0x80] sm:$0xff]
    %v2997 = vld [vmem:[#allocation2 + $0x88] sm:$0xff]
    %v2998 = vld [vmem:[#allocation2 + $0x90] sm:$0xff]
    %v2999 = vld [vmem:[#allocation2 + $0x98] sm:$0xff]
    %3000 = vmatprep.subr.mxu0 %v2233
    %3001 = vmatpush1.msra.mxu0 %v2232
    %3002 = vmatprep.subr.mxu0 %v2237
    %3003 = vmatpush1.msra.mxu0 %v2236
    %3004 = vmatprep.subr.mxu0 %v2241
    %3005 = vmatpush1.msra.mxu0 %v2240
    %3006 = vmatprep.subr.mxu0 %v2245
    %3007 = vmatpush1.msra.mxu0 %v2244
    %3008 = vmatprep.subr.mxu0 %v2249
    %3009 = vmatpush1.msra.mxu0 %v2248
    %3010 = vmatprep.subr.mxu0 %v2253
    %3011 = vmatpush1.msra.mxu0 %v2252
    %3012 = vmatprep.subr.mxu0 %v2257
    %3013 = vmatpush1.msra.mxu0 %v2256
    %3014 = vmatprep.subr.mxu0 %v2261
    %3015 = vmatpush1.msra.mxu0 %v2260
    %3016 = vmatprep.subr.mxu0 %v2265
    %3017 = vmatpush1.msra.mxu0 %v2264
    %3018 = vmatprep.subr.mxu0 %v2269
    %3019 = vmatpush1.msra.mxu0 %v2268
    %3020 = vmatprep.subr.mxu0 %v2273
    %3021 = vmatpush1.msra.mxu0 %v2272
    %3022 = vmatprep.subr.mxu0 %v2277
    %3023 = vmatpush1.msra.mxu0 %v2276
    %3024 = vmatprep.subr.mxu0 %v2281
    %3025 = vmatpush1.msra.mxu0 %v2280
    %3026 = vmatprep.subr.mxu0 %v2285
    %3027 = vmatpush1.msra.mxu0 %v2284
    %3028 = vmatprep.subr.mxu0 %v2289
    %3029 = vmatpush1.msra.mxu0 %v2288
    %3030 = vmatprep.subr.mxu0 %v2293
    %3031 = vmatpush1.msra.mxu0 %v2292
    %3032 = vmatprep.subr.mxu0 0.0
    %3033 = vmatpush1.msra.mxu0 0.0
    %3034 = vmatprep.subr.mxu0 0.0
    %3035 = vmatpush1.msra.mxu0 0.0
    %3036 = vmatprep.subr.mxu0 0.0
    %3037 = vmatpush1.msra.mxu0 0.0
    %3038 = vmatprep.subr.mxu0 0.0
    %3039 = vmatpush1.msra.mxu0 0.0
    %3040 = vmatprep.subr.mxu0 0.0
    %3041 = vmatpush1.msra.mxu0 0.0
    %3042 = vmatprep.subr.mxu0 0.0
    %3043 = vmatpush1.msra.mxu0 0.0
    %3044 = vmatprep.subr.mxu0 0.0
    %3045 = vmatpush1.msra.mxu0 0.0
    %3046 = vmatprep.subr.mxu0 0.0
    %3047 = vmatpush1.msra.mxu0 0.0
    %3048 = vmatprep.subr.mxu0 0.0
    %3049 = vmatpush1.msra.mxu0 0.0
    %3050 = vmatprep.subr.mxu0 0.0
    %3051 = vmatpush1.msra.mxu0 0.0
    %3052 = vmatprep.subr.mxu0 0.0
    %3053 = vmatpush1.msra.mxu0 0.0
    %3054 = vmatprep.subr.mxu0 0.0
    %3055 = vmatpush1.msra.mxu0 0.0
    %3056 = vmatprep.subr.mxu0 0.0
    %3057 = vmatpush1.msra.mxu0 0.0
    %3058 = vmatprep.subr.mxu0 0.0
    %3059 = vmatpush1.msra.mxu0 0.0
    %3060 = vmatprep.subr.mxu0 0.0
    %3061 = vmatpush1.msra.mxu0 0.0
    %3062 = vmatprep.subr.mxu0 0.0
    %3063 = vmatpush1.msra.mxu0 0.0
    %3064 = vmatprep.mubr.f32.mxu0 0.0
    %3065 = vmatmul.mubr.f32.gmra.mrb[0].mxu0 %v2994
    %v3066 = vpop.f32.mrb[0].mxu0
    %v3067 = vadd.f32 0.0, %v3066
    %v3068 = vpop.f32.mrb[0].mxu0
    %v3069 = vadd.f32 0.0, %v3068
    %3070 = vdwg.mxu0
    %3071 = vmatprep.subr.mxu0 %v2235
    %3072 = vmatpush1.msra.mxu0 %v2234
    %3073 = vmatprep.subr.mxu0 %v2239
    %3074 = vmatpush1.msra.mxu0 %v2238
    %3075 = vmatprep.subr.mxu0 %v2243
    %3076 = vmatpush1.msra.mxu0 %v2242
    %3077 = vmatprep.subr.mxu0 %v2247
    %3078 = vmatpush1.msra.mxu0 %v2246
    %3079 = vmatprep.subr.mxu0 %v2251
    %3080 = vmatpush1.msra.mxu0 %v2250
    %3081 = vmatprep.subr.mxu0 %v2255
    %3082 = vmatpush1.msra.mxu0 %v2254
    %3083 = vmatprep.subr.mxu0 %v2259
    %3084 = vmatpush1.msra.mxu0 %v2258
    %3085 = vmatprep.subr.mxu0 %v2263
    %3086 = vmatpush1.msra.mxu0 %v2262
    %3087 = vmatprep.subr.mxu0 %v2267
    %3088 = vmatpush1.msra.mxu0 %v2266
    %3089 = vmatprep.subr.mxu0 %v2271
    %3090 = vmatpush1.msra.mxu0 %v2270
    %3091 = vmatprep.subr.mxu0 %v2275
    %3092 = vmatpush1.msra.mxu0 %v2274
    %3093 = vmatprep.subr.mxu0 %v2279
    %3094 = vmatpush1.msra.mxu0 %v2278
    %3095 = vmatprep.subr.mxu0 %v2283
    %3096 = vmatpush1.msra.mxu0 %v2282
    %3097 = vmatprep.subr.mxu0 %v2287
    %3098 = vmatpush1.msra.mxu0 %v2286
    %3099 = vmatprep.subr.mxu0 %v2291
    %3100 = vmatpush1.msra.mxu0 %v2290
    %3101 = vmatprep.subr.mxu0 %v2295
    %3102 = vmatpush1.msra.mxu0 %v2294
    %3103 = vmatprep.subr.mxu0 0.0
    %3104 = vmatpush1.msra.mxu0 0.0
    %3105 = vmatprep.subr.mxu0 0.0
    %3106 = vmatpush1.msra.mxu0 0.0
    %3107 = vmatprep.subr.mxu0 0.0
    %3108 = vmatpush1.msra.mxu0 0.0
    %3109 = vmatprep.subr.mxu0 0.0
    %3110 = vmatpush1.msra.mxu0 0.0
    %3111 = vmatprep.subr.mxu0 0.0
    %3112 = vmatpush1.msra.mxu0 0.0
    %3113 = vmatprep.subr.mxu0 0.0
    %3114 = vmatpush1.msra.mxu0 0.0
    %3115 = vmatprep.subr.mxu0 0.0
    %3116 = vmatpush1.msra.mxu0 0.0
    %3117 = vmatprep.subr.mxu0 0.0
    %3118 = vmatpush1.msra.mxu0 0.0
    %3119 = vmatprep.subr.mxu0 0.0
    %3120 = vmatpush1.msra.mxu0 0.0
    %3121 = vmatprep.subr.mxu0 0.0
    %3122 = vmatpush1.msra.mxu0 0.0
    %3123 = vmatprep.subr.mxu0 0.0
    %3124 = vmatpush1.msra.mxu0 0.0
    %3125 = vmatprep.subr.mxu0 0.0
    %3126 = vmatpush1.msra.mxu0 0.0
    %3127 = vmatprep.subr.mxu0 0.0
    %3128 = vmatpush1.msra.mxu0 0.0
    %3129 = vmatprep.subr.mxu0 0.0
    %3130 = vmatpush1.msra.mxu0 0.0
    %3131 = vmatprep.subr.mxu0 0.0
    %3132 = vmatpush1.msra.mxu0 0.0
    %3133 = vmatprep.subr.mxu0 0.0
    %3134 = vmatpush1.msra.mxu0 0.0
    %3135 = vmatprep.mubr.f32.mxu0 0.0
    %3136 = vmatmul.mubr.f32.gmra.mrb[0].mxu0 %v2994
    %v3137 = vpop.f32.mrb[0].mxu0
    %v3138 = vadd.f32 0.0, %v3137
    %v3139 = vpop.f32.mrb[0].mxu0
    %v3140 = vadd.f32 0.0, %v3139
    %3141 = vdwg.mxu0
    %v3142 = vadd.f32 %v2996, %v3067
    %v3143 = vadd.f32 %v2997, %v3069
    %v3144 = vadd.f32 %v2998, %v3138
    %v3145 = vadd.f32 %v2999, %v3140
    %v3146 = vxor.u32 %v3142, 2147483648
    %v3147 = vmul.f32 %v3146, 1.442695
    %v3148 = vpow.pop %v3147
    %v3149 = vadd.f32 %v3148, 1.0
    %v3150 = vrcp.pop %v3149
    %v3151 = vmul.f32 1.0, %v3150
    %v3152 = vxor.u32 %v3143, 2147483648
    %v3153 = vmul.f32 %v3152, 1.442695
    %v3154 = vpow.pop %v3153
    %v3155 = vadd.f32 %v3154, 1.0
    %v3156 = vrcp.pop %v3155
    %v3157 = vmul.f32 1.0, %v3156
    %v3158 = vtanh.pop %v3144
    %v3159 = vxor.u32 %v3145, 2147483648
    %v3160 = vmul.f32 %v3159, 1.442695
    %v3161 = vpow.pop %v3160
    %v3162 = vadd.f32 %v3161, 1.0
    %v3163 = vrcp.pop %v3162
    %v3164 = vmul.f32 1.0, %v3163
    %v3165 = vmul.f32 %v3157, %v2992
    %v3166 = vmul.f32 %v3151, %v3158
    %v3167 = vadd.f32 %v3165, %v3166
    %v3168 = vtanh.pop %v3167
    %v3169 = vmul.f32 %v3164, %v3168
    %3170 = vst [vmem:[#allocation3 + $0x20] sm:$0xff] %v3169
    %v3171 = vld [vmem:[#allocation2 + $0xa0] sm:$0xff]
    %v3172 = vld [vmem:[#allocation2 + $0xa8] sm:$0xff]
    %v3173 = vld [vmem:[#allocation2 + $0xb0] sm:$0xff]
    %v3174 = vld [vmem:[#allocation2 + $0xb8] sm:$0xff]
    %3175 = vmatprep.subr.mxu0 %v2233
    %3176 = vmatpush1.msra.mxu0 %v2232
    %3177 = vmatprep.subr.mxu0 %v2237
    %3178 = vmatpush1.msra.mxu0 %v2236
    %3179 = vmatprep.subr.mxu0 %v2241
    %3180 = vmatpush1.msra.mxu0 %v2240
    %3181 = vmatprep.subr.mxu0 %v2245
    %3182 = vmatpush1.msra.mxu0 %v2244
    %3183 = vmatprep.subr.mxu0 %v2249
    %3184 = vmatpush1.msra.mxu0 %v2248
    %3185 = vmatprep.subr.mxu0 %v2253
    %3186 = vmatpush1.msra.mxu0 %v2252
    %3187 = vmatprep.subr.mxu0 %v2257
    %3188 = vmatpush1.msra.mxu0 %v2256
    %3189 = vmatprep.subr.mxu0 %v2261
    %3190 = vmatpush1.msra.mxu0 %v2260
    %3191 = vmatprep.subr.mxu0 %v2265
    %3192 = vmatpush1.msra.mxu0 %v2264
    %3193 = vmatprep.subr.mxu0 %v2269
    %3194 = vmatpush1.msra.mxu0 %v2268
    %3195 = vmatprep.subr.mxu0 %v2273
    %3196 = vmatpush1.msra.mxu0 %v2272
    %3197 = vmatprep.subr.mxu0 %v2277
    %3198 = vmatpush1.msra.mxu0 %v2276
    %3199 = vmatprep.subr.mxu0 %v2281
    %3200 = vmatpush1.msra.mxu0 %v2280
    %3201 = vmatprep.subr.mxu0 %v2285
    %3202 = vmatpush1.msra.mxu0 %v2284
    %3203 = vmatprep.subr.mxu0 %v2289
    %3204 = vmatpush1.msra.mxu0 %v2288
    %3205 = vmatprep.subr.mxu0 %v2293
    %3206 = vmatpush1.msra.mxu0 %v2292
    %3207 = vmatprep.subr.mxu0 0.0
    %3208 = vmatpush1.msra.mxu0 0.0
    %3209 = vmatprep.subr.mxu0 0.0
    %3210 = vmatpush1.msra.mxu0 0.0
    %3211 = vmatprep.subr.mxu0 0.0
    %3212 = vmatpush1.msra.mxu0 0.0
    %3213 = vmatprep.subr.mxu0 0.0
    %3214 = vmatpush1.msra.mxu0 0.0
    %3215 = vmatprep.subr.mxu0 0.0
    %3216 = vmatpush1.msra.mxu0 0.0
    %3217 = vmatprep.subr.mxu0 0.0
    %3218 = vmatpush1.msra.mxu0 0.0
    %3219 = vmatprep.subr.mxu0 0.0
    %3220 = vmatpush1.msra.mxu0 0.0
    %3221 = vmatprep.subr.mxu0 0.0
    %3222 = vmatpush1.msra.mxu0 0.0
    %3223 = vmatprep.subr.mxu0 0.0
    %3224 = vmatpush1.msra.mxu0 0.0
    %3225 = vmatprep.subr.mxu0 0.0
    %3226 = vmatpush1.msra.mxu0 0.0
    %3227 = vmatprep.subr.mxu0 0.0
    %3228 = vmatpush1.msra.mxu0 0.0
    %3229 = vmatprep.subr.mxu0 0.0
    %3230 = vmatpush1.msra.mxu0 0.0
    %3231 = vmatprep.subr.mxu0 0.0
    %3232 = vmatpush1.msra.mxu0 0.0
    %3233 = vmatprep.subr.mxu0 0.0
    %3234 = vmatpush1.msra.mxu0 0.0
    %3235 = vmatprep.subr.mxu0 0.0
    %3236 = vmatpush1.msra.mxu0 0.0
    %3237 = vmatprep.subr.mxu0 0.0
    %3238 = vmatpush1.msra.mxu0 0.0
    %3239 = vmatprep.mubr.f32.mxu0 0.0
    %3240 = vmatmul.mubr.f32.gmra.mrb[0].mxu0 %v3169
    %v3241 = vpop.f32.mrb[0].mxu0
    %v3242 = vadd.f32 0.0, %v3241
    %v3243 = vpop.f32.mrb[0].mxu0
    %v3244 = vadd.f32 0.0, %v3243
    %3245 = vdwg.mxu0
    %3246 = vmatprep.subr.mxu0 %v2235
    %3247 = vmatpush1.msra.mxu0 %v2234
    %3248 = vmatprep.subr.mxu0 %v2239
    %3249 = vmatpush1.msra.mxu0 %v2238
    %3250 = vmatprep.subr.mxu0 %v2243
    %3251 = vmatpush1.msra.mxu0 %v2242
    %3252 = vmatprep.subr.mxu0 %v2247
    %3253 = vmatpush1.msra.mxu0 %v2246
    %3254 = vmatprep.subr.mxu0 %v2251
    %3255 = vmatpush1.msra.mxu0 %v2250
    %3256 = vmatprep.subr.mxu0 %v2255
    %3257 = vmatpush1.msra.mxu0 %v2254
    %3258 = vmatprep.subr.mxu0 %v2259
    %3259 = vmatpush1.msra.mxu0 %v2258
    %3260 = vmatprep.subr.mxu0 %v2263
    %3261 = vmatpush1.msra.mxu0 %v2262
    %3262 = vmatprep.subr.mxu0 %v2267
    %3263 = vmatpush1.msra.mxu0 %v2266
    %3264 = vmatprep.subr.mxu0 %v2271
    %3265 = vmatpush1.msra.mxu0 %v2270
    %3266 = vmatprep.subr.mxu0 %v2275
    %3267 = vmatpush1.msra.mxu0 %v2274
    %3268 = vmatprep.subr.mxu0 %v2279
    %3269 = vmatpush1.msra.mxu0 %v2278
    %3270 = vmatprep.subr.mxu0 %v2283
    %3271 = vmatpush1.msra.mxu0 %v2282
    %3272 = vmatprep.subr.mxu0 %v2287
    %3273 = vmatpush1.msra.mxu0 %v2286
    %3274 = vmatprep.subr.mxu0 %v2291
    %3275 = vmatpush1.msra.mxu0 %v2290
    %3276 = vmatprep.subr.mxu0 %v2295
    %3277 = vmatpush1.msra.mxu0 %v2294
    %3278 = vmatprep.subr.mxu0 0.0
    %3279 = vmatpush1.msra.mxu0 0.0
    %3280 = vmatprep.subr.mxu0 0.0
    %3281 = vmatpush1.msra.mxu0 0.0
    %3282 = vmatprep.subr.mxu0 0.0
    %3283 = vmatpush1.msra.mxu0 0.0
    %3284 = vmatprep.subr.mxu0 0.0
    %3285 = vmatpush1.msra.mxu0 0.0
    %3286 = vmatprep.subr.mxu0 0.0
    %3287 = vmatpush1.msra.mxu0 0.0
    %3288 = vmatprep.subr.mxu0 0.0
    %3289 = vmatpush1.msra.mxu0 0.0
    %3290 = vmatprep.subr.mxu0 0.0
    %3291 = vmatpush1.msra.mxu0 0.0
    %3292 = vmatprep.subr.mxu0 0.0
    %3293 = vmatpush1.msra.mxu0 0.0
    %3294 = vmatprep.subr.mxu0 0.0
    %3295 = vmatpush1.msra.mxu0 0.0
    %3296 = vmatprep.subr.mxu0 0.0
    %3297 = vmatpush1.msra.mxu0 0.0
    %3298 = vmatprep.subr.mxu0 0.0
    %3299 = vmatpush1.msra.mxu0 0.0
    %3300 = vmatprep.subr.mxu0 0.0
    %3301 = vmatpush1.msra.mxu0 0.0
    %3302 = vmatprep.subr.mxu0 0.0
    %3303 = vmatpush1.msra.mxu0 0.0
    %3304 = vmatprep.subr.mxu0 0.0
    %3305 = vmatpush1.msra.mxu0 0.0
    %3306 = vmatprep.subr.mxu0 0.0
    %3307 = vmatpush1.msra.mxu0 0.0
    %3308 = vmatprep.subr.mxu0 0.0
    %3309 = vmatpush1.msra.mxu0 0.0
    %3310 = vmatprep.mubr.f32.mxu0 0.0
    %3311 = vmatmul.mubr.f32.gmra.mrb[0].mxu0 %v3169
    %v3312 = vpop.f32.mrb[0].mxu0
    %v3313 = vadd.f32 0.0, %v3312
    %v3314 = vpop.f32.mrb[0].mxu0
    %v3315 = vadd.f32 0.0, %v3314
    %3316 = vdwg.mxu0
    %v3317 = vadd.f32 %v3171, %v3242
    %v3318 = vadd.f32 %v3172, %v3244
    %v3319 = vadd.f32 %v3173, %v3313
    %v3320 = vadd.f32 %v3174, %v3315
    %v3321 = vxor.u32 %v3317, 2147483648
    %v3322 = vmul.f32 %v3321, 1.442695
    %v3323 = vpow.pop %v3322
    %v3324 = vadd.f32 %v3323, 1.0
    %v3325 = vrcp.pop %v3324
    %v3326 = vmul.f32 1.0, %v3325
    %v3327 = vxor.u32 %v3318, 2147483648
    %v3328 = vmul.f32 %v3327, 1.442695
    %v3329 = vpow.pop %v3328
    %v3330 = vadd.f32 %v3329, 1.0
    %v3331 = vrcp.pop %v3330
    %v3332 = vmul.f32 1.0, %v3331
    %v3333 = vtanh.pop %v3319
    %v3334 = vxor.u32 %v3320, 2147483648
    %v3335 = vmul.f32 %v3334, 1.442695
    %v3336 = vpow.pop %v3335
    %v3337 = vadd.f32 %v3336, 1.0
    %v3338 = vrcp.pop %v3337
    %v3339 = vmul.f32 1.0, %v3338
    %v3340 = vmul.f32 %v3332, %v3167
    %v3341 = vmul.f32 %v3326, %v3333
    %v3342 = vadd.f32 %v3340, %v3341
    %v3343 = vtanh.pop %v3342
    %v3344 = vmul.f32 %v3339, %v3343
    %3345 = vst [vmem:[#allocation3 + $0x28] sm:$0xff] %v3344
    %v3346 = vld [vmem:[#allocation2 + $0xc0] sm:$0xff]
    %v3347 = vld [vmem:[#allocation2 + $0xc8] sm:$0xff]
    %v3348 = vld [vmem:[#allocation2 + $0xd0] sm:$0xff]
    %v3349 = vld [vmem:[#allocation2 + $0xd8] sm:$0xff]
    %3350 = vmatprep.subr.mxu0 %v2233
    %3351 = vmatpush1.msra.mxu0 %v2232
    %3352 = vmatprep.subr.mxu0 %v2237
    %3353 = vmatpush1.msra.mxu0 %v2236
    %3354 = vmatprep.subr.mxu0 %v2241
    %3355 = vmatpush1.msra.mxu0 %v2240
    %3356 = vmatprep.subr.mxu0 %v2245
    %3357 = vmatpush1.msra.mxu0 %v2244
    %3358 = vmatprep.subr.mxu0 %v2249
    %3359 = vmatpush1.msra.mxu0 %v2248
    %3360 = vmatprep.subr.mxu0 %v2253
    %3361 = vmatpush1.msra.mxu0 %v2252
    %3362 = vmatprep.subr.mxu0 %v2257
    %3363 = vmatpush1.msra.mxu0 %v2256
    %3364 = vmatprep.subr.mxu0 %v2261
    %3365 = vmatpush1.msra.mxu0 %v2260
    %3366 = vmatprep.subr.mxu0 %v2265
    %3367 = vmatpush1.msra.mxu0 %v2264
    %3368 = vmatprep.subr.mxu0 %v2269
    %3369 = vmatpush1.msra.mxu0 %v2268
    %3370 = vmatprep.subr.mxu0 %v2273
    %3371 = vmatpush1.msra.mxu0 %v2272
    %3372 = vmatprep.subr.mxu0 %v2277
    %3373 = vmatpush1.msra.mxu0 %v2276
    %3374 = vmatprep.subr.mxu0 %v2281
    %3375 = vmatpush1.msra.mxu0 %v2280
    %3376 = vmatprep.subr.mxu0 %v2285
    %3377 = vmatpush1.msra.mxu0 %v2284
    %3378 = vmatprep.subr.mxu0 %v2289
    %3379 = vmatpush1.msra.mxu0 %v2288
    %3380 = vmatprep.subr.mxu0 %v2293
    %3381 = vmatpush1.msra.mxu0 %v2292
    %3382 = vmatprep.subr.mxu0 0.0
    %3383 = vmatpush1.msra.mxu0 0.0
    %3384 = vmatprep.subr.mxu0 0.0
    %3385 = vmatpush1.msra.mxu0 0.0
    %3386 = vmatprep.subr.mxu0 0.0
    %3387 = vmatpush1.msra.mxu0 0.0
    %3388 = vmatprep.subr.mxu0 0.0
    %3389 = vmatpush1.msra.mxu0 0.0
    %3390 = vmatprep.subr.mxu0 0.0
    %3391 = vmatpush1.msra.mxu0 0.0
    %3392 = vmatprep.subr.mxu0 0.0
    %3393 = vmatpush1.msra.mxu0 0.0
    %3394 = vmatprep.subr.mxu0 0.0
    %3395 = vmatpush1.msra.mxu0 0.0
    %3396 = vmatprep.subr.mxu0 0.0
    %3397 = vmatpush1.msra.mxu0 0.0
    %3398 = vmatprep.subr.mxu0 0.0
    %3399 = vmatpush1.msra.mxu0 0.0
    %3400 = vmatprep.subr.mxu0 0.0
    %3401 = vmatpush1.msra.mxu0 0.0
    %3402 = vmatprep.subr.mxu0 0.0
    %3403 = vmatpush1.msra.mxu0 0.0
    %3404 = vmatprep.subr.mxu0 0.0
    %3405 = vmatpush1.msra.mxu0 0.0
    %3406 = vmatprep.subr.mxu0 0.0
    %3407 = vmatpush1.msra.mxu0 0.0
    %3408 = vmatprep.subr.mxu0 0.0
    %3409 = vmatpush1.msra.mxu0 0.0
    %3410 = vmatprep.subr.mxu0 0.0
    %3411 = vmatpush1.msra.mxu0 0.0
    %3412 = vmatprep.subr.mxu0 0.0
    %3413 = vmatpush1.msra.mxu0 0.0
    %3414 = vmatprep.mubr.f32.mxu0 0.0
    %3415 = vmatmul.mubr.f32.gmra.mrb[0].mxu0 %v3344
    %v3416 = vpop.f32.mrb[0].mxu0
    %v3417 = vadd.f32 0.0, %v3416
    %v3418 = vpop.f32.mrb[0].mxu0
    %v3419 = vadd.f32 0.0, %v3418
    %3420 = vdwg.mxu0
    %3421 = vmatprep.subr.mxu0 %v2235
    %3422 = vmatpush1.msra.mxu0 %v2234
    %3423 = vmatprep.subr.mxu0 %v2239
    %3424 = vmatpush1.msra.mxu0 %v2238
    %3425 = vmatprep.subr.mxu0 %v2243
    %3426 = vmatpush1.msra.mxu0 %v2242
    %3427 = vmatprep.subr.mxu0 %v2247
    %3428 = vmatpush1.msra.mxu0 %v2246
    %3429 = vmatprep.subr.mxu0 %v2251
    %3430 = vmatpush1.msra.mxu0 %v2250
    %3431 = vmatprep.subr.mxu0 %v2255
    %3432 = vmatpush1.msra.mxu0 %v2254
    %3433 = vmatprep.subr.mxu0 %v2259
    %3434 = vmatpush1.msra.mxu0 %v2258
    %3435 = vmatprep.subr.mxu0 %v2263
    %3436 = vmatpush1.msra.mxu0 %v2262
    %3437 = vmatprep.subr.mxu0 %v2267
    %3438 = vmatpush1.msra.mxu0 %v2266
    %3439 = vmatprep.subr.mxu0 %v2271
    %3440 = vmatpush1.msra.mxu0 %v2270
    %3441 = vmatprep.subr.mxu0 %v2275
    %3442 = vmatpush1.msra.mxu0 %v2274
    %3443 = vmatprep.subr.mxu0 %v2279
    %3444 = vmatpush1.msra.mxu0 %v2278
    %3445 = vmatprep.subr.mxu0 %v2283
    %3446 = vmatpush1.msra.mxu0 %v2282
    %3447 = vmatprep.subr.mxu0 %v2287
    %3448 = vmatpush1.msra.mxu0 %v2286
    %3449 = vmatprep.subr.mxu0 %v2291
    %3450 = vmatpush1.msra.mxu0 %v2290
    %3451 = vmatprep.subr.mxu0 %v2295
    %3452 = vmatpush1.msra.mxu0 %v2294
    %3453 = vmatprep.subr.mxu0 0.0
    %3454 = vmatpush1.msra.mxu0 0.0
    %3455 = vmatprep.subr.mxu0 0.0
    %3456 = vmatpush1.msra.mxu0 0.0
    %3457 = vmatprep.subr.mxu0 0.0
    %3458 = vmatpush1.msra.mxu0 0.0
    %3459 = vmatprep.subr.mxu0 0.0
    %3460 = vmatpush1.msra.mxu0 0.0
    %3461 = vmatprep.subr.mxu0 0.0
    %3462 = vmatpush1.msra.mxu0 0.0
    %3463 = vmatprep.subr.mxu0 0.0
    %3464 = vmatpush1.msra.mxu0 0.0
    %3465 = vmatprep.subr.mxu0 0.0
    %3466 = vmatpush1.msra.mxu0 0.0
    %3467 = vmatprep.subr.mxu0 0.0
    %3468 = vmatpush1.msra.mxu0 0.0
    %3469 = vmatprep.subr.mxu0 0.0
    %3470 = vmatpush1.msra.mxu0 0.0
    %3471 = vmatprep.subr.mxu0 0.0
    %3472 = vmatpush1.msra.mxu0 0.0
    %3473 = vmatprep.subr.mxu0 0.0
    %3474 = vmatpush1.msra.mxu0 0.0
    %3475 = vmatprep.subr.mxu0 0.0
    %3476 = vmatpush1.msra.mxu0 0.0
    %3477 = vmatprep.subr.mxu0 0.0
    %3478 = vmatpush1.msra.mxu0 0.0
    %3479 = vmatprep.subr.mxu0 0.0
    %3480 = vmatpush1.msra.mxu0 0.0
    %3481 = vmatprep.subr.mxu0 0.0
    %3482 = vmatpush1.msra.mxu0 0.0
    %3483 = vmatprep.subr.mxu0 0.0
    %3484 = vmatpush1.msra.mxu0 0.0
    %3485 = vmatprep.mubr.f32.mxu0 0.0
    %3486 = vmatmul.mubr.f32.gmra.mrb[0].mxu0 %v3344
    %v3487 = vpop.f32.mrb[0].mxu0
    %v3488 = vadd.f32 0.0, %v3487
    %v3489 = vpop.f32.mrb[0].mxu0
    %v3490 = vadd.f32 0.0, %v3489
    %3491 = vdwg.mxu0
    %v3492 = vadd.f32 %v3346, %v3417
    %v3493 = vadd.f32 %v3347, %v3419
    %v3494 = vadd.f32 %v3348, %v3488
    %v3495 = vadd.f32 %v3349, %v3490
    %v3496 = vxor.u32 %v3492, 2147483648
    %v3497 = vmul.f32 %v3496, 1.442695
    %v3498 = vpow.pop %v3497
    %v3499 = vadd.f32 %v3498, 1.0
    %v3500 = vrcp.pop %v3499
    %v3501 = vmul.f32 1.0, %v3500
    %v3502 = vxor.u32 %v3493, 2147483648
    %v3503 = vmul.f32 %v3502, 1.442695
    %v3504 = vpow.pop %v3503
    %v3505 = vadd.f32 %v3504, 1.0
    %v3506 = vrcp.pop %v3505
    %v3507 = vmul.f32 1.0, %v3506
    %v3508 = vtanh.pop %v3494
    %v3509 = vxor.u32 %v3495, 2147483648
    %v3510 = vmul.f32 %v3509, 1.442695
    %v3511 = vpow.pop %v3510
    %v3512 = vadd.f32 %v3511, 1.0
    %v3513 = vrcp.pop %v3512
    %v3514 = vmul.f32 1.0, %v3513
    %v3515 = vmul.f32 %v3507, %v3342
    %v3516 = vmul.f32 %v3501, %v3508
    %v3517 = vadd.f32 %v3515, %v3516
    %v3518 = vtanh.pop %v3517
    %v3519 = vmul.f32 %v3514, %v3518
    %3520 = vst [vmem:[#allocation3 + $0x30] sm:$0xff] %v3519
    %v3521 = vld [vmem:[#allocation2 + $0xe0] sm:$0xff]
    %v3522 = vld [vmem:[#allocation2 + $0xe8] sm:$0xff]
    %v3523 = vld [vmem:[#allocation2 + $0xf0] sm:$0xff]
    %v3524 = vld [vmem:[#allocation2 + $0xf8] sm:$0xff]
    %3525 = vmatprep.subr.mxu0 %v2233
    %3526 = vmatpush1.msra.mxu0 %v2232
    %3527 = vmatprep.subr.mxu0 %v2237
    %3528 = vmatpush1.msra.mxu0 %v2236
    %3529 = vmatprep.subr.mxu0 %v2241
    %3530 = vmatpush1.msra.mxu0 %v2240
    %3531 = vmatprep.subr.mxu0 %v2245
    %3532 = vmatpush1.msra.mxu0 %v2244
    %3533 = vmatprep.subr.mxu0 %v2249
    %3534 = vmatpush1.msra.mxu0 %v2248
    %3535 = vmatprep.subr.mxu0 %v2253
    %3536 = vmatpush1.msra.mxu0 %v2252
    %3537 = vmatprep.subr.mxu0 %v2257
    %3538 = vmatpush1.msra.mxu0 %v2256
    %3539 = vmatprep.subr.mxu0 %v2261
    %3540 = vmatpush1.msra.mxu0 %v2260
    %3541 = vmatprep.subr.mxu0 %v2265
    %3542 = vmatpush1.msra.mxu0 %v2264
    %3543 = vmatprep.subr.mxu0 %v2269
    %3544 = vmatpush1.msra.mxu0 %v2268
    %3545 = vmatprep.subr.mxu0 %v2273
    %3546 = vmatpush1.msra.mxu0 %v2272
    %3547 = vmatprep.subr.mxu0 %v2277
    %3548 = vmatpush1.msra.mxu0 %v2276
    %3549 = vmatprep.subr.mxu0 %v2281
    %3550 = vmatpush1.msra.mxu0 %v2280
    %3551 = vmatprep.subr.mxu0 %v2285
    %3552 = vmatpush1.msra.mxu0 %v2284
    %3553 = vmatprep.subr.mxu0 %v2289
    %3554 = vmatpush1.msra.mxu0 %v2288
    %3555 = vmatprep.subr.mxu0 %v2293
    %3556 = vmatpush1.msra.mxu0 %v2292
    %3557 = vmatprep.subr.mxu0 0.0
    %3558 = vmatpush1.msra.mxu0 0.0
    %3559 = vmatprep.subr.mxu0 0.0
    %3560 = vmatpush1.msra.mxu0 0.0
    %3561 = vmatprep.subr.mxu0 0.0
    %3562 = vmatpush1.msra.mxu0 0.0
    %3563 = vmatprep.subr.mxu0 0.0
    %3564 = vmatpush1.msra.mxu0 0.0
    %3565 = vmatprep.subr.mxu0 0.0
    %3566 = vmatpush1.msra.mxu0 0.0
    %3567 = vmatprep.subr.mxu0 0.0
    %3568 = vmatpush1.msra.mxu0 0.0
    %3569 = vmatprep.subr.mxu0 0.0
    %3570 = vmatpush1.msra.mxu0 0.0
    %3571 = vmatprep.subr.mxu0 0.0
    %3572 = vmatpush1.msra.mxu0 0.0
    %3573 = vmatprep.subr.mxu0 0.0
    %3574 = vmatpush1.msra.mxu0 0.0
    %3575 = vmatprep.subr.mxu0 0.0
    %3576 = vmatpush1.msra.mxu0 0.0
    %3577 = vmatprep.subr.mxu0 0.0
    %3578 = vmatpush1.msra.mxu0 0.0
    %3579 = vmatprep.subr.mxu0 0.0
    %3580 = vmatpush1.msra.mxu0 0.0
    %3581 = vmatprep.subr.mxu0 0.0
    %3582 = vmatpush1.msra.mxu0 0.0
    %3583 = vmatprep.subr.mxu0 0.0
    %3584 = vmatpush1.msra.mxu0 0.0
    %3585 = vmatprep.subr.mxu0 0.0
    %3586 = vmatpush1.msra.mxu0 0.0
    %3587 = vmatprep.subr.mxu0 0.0
    %3588 = vmatpush1.msra.mxu0 0.0
    %3589 = vmatprep.mubr.f32.mxu0 0.0
    %3590 = vmatmul.mubr.f32.gmra.mrb[0].mxu0 %v3519
    %v3591 = vpop.f32.mrb[0].mxu0
    %v3592 = vadd.f32 0.0, %v3591
    %v3593 = vpop.f32.mrb[0].mxu0
    %v3594 = vadd.f32 0.0, %v3593
    %3595 = vdwg.mxu0
    %3596 = vmatprep.subr.mxu0 %v2235
    %3597 = vmatpush1.msra.mxu0 %v2234
    %3598 = vmatprep.subr.mxu0 %v2239
    %3599 = vmatpush1.msra.mxu0 %v2238
    %3600 = vmatprep.subr.mxu0 %v2243
    %3601 = vmatpush1.msra.mxu0 %v2242
    %3602 = vmatprep.subr.mxu0 %v2247
    %3603 = vmatpush1.msra.mxu0 %v2246
    %3604 = vmatprep.subr.mxu0 %v2251
    %3605 = vmatpush1.msra.mxu0 %v2250
    %3606 = vmatprep.subr.mxu0 %v2255
    %3607 = vmatpush1.msra.mxu0 %v2254
    %3608 = vmatprep.subr.mxu0 %v2259
    %3609 = vmatpush1.msra.mxu0 %v2258
    %3610 = vmatprep.subr.mxu0 %v2263
    %3611 = vmatpush1.msra.mxu0 %v2262
    %3612 = vmatprep.subr.mxu0 %v2267
    %3613 = vmatpush1.msra.mxu0 %v2266
    %3614 = vmatprep.subr.mxu0 %v2271
    %3615 = vmatpush1.msra.mxu0 %v2270
    %3616 = vmatprep.subr.mxu0 %v2275
    %3617 = vmatpush1.msra.mxu0 %v2274
    %3618 = vmatprep.subr.mxu0 %v2279
    %3619 = vmatpush1.msra.mxu0 %v2278
    %3620 = vmatprep.subr.mxu0 %v2283
    %3621 = vmatpush1.msra.mxu0 %v2282
    %3622 = vmatprep.subr.mxu0 %v2287
    %3623 = vmatpush1.msra.mxu0 %v2286
    %3624 = vmatprep.subr.mxu0 %v2291
    %3625 = vmatpush1.msra.mxu0 %v2290
    %3626 = vmatprep.subr.mxu0 %v2295
    %3627 = vmatpush1.msra.mxu0 %v2294
    %3628 = vmatprep.subr.mxu0 0.0
    %3629 = vmatpush1.msra.mxu0 0.0
    %3630 = vmatprep.subr.mxu0 0.0
    %3631 = vmatpush1.msra.mxu0 0.0
    %3632 = vmatprep.subr.mxu0 0.0
    %3633 = vmatpush1.msra.mxu0 0.0
    %3634 = vmatprep.subr.mxu0 0.0
    %3635 = vmatpush1.msra.mxu0 0.0
    %3636 = vmatprep.subr.mxu0 0.0
    %3637 = vmatpush1.msra.mxu0 0.0
    %3638 = vmatprep.subr.mxu0 0.0
    %3639 = vmatpush1.msra.mxu0 0.0
    %3640 = vmatprep.subr.mxu0 0.0
    %3641 = vmatpush1.msra.mxu0 0.0
    %3642 = vmatprep.subr.mxu0 0.0
    %3643 = vmatpush1.msra.mxu0 0.0
    %3644 = vmatprep.subr.mxu0 0.0
    %3645 = vmatpush1.msra.mxu0 0.0
    %3646 = vmatprep.subr.mxu0 0.0
    %3647 = vmatpush1.msra.mxu0 0.0
    %3648 = vmatprep.subr.mxu0 0.0
    %3649 = vmatpush1.msra.mxu0 0.0
    %3650 = vmatprep.subr.mxu0 0.0
    %3651 = vmatpush1.msra.mxu0 0.0
    %3652 = vmatprep.subr.mxu0 0.0
    %3653 = vmatpush1.msra.mxu0 0.0
    %3654 = vmatprep.subr.mxu0 0.0
    %3655 = vmatpush1.msra.mxu0 0.0
    %3656 = vmatprep.subr.mxu0 0.0
    %3657 = vmatpush1.msra.mxu0 0.0
    %3658 = vmatprep.subr.mxu0 0.0
    %3659 = vmatpush1.msra.mxu0 0.0
    %3660 = vmatprep.mubr.f32.mxu0 0.0
    %3661 = vmatmul.mubr.f32.gmra.mrb[0].mxu0 %v3519
    %v3662 = vpop.f32.mrb[0].mxu0
    %v3663 = vadd.f32 0.0, %v3662
    %v3664 = vpop.f32.mrb[0].mxu0
    %v3665 = vadd.f32 0.0, %v3664
    %3666 = vdwg.mxu0
    %v3667 = vadd.f32 %v3521, %v3592
    %v3668 = vadd.f32 %v3522, %v3594
    %v3669 = vadd.f32 %v3523, %v3663
    %v3670 = vadd.f32 %v3524, %v3665
    %v3671 = vxor.u32 %v3667, 2147483648
    %v3672 = vmul.f32 %v3671, 1.442695
    %v3673 = vpow.pop %v3672
    %v3674 = vadd.f32 %v3673, 1.0
    %v3675 = vrcp.pop %v3674
    %v3676 = vmul.f32 1.0, %v3675
    %v3677 = vxor.u32 %v3668, 2147483648
    %v3678 = vmul.f32 %v3677, 1.442695
    %v3679 = vpow.pop %v3678
    %v3680 = vadd.f32 %v3679, 1.0
    %v3681 = vrcp.pop %v3680
    %v3682 = vmul.f32 1.0, %v3681
    %v3683 = vtanh.pop %v3669
    %v3684 = vxor.u32 %v3670, 2147483648
    %v3685 = vmul.f32 %v3684, 1.442695
    %v3686 = vpow.pop %v3685
    %v3687 = vadd.f32 %v3686, 1.0
    %v3688 = vrcp.pop %v3687
    %v3689 = vmul.f32 1.0, %v3688
    %v3690 = vmul.f32 %v3682, %v3517
    %v3691 = vmul.f32 %v3676, %v3683
    %v3692 = vadd.f32 %v3690, %v3691
    %v3693 = vtanh.pop %v3692
    %v3694 = vmul.f32 %v3689, %v3693
    %3695 = vst [vmem:[#allocation3 + $0x38] sm:$0xff] %v3694
    %v3696 = vld [vmem:[#allocation3] sm:$0xff]
    %v3697 = vld [vmem:[#allocation3 + $0x8] sm:$0xff]
    %v3698 = vld [vmem:[#allocation3 + $0x10] sm:$0xff]
    %v3699 = vld [vmem:[#allocation3 + $0x18] sm:$0xff]
    %v3700 = vld [vmem:[#allocation3 + $0x20] sm:$0xff]
    %v3701 = vld [vmem:[#allocation3 + $0x28] sm:$0xff]
    %v3702 = vld [vmem:[#allocation3 + $0x30] sm:$0xff]
    %v3703 = vld [vmem:[#allocation3 + $0x38] sm:$0xff]
    %v3704 = vld [vmem:[%s7] sm:$0xff]
    %v3705 = vld [vmem:[%s7 + $0x8] sm:$0xff]
    %v3706 = vld [vmem:[%s7 + $0x10] sm:$0xff]
    %v3707 = vld [vmem:[%s7 + $0x18] sm:$0xff]
    %v3708 = vld [vmem:[%s7 + $0x20] sm:$0xff]
    %v3709 = vld [vmem:[%s7 + $0x28] sm:$0xff]
    %v3710 = vld [vmem:[%s7 + $0x30] sm:$0xff]
    %v3711 = vld [vmem:[%s7 + $0x38] sm:$0xff]
    %v3712 = vld [vmem:[%s7 + $0x40] sm:$0xff]
    %v3713 = vld [vmem:[%s7 + $0x48] sm:$0xff]
    %v3714 = vld [vmem:[%s7 + $0x50] sm:$0xff]
    %v3715 = vld [vmem:[%s7 + $0x58] sm:$0xff]
    %v3716 = vld [vmem:[%s7 + $0x60] sm:$0xff]
    %v3717 = vld [vmem:[%s7 + $0x68] sm:$0xff]
    %v3718 = vld [vmem:[%s7 + $0x70] sm:$0xff]
    %v3719 = vld [vmem:[%s7 + $0x78] sm:$0xff]
    %v3720 = vld [vmem:[%s8] sm:$0x1]
    %v3722 = vlaneseq
    %v3723 = vshrl.u32 %v3722, 7
    %v3724 = vsub.s32 0, %v3723
    %v3725 = vrot.slane %v3720, %v3724
    %3727 = vmatprep.subr.mxu0 0.0
    %3728 = vmatpush1.msra.mxu0 %v3704
    %3729 = vmatprep.subr.mxu0 0.0
    %3730 = vmatpush1.msra.mxu0 %v3705
    %3731 = vmatprep.subr.mxu0 0.0
    %3732 = vmatpush1.msra.mxu0 %v3706
    %3733 = vmatprep.subr.mxu0 0.0
    %3734 = vmatpush1.msra.mxu0 %v3707
    %3735 = vmatprep.subr.mxu0 0.0
    %3736 = vmatpush1.msra.mxu0 %v3708
    %3737 = vmatprep.subr.mxu0 0.0
    %3738 = vmatpush1.msra.mxu0 %v3709
    %3739 = vmatprep.subr.mxu0 0.0
    %3740 = vmatpush1.msra.mxu0 %v3710
    %3741 = vmatprep.subr.mxu0 0.0
    %3742 = vmatpush1.msra.mxu0 %v3711
    %3743 = vmatprep.subr.mxu0 0.0
    %3744 = vmatpush1.msra.mxu0 %v3712
    %3745 = vmatprep.subr.mxu0 0.0
    %3746 = vmatpush1.msra.mxu0 %v3713
    %3747 = vmatprep.subr.mxu0 0.0
    %3748 = vmatpush1.msra.mxu0 %v3714
    %3749 = vmatprep.subr.mxu0 0.0
    %3750 = vmatpush1.msra.mxu0 %v3715
    %3751 = vmatprep.subr.mxu0 0.0
    %3752 = vmatpush1.msra.mxu0 %v3716
    %3753 = vmatprep.subr.mxu0 0.0
    %3754 = vmatpush1.msra.mxu0 %v3717
    %3755 = vmatprep.subr.mxu0 0.0
    %3756 = vmatpush1.msra.mxu0 %v3718
    %3757 = vmatprep.subr.mxu0 0.0
    %3758 = vmatpush1.msra.mxu0 %v3719
    %3759 = vmatprep.subr.mxu0 0.0
    %3760 = vmatpush1.msra.mxu0 0.0
    %3761 = vmatprep.subr.mxu0 0.0
    %3762 = vmatpush1.msra.mxu0 0.0
    %3763 = vmatprep.subr.mxu0 0.0
    %3764 = vmatpush1.msra.mxu0 0.0
    %3765 = vmatprep.subr.mxu0 0.0
    %3766 = vmatpush1.msra.mxu0 0.0
    %3767 = vmatprep.subr.mxu0 0.0
    %3768 = vmatpush1.msra.mxu0 0.0
    %3769 = vmatprep.subr.mxu0 0.0
    %3770 = vmatpush1.msra.mxu0 0.0
    %3771 = vmatprep.subr.mxu0 0.0
    %3772 = vmatpush1.msra.mxu0 0.0
    %3773 = vmatprep.subr.mxu0 0.0
    %3774 = vmatpush1.msra.mxu0 0.0
    %3775 = vmatprep.subr.mxu0 0.0
    %3776 = vmatpush1.msra.mxu0 0.0
    %3777 = vmatprep.subr.mxu0 0.0
    %3778 = vmatpush1.msra.mxu0 0.0
    %3779 = vmatprep.subr.mxu0 0.0
    %3780 = vmatpush1.msra.mxu0 0.0
    %3781 = vmatprep.subr.mxu0 0.0
    %3782 = vmatpush1.msra.mxu0 0.0
    %3783 = vmatprep.subr.mxu0 0.0
    %3784 = vmatpush1.msra.mxu0 0.0
    %3785 = vmatprep.subr.mxu0 0.0
    %3786 = vmatpush1.msra.mxu0 0.0
    %3787 = vmatprep.subr.mxu0 0.0
    %3788 = vmatpush1.msra.mxu0 0.0
    %3789 = vmatprep.subr.mxu0 0.0
    %3790 = vmatpush1.msra.mxu0 0.0
    %3791 = vmatprep.mubr.f32.mxu0 0.0
    %3792 = vmatmul.mubr.f32.gmra.mrb[0].mxu0 %v3696
    %v3793 = vpop.f32.mrb[0].mxu0
    %v3794 = vadd.f32 %v3725, %v3793
    %v3795 = vpop.f32.mrb[0].mxu0
    %3796 = vmatprep.mubr.f32.mxu0 0.0
    %3797 = vmatmul.mubr.f32.gmra.mrb[0].mxu0 %v3697
    %v3798 = vpop.f32.mrb[0].mxu0
    %v3799 = vadd.f32 %v3725, %v3798
    %v3800 = vpop.f32.mrb[0].mxu0
    %3801 = vmatprep.mubr.f32.mxu0 0.0
    %3802 = vmatmul.mubr.f32.gmra.mrb[0].mxu0 %v3698
    %v3803 = vpop.f32.mrb[0].mxu0
    %v3804 = vadd.f32 %v3725, %v3803
    %v3805 = vpop.f32.mrb[0].mxu0
    %3806 = vmatprep.mubr.f32.mxu0 0.0
    %3807 = vmatmul.mubr.f32.gmra.mrb[0].mxu0 %v3699
    %v3808 = vpop.f32.mrb[0].mxu0
    %v3809 = vadd.f32 %v3725, %v3808
    %v3810 = vpop.f32.mrb[0].mxu0
    %3811 = vmatprep.mubr.f32.mxu0 0.0
    %3812 = vmatmul.mubr.f32.gmra.mrb[0].mxu0 %v3700
    %v3813 = vpop.f32.mrb[0].mxu0
    %v3814 = vadd.f32 %v3725, %v3813
    %v3815 = vpop.f32.mrb[0].mxu0
    %3816 = vmatprep.mubr.f32.mxu0 0.0
    %3817 = vmatmul.mubr.f32.gmra.mrb[0].mxu0 %v3701
    %v3818 = vpop.f32.mrb[0].mxu0
    %v3819 = vadd.f32 %v3725, %v3818
    %v3820 = vpop.f32.mrb[0].mxu0
    %3821 = vmatprep.mubr.f32.mxu0 0.0
    %3822 = vmatmul.mubr.f32.gmra.mrb[0].mxu0 %v3702
    %v3823 = vpop.f32.mrb[0].mxu0
    %v3824 = vadd.f32 %v3725, %v3823
    %v3825 = vpop.f32.mrb[0].mxu0
    %3826 = vmatprep.mubr.f32.mxu0 0.0
    %3827 = vmatmul.mubr.f32.gmra.mrb[0].mxu0 %v3703
    %v3828 = vpop.f32.mrb[0].mxu0
    %v3829 = vadd.f32 %v3725, %v3828
    %v3830 = vpop.f32.mrb[0].mxu0
    %3831 = vdwg.mxu0
    %3832 = vst [vmem:[%s9] sm:$0xff] %v3794
    %3833 = vst [vmem:[%s9 + $0x8] sm:$0xff] %v3799
    %3834 = vst [vmem:[%s9 + $0x10] sm:$0xff] %v3804
    %3835 = vst [vmem:[%s9 + $0x18] sm:$0xff] %v3809
    %3836 = vst [vmem:[%s9 + $0x20] sm:$0xff] %v3814
    %3837 = vst [vmem:[%s9 + $0x28] sm:$0xff] %v3819
    %3838 = vst [vmem:[%s9 + $0x30] sm:$0xff] %v3824
    %3839 = vst [vmem:[%s9 + $0x38] sm:$0xff] %v3829
    // Predicated region
    $region54: #{_lambda_.1} parent=1 // pred_check
      _
    $region55: #{_lambda_.1} parent=1 // pred_check_branch
      %3841 = sbr.rel (0) target = $region57
    $region56: #{_lambda_.1} parent=1 // pred_region
      _
    $region57: #{_lambda_.1} parent=1 // pred_fallthru
      _
    // Predicated region
    $region58: #{_lambda_.1} parent=1 // pred_check
      _
    $region59: #{_lambda_.1} parent=1 // pred_check_branch
      %3843 = sbr.rel (0) target = $region61
    $region60: #{_lambda_.1} parent=1 // pred_region
      _
    $region61: #{_lambda_.1} parent=1 // pred_fallthru
      _
    %3844 = vsyncpa [#allocation5], 1
    %3845 = vsyncpa [#allocation7], 1
    %3846 = vsyncpa [#allocation10], 1

</llo_original>
